<compile_context>
chip_gen: v7x
topology: tpu7x:2x2x1
jax: 0.10.0
libtpu: 0.0.40
codegen_flags: <defaults>
</compile_context>

<pallas_src>
import functools

import jax
import jax.numpy as jnp
from jax.experimental import pallas as pl
from jax.experimental.pallas import tpu as pltpu


# ---------------------------------------------------------------------------
# Pallas kernel: fused encoder + residual decoder + sigmoid (channel-major)
# ---------------------------------------------------------------------------
def _make_kernel(n_branches):
    """Kernel processing `n_branches` independent (C, T) activation tiles with
    shared weights.  Ref order: x_0..x_{n-1}, W_em^T, b_em, W_dsm^T, W_dx^T,
    b_dec, out_0..out_{n-1}."""

    def kernel(*refs):
        x_refs = refs[:n_branches]
        wem_ref, bem_ref, wdsm_ref, wdx_ref, bd_ref = refs[n_branches:n_branches + 5]
        o_refs = refs[n_branches + 5:]

        wem = wem_ref[...]     # (H2, C)  = [w_enc | w_map]^T   (pre-stacked)
        bem = bem_ref[...]     # (H2, 1)
        wdsm = wdsm_ref[...]   # (C, H2)  = [w_dec_s ; w_dec_map]^T
        wdx = wdx_ref[...]     # (C, C)   = w_dec_skip^T
        bd = bd_ref[...]       # (C, 1)

        for x_ref, o_ref in zip(x_refs, o_refs):
            x = x_ref[0].astype(jnp.float32)                     # (C, T)
            # encoder latent + map, fused into one matmul
            sm = jnp.dot(wem, x, preferred_element_type=jnp.float32) + bem
            sm = jnp.maximum(sm, 0.0)                            # (H2, T)
            # decoder_residual on (s, skip=x, map=m), fused decoder matmul
            logits = (jnp.dot(wdsm, sm, preferred_element_type=jnp.float32)
                      + jnp.dot(wdx, x, preferred_element_type=jnp.float32)
                      + bd)                                      # (C, T)
            # sigmoid: exp on EUP, exact reciprocal (keeps 1e-4 ref tolerance)
            o_ref[0] = pl.reciprocal(1.0 + jnp.exp(-logits)).astype(o_ref.dtype)

    return kernel


def _pick_tile(s, cap=8192):
    """Largest multiple of 128 that divides s (<= cap); else the full extent."""
    best = None
    t = 128
    while t <= min(s, cap):
        if s % t == 0:
            best = t
        t += 128
    return best if best is not None else s


def _fused_call(xs, packed):
    """xs: tuple of (B, C, S) float32 arrays of identical shape.
    Returns a tuple of sigmoid(decoder(encoder(x))) arrays, same shapes."""
    n = len(xs)
    b, c, s = xs[0].shape
    tile = _pick_tile(s)
    grid = (b, s // tile)

    h2 = packed["w_em_t"].shape[0]

    x_spec = pl.BlockSpec((1, c, tile), lambda bb, ii: (bb, 0, ii))
    const = lambda shape: pl.BlockSpec(shape, lambda bb, ii: (0, 0))

    out = pl.pallas_call(
        _make_kernel(n),
        out_shape=tuple(jax.ShapeDtypeStruct((b, c, s), jnp.float32)
                        for _ in range(n)),
        grid_spec=pltpu.PrefetchScalarGridSpec(
            num_scalar_prefetch=0,
            grid=grid,
            in_specs=[x_spec] * n + [
                const((h2, c)),    # W_em^T
                const((h2, 1)),    # b_em
                const((c, h2)),    # W_dsm^T
                const((c, c)),     # W_dx^T
                const((c, 1)),     # b_dec
            ],
            out_specs=tuple(x_spec for _ in range(n)),
        ),
        compiler_params=pltpu.CompilerParams(
            dimension_semantics=("parallel", "parallel")),
    )(*xs,
      packed["w_em_t"], packed["b_em"], packed["w_dsm_t"],
      packed["w_dx_t"], packed["b_dec"])
    return out


# ---------------------------------------------------------------------------
# Wrapper reproducing _forward.forward semantics
# ---------------------------------------------------------------------------
def pack_params(params):
    """Pre-stack and pre-transpose weights for the channel-major kernel."""
    w_em = jnp.concatenate([params["w_enc"], params["w_map"]], axis=1)         # (C, H2)
    b_em = jnp.concatenate([params["b_enc"], params["b_map"]], axis=1)         # (1, H2)
    w_dsm = jnp.concatenate([params["w_dec_s"], params["w_dec_map"]], axis=0)  # (H2, C)
    return {
        "w_em_t": jnp.transpose(w_em),                   # (H2, C)
        "b_em": jnp.transpose(b_em),                     # (H2, 1)
        "w_dsm_t": jnp.transpose(w_dsm),                 # (C, H2)
        "w_dx_t": jnp.transpose(params["w_dec_skip"]),   # (C, C)
        "b_dec": jnp.transpose(params["b_dec"]),         # (C, 1)
    }


@jax.jit
def _forward_impl(x_SAT, x_TA, packed):
    b1, c1 = x_SAT.shape[0], x_SAT.shape[1]
    b2, c2 = x_TA.shape[0], x_TA.shape[1]
    xs1 = x_SAT.reshape(b1, c1, -1).astype(jnp.float32)   # free reshape (NCDHW)
    xs2 = x_TA.reshape(b2, c2, -1).astype(jnp.float32)
    if xs1.shape == xs2.shape:
        # both branches fused into a single pallas_call
        y1, y2 = _fused_call((xs1, xs2), packed)
    else:
        (y1,) = _fused_call((xs1,), packed)
        (y2,) = _fused_call((xs2,), packed)
    return y1.reshape(x_SAT.shape), y2.reshape(x_TA.shape)


def forward(x_SAT, x_TA, x_TB, params):
    # batch_size = len(x_TA) is bookkeeping only in the original module;
    # x_TB is accepted but unused by the reference forward pass.
    packed = pack_params(params)
    x_SATM, x_TAM = _forward_impl(x_SAT, x_TA, packed)
    return {
        "x_SAT": x_SAT,
        "x_SATM": x_SATM,
        "x_TA": x_TA,
        "x_TAM": x_TAM,
    }


# ---------------------------------------------------------------------------
# Deterministic synthetic parameters (encoder / decoder_residual weights)
# ---------------------------------------------------------------------------
def make_params(key, c, hid, hmap):
    ks = jax.random.split(key, 5)
    scale = 0.1
    return {
        "w_enc": scale * jax.random.normal(ks[0], (c, hid), jnp.float32),
        "b_enc": jnp.zeros((1, hid), jnp.float32),
        "w_map": scale * jax.random.normal(ks[1], (c, hmap), jnp.float32),
        "b_map": jnp.zeros((1, hmap), jnp.float32),
        "w_dec_s": scale * jax.random.normal(ks[2], (hid, c), jnp.float32),
        "w_dec_skip": scale * jax.random.normal(ks[3], (c, c), jnp.float32),
        "w_dec_map": scale * jax.random.normal(ks[4], (hmap, c), jnp.float32),
        "b_dec": jnp.zeros((1, c), jnp.float32),
    }


if __name__ == "__main__":
    key = jax.random.PRNGKey(0)
    k_sat, k_ta, k_tb, k_par = jax.random.split(key, 4)

    # small 3-D volumes: (batch=2, channels=4, D=8, H=16, W=16)
    B, C, D, H, W = 2, 4, 8, 16, 16
    HID, HMAP = 32, 16

    x_SAT = jax.random.normal(k_sat, (B, C, D, H, W), jnp.float32)
    x_TA = jax.random.normal(k_ta, (B, C, D, H, W), jnp.float32)
    x_TB = jax.random.normal(k_tb, (B, C, D, H, W), jnp.float32)

    params = make_params(k_par, C, HID, HMAP)

    visible = forward(x_SAT, x_TA, x_TB, params)
    jax.block_until_ready(visible["x_SATM"])
    jax.block_until_ready(visible["x_TAM"])

    # sanity: shapes match inputs, values in (0, 1) after sigmoid
    assert visible["x_SATM"].shape == x_SAT.shape
    assert visible["x_TAM"].shape == x_TA.shape
    assert bool(jnp.all((visible["x_SATM"] > 0) & (visible["x_SATM"] < 1)))

    # reference check in plain JAX (original, unstacked weight orientation)
    def ref_branch(x):
        xr = jnp.transpose(x, (0, 2, 3, 4, 1)).reshape(-1, C)
        s = jnp.maximum(xr @ params["w_enc"] + params["b_enc"], 0.0)
        m = jnp.maximum(xr @ params["w_map"] + params["b_map"], 0.0)
        logits = (s @ params["w_dec_s"] + xr @ params["w_dec_skip"]
                  + m @ params["w_dec_map"] + params["b_dec"])
        y = jax.nn.sigmoid(logits).reshape(B, D, H, W, C)
        return jnp.transpose(y, (0, 4, 1, 2, 3))

    err_sat = jnp.max(jnp.abs(ref_branch(x_SAT) - visible["x_SATM"]))
    err_ta = jnp.max(jnp.abs(ref_branch(x_TA) - visible["x_TAM"]))
    assert bool(err_sat < 1e-4), float(err_sat)
    assert bool(err_ta < 1e-4), float(err_ta)

    print("KERNEL_OK")
</pallas_src>

<mosaic_0001>
module attributes {stable_mosaic.version = 11 : i64} {
  func.func @kernel(%arg0: i32, %arg1: i32, %arg2: memref<1x4x2048xf32, #tpu.memory_space<vmem>>, %arg3: memref<1x4x2048xf32, #tpu.memory_space<vmem>>, %arg4: memref<48x4xf32, #tpu.memory_space<vmem>>, %arg5: memref<48x1xf32, #tpu.memory_space<vmem>>, %arg6: memref<4x48xf32, #tpu.memory_space<vmem>>, %arg7: memref<4x4xf32, #tpu.memory_space<vmem>>, %arg8: memref<4x1xf32, #tpu.memory_space<vmem>>, %arg9: memref<1x4x2048xf32, #tpu.memory_space<vmem>>, %arg10: memref<1x4x2048xf32, #tpu.memory_space<vmem>>) attributes {dimension_semantics = [#tpu.dimension_semantics<parallel>, #tpu.dimension_semantics<parallel>], iteration_bounds = array<i64: 2, 1>, scalar_prefetch = 0 : i64, scratch_operands = 0 : i64, tpu.core_type = #tpu.core_type<tc>, window_params = [{transform_indices = @transform_0, window_bounds = array<i64: 1, 4, 2048>}, {transform_indices = @transform_1, window_bounds = array<i64: 1, 4, 2048>}, {pipeline_mode = #tpu.pipeline_mode<synchronous>, transform_indices = @transform_2, window_bounds = array<i64: 48, 4>}, {pipeline_mode = #tpu.pipeline_mode<synchronous>, transform_indices = @transform_3, window_bounds = array<i64: 48, 1>}, {pipeline_mode = #tpu.pipeline_mode<synchronous>, transform_indices = @transform_4, window_bounds = array<i64: 4, 48>}, {pipeline_mode = #tpu.pipeline_mode<synchronous>, transform_indices = @transform_5, window_bounds = array<i64: 4, 4>}, {pipeline_mode = #tpu.pipeline_mode<synchronous>, transform_indices = @transform_6, window_bounds = array<i64: 4, 1>}, {transform_indices = @transform_7, window_bounds = array<i64: 1, 4, 2048>}, {transform_indices = @transform_8, window_bounds = array<i64: 1, 4, 2048>}]} {
    %c0 = arith.constant 0 : index
    %c0_0 = arith.constant 0 : index
    %0 = vector.load %arg4[%c0, %c0_0] : memref<48x4xf32, #tpu.memory_space<vmem>>, vector<48x4xf32>
    %c0_1 = arith.constant 0 : index
    %c0_2 = arith.constant 0 : index
    %1 = vector.load %arg5[%c0_1, %c0_2] : memref<48x1xf32, #tpu.memory_space<vmem>>, vector<48x1xf32>
    %c0_3 = arith.constant 0 : index
    %c0_4 = arith.constant 0 : index
    %2 = vector.load %arg6[%c0_3, %c0_4] : memref<4x48xf32, #tpu.memory_space<vmem>>, vector<4x48xf32>
    %c0_5 = arith.constant 0 : index
    %c0_6 = arith.constant 0 : index
    %3 = vector.load %arg7[%c0_5, %c0_6] : memref<4x4xf32, #tpu.memory_space<vmem>>, vector<4x4xf32>
    %c0_7 = arith.constant 0 : index
    %c0_8 = arith.constant 0 : index
    %4 = vector.load %arg8[%c0_7, %c0_8] : memref<4x1xf32, #tpu.memory_space<vmem>>, vector<4x1xf32>
    %c0_9 = arith.constant 0 : index
    %c0_10 = arith.constant 0 : index
    %c0_11 = arith.constant 0 : index
    %5 = vector.load %arg2[%c0_9, %c0_10, %c0_11] : memref<1x4x2048xf32, #tpu.memory_space<vmem>>, vector<1x4x2048xf32>
    %6 = vector.shape_cast %5 : vector<1x4x2048xf32> to vector<4x2048xf32>
    %cst = arith.constant dense<0.000000e+00> : vector<48x2048xf32>
    %7 = tpu.matmul %0, %6, %cst {dimension_numbers = #tpu.dot_dimension_numbers<[1], [0], [0], [1], [0, 0, 1, 1], [], []>} : vector<48x4xf32>, vector<4x2048xf32>, vector<48x2048xf32> -> vector<48x2048xf32>
    %8 = vector.broadcast %1 : vector<48x1xf32> to vector<48x2048xf32>
    %9 = arith.addf %7, %8 : vector<48x2048xf32>
    %cst_12 = arith.constant 0.000000e+00 : f32
    %10 = vector.broadcast %cst_12 : f32 to vector<48x2048xf32>
    %11 = arith.maximumf %9, %10 : vector<48x2048xf32>
    %cst_13 = arith.constant dense<0.000000e+00> : vector<4x2048xf32>
    %12 = tpu.matmul %2, %11, %cst_13 {dimension_numbers = #tpu.dot_dimension_numbers<[1], [0], [0], [1], [0, 0, 1, 1], [], []>} : vector<4x48xf32>, vector<48x2048xf32>, vector<4x2048xf32> -> vector<4x2048xf32>
    %cst_14 = arith.constant dense<0.000000e+00> : vector<4x2048xf32>
    %13 = tpu.matmul %3, %6, %cst_14 {dimension_numbers = #tpu.dot_dimension_numbers<[1], [0], [0], [1], [0, 0, 1, 1], [], []>} : vector<4x4xf32>, vector<4x2048xf32>, vector<4x2048xf32> -> vector<4x2048xf32>
    %14 = arith.addf %12, %13 : vector<4x2048xf32>
    %15 = vector.broadcast %4 : vector<4x1xf32> to vector<4x2048xf32>
    %16 = arith.addf %14, %15 : vector<4x2048xf32>
    %cst_15 = arith.constant 0.000000e+00 : f32
    %17 = vector.broadcast %cst_15 : f32 to vector<4x2048xf32>
    %18 = arith.subf %17, %16 : vector<4x2048xf32>
    %19 = math.exp %18 : vector<4x2048xf32>
    %cst_16 = arith.constant 1.000000e+00 : f32
    %20 = vector.broadcast %cst_16 : f32 to vector<4x2048xf32>
    %21 = arith.addf %20, %19 : vector<4x2048xf32>
    %22 = tpu.reciprocal %21 : vector<4x2048xf32> -> vector<4x2048xf32>
    %c0_17 = arith.constant 0 : index
    %c0_18 = arith.constant 0 : index
    %c0_19 = arith.constant 0 : index
    %23 = vector.load %arg9[%c0_17, %c0_18, %c0_19] : memref<1x4x2048xf32, #tpu.memory_space<vmem>>, vector<1x4x2048xf32>
    %24 = vector.shape_cast %23 : vector<1x4x2048xf32> to vector<4x2048xf32>
    %25 = vector.shape_cast %22 : vector<4x2048xf32> to vector<1x4x2048xf32>
    tpu.vector_store %arg9[%c0_17, %c0_18, %c0_19], %25 {strides = array<i32>} : memref<1x4x2048xf32, #tpu.memory_space<vmem>>, vector<1x4x2048xf32>,
    %c0_20 = arith.constant 0 : index
    %c0_21 = arith.constant 0 : index
    %c0_22 = arith.constant 0 : index
    %26 = vector.load %arg3[%c0_20, %c0_21, %c0_22] : memref<1x4x2048xf32, #tpu.memory_space<vmem>>, vector<1x4x2048xf32>
    %27 = vector.shape_cast %26 : vector<1x4x2048xf32> to vector<4x2048xf32>
    %cst_23 = arith.constant dense<0.000000e+00> : vector<48x2048xf32>
    %28 = tpu.matmul %0, %27, %cst_23 {dimension_numbers = #tpu.dot_dimension_numbers<[1], [0], [0], [1], [0, 0, 1, 1], [], []>} : vector<48x4xf32>, vector<4x2048xf32>, vector<48x2048xf32> -> vector<48x2048xf32>
    %29 = vector.broadcast %1 : vector<48x1xf32> to vector<48x2048xf32>
    %30 = arith.addf %28, %29 : vector<48x2048xf32>
    %cst_24 = arith.constant 0.000000e+00 : f32
    %31 = vector.broadcast %cst_24 : f32 to vector<48x2048xf32>
    %32 = arith.maximumf %30, %31 : vector<48x2048xf32>
    %cst_25 = arith.constant dense<0.000000e+00> : vector<4x2048xf32>
    %33 = tpu.matmul %2, %32, %cst_25 {dimension_numbers = #tpu.dot_dimension_numbers<[1], [0], [0], [1], [0, 0, 1, 1], [], []>} : vector<4x48xf32>, vector<48x2048xf32>, vector<4x2048xf32> -> vector<4x2048xf32>
    %cst_26 = arith.constant dense<0.000000e+00> : vector<4x2048xf32>
    %34 = tpu.matmul %3, %27, %cst_26 {dimension_numbers = #tpu.dot_dimension_numbers<[1], [0], [0], [1], [0, 0, 1, 1], [], []>} : vector<4x4xf32>, vector<4x2048xf32>, vector<4x2048xf32> -> vector<4x2048xf32>
    %35 = arith.addf %33, %34 : vector<4x2048xf32>
    %36 = vector.broadcast %4 : vector<4x1xf32> to vector<4x2048xf32>
    %37 = arith.addf %35, %36 : vector<4x2048xf32>
    %cst_27 = arith.constant 0.000000e+00 : f32
    %38 = vector.broadcast %cst_27 : f32 to vector<4x2048xf32>
    %39 = arith.subf %38, %37 : vector<4x2048xf32>
    %40 = math.exp %39 : vector<4x2048xf32>
    %cst_28 = arith.constant 1.000000e+00 : f32
    %41 = vector.broadcast %cst_28 : f32 to vector<4x2048xf32>
    %42 = arith.addf %41, %40 : vector<4x2048xf32>
    %43 = tpu.reciprocal %42 : vector<4x2048xf32> -> vector<4x2048xf32>
    %c0_29 = arith.constant 0 : index
    %c0_30 = arith.constant 0 : index
    %c0_31 = arith.constant 0 : index
    %44 = vector.load %arg10[%c0_29, %c0_30, %c0_31] : memref<1x4x2048xf32, #tpu.memory_space<vmem>>, vector<1x4x2048xf32>
    %45 = vector.shape_cast %44 : vector<1x4x2048xf32> to vector<4x2048xf32>
    %46 = vector.shape_cast %43 : vector<4x2048xf32> to vector<1x4x2048xf32>
    tpu.vector_store %arg10[%c0_29, %c0_30, %c0_31], %46 {strides = array<i32>} : memref<1x4x2048xf32, #tpu.memory_space<vmem>>, vector<1x4x2048xf32>,
    return
  }
  func.func @transform_0(%arg0: i32, %arg1: i32) -> (i32, i32, i32) {
    %c0_i32 = arith.constant 0 : i32
    %c0_i32_0 = arith.constant 0 : i32
    return %arg0, %c0_i32, %arg1 : i32, i32, i32
  }
  func.func @transform_1(%arg0: i32, %arg1: i32) -> (i32, i32, i32) {
    %c0_i32 = arith.constant 0 : i32
    %c0_i32_0 = arith.constant 0 : i32
    return %arg0, %c0_i32, %arg1 : i32, i32, i32
  }
  func.func @transform_2(%arg0: i32, %arg1: i32) -> (i32, i32) {
    %c0_i32 = arith.constant 0 : i32
    %c0_i32_0 = arith.constant 0 : i32
    %c0_i32_1 = arith.constant 0 : i32
    return %c0_i32, %c0_i32_0 : i32, i32
  }
  func.func @transform_3(%arg0: i32, %arg1: i32) -> (i32, i32) {
    %c0_i32 = arith.constant 0 : i32
    %c0_i32_0 = arith.constant 0 : i32
    %c0_i32_1 = arith.constant 0 : i32
    return %c0_i32, %c0_i32_0 : i32, i32
  }
  func.func @transform_4(%arg0: i32, %arg1: i32) -> (i32, i32) {
    %c0_i32 = arith.constant 0 : i32
    %c0_i32_0 = arith.constant 0 : i32
    %c0_i32_1 = arith.constant 0 : i32
    return %c0_i32, %c0_i32_0 : i32, i32
  }
  func.func @transform_5(%arg0: i32, %arg1: i32) -> (i32, i32) {
    %c0_i32 = arith.constant 0 : i32
    %c0_i32_0 = arith.constant 0 : i32
    %c0_i32_1 = arith.constant 0 : i32
    return %c0_i32, %c0_i32_0 : i32, i32
  }
  func.func @transform_6(%arg0: i32, %arg1: i32) -> (i32, i32) {
    %c0_i32 = arith.constant 0 : i32
    %c0_i32_0 = arith.constant 0 : i32
    %c0_i32_1 = arith.constant 0 : i32
    return %c0_i32, %c0_i32_0 : i32, i32
  }
  func.func @transform_7(%arg0: i32, %arg1: i32) -> (i32, i32, i32) {
    %c0_i32 = arith.constant 0 : i32
    %c0_i32_0 = arith.constant 0 : i32
    return %arg0, %c0_i32, %arg1 : i32, i32, i32
  }
  func.func @transform_8(%arg0: i32, %arg1: i32) -> (i32, i32, i32) {
    %c0_i32 = arith.constant 0 : i32
    %c0_i32_0 = arith.constant 0 : i32
    return %arg0, %c0_i32, %arg1 : i32, i32, i32
  }
}

</mosaic_0001>

<llo_original>
// kernel: _forward_impl.1
$region0: #{_forward_impl.1}
  #allocation0 [shape = 'u32[]', space=smem, size = 0x4, offset = 0x4, fixed_abs, tag = 'smem constant byte address 0x4 - core index']
  #allocation1 [shape = 'u32[144,128]{1,0:T(1,128)}', space=vmem, size = 0x12000, scoped, tag = 'internal scratch']
  %s0 = inlined_call_operand.vmem [shape: f32[2,4,2048], index: 0, kind: input, shape index: {}]
  %s1 = inlined_call_operand.vmem [shape: f32[2,4,2048], index: 1, kind: input, shape index: {}]
  %s2 = inlined_call_operand.vmem [shape: f32[48,4], index: 2, kind: input, shape index: {}]
  %s3 = inlined_call_operand.vmem [shape: f32[48,1], index: 3, kind: input, shape index: {}]
  %s4 = inlined_call_operand.vmem [shape: f32[4,48], index: 4, kind: input, shape index: {}]
  %s5 = inlined_call_operand.vmem [shape: f32[4,4], index: 5, kind: input, shape index: {}]
  %s6 = inlined_call_operand.vmem [shape: f32[4,1], index: 6, kind: input, shape index: {}]
  %s7 = inlined_call_operand.vmem [shape: f32[2,4,2048], index: 7, kind: output, shape index: {0}]
  %s8 = inlined_call_operand.vmem [shape: f32[2,4,2048], index: 8, kind: output, shape index: {1}]
  %9 = xla_tuple %s7, %s8
  %s10 = sld [smem:[#allocation0]]
  $region69: #{_forward_impl.1} parent=0
    _
  %s12 = ssub.s32 1, %s10
  %s13 = scalar_select 0, %s12, %s10
  loop: start=0, step=1, limit=4
  $region2: #{_forward_impl.1} parent=0 // loop_pre_header
    _
  $region3: #{_forward_impl.1} parent=0 // loop_header
    %s15 = sphi 0, %s19
    %p16 = scmp.ge.s32.totalorder %s15, 4
    %s22 = sphi 0, %s34
    %s23 = sphi 0, %s30
    %s24 = sphi 0, %s22
    %s25 = sphi 0, %s23
    %s26 = sphi 0, %s24
    %s27 = sphi 0, %s25
    %s39 = sphi 0, %s41
    %s42 = sphi 0, %s39
    %s43 = sphi 0, %s42
    %s59 = sphi 0, %s43
    %s67 = sphi 0, %s69
    %s70 = sphi 0, %s67
    %s71 = sphi 0, %s70
    %s87 = sphi 0, %s71
    %s91 = sphi 0, %s91
    %s93 = sphi 0, %s91
    %s94 = sphi 0, %s93
    %s108 = sphi 0, %s94
    %s112 = sphi 0, %s112
    %s114 = sphi 0, %s112
    %s115 = sphi 0, %s114
    %s129 = sphi 0, %s115
    %s133 = sphi 0, %s133
    %s135 = sphi 0, %s133
    %s136 = sphi 0, %s135
    %s150 = sphi 0, %s136
    %s154 = sphi 0, %s154
    %s156 = sphi 0, %s154
    %s157 = sphi 0, %s156
    %s171 = sphi 0, %s157
    %s175 = sphi 0, %s175
    %s177 = sphi 0, %s175
    %s178 = sphi 0, %s177
    %s192 = sphi 0, %s178
    %s200 = sphi 0, %s202
    %s203 = sphi 0, %s200
    %s204 = sphi 0, %s203
    %s220 = sphi 0, %s204
    %s228 = sphi 0, %s230
    %s231 = sphi 0, %s228
    %s232 = sphi 0, %s231
    %s248 = sphi 0, %s232
  $region4: #{_forward_impl.1} parent=0 // loop_header_branch
    %18 = sbr.rel (%p16) target = $region8
  $region5: #{_forward_impl.1} parent=0 // loop_body
    %s20 = ssub.s32 %s15, 1
    %s21 = ssub.s32 %s15, 2
    %s28 = sadd.s32 1, %s23
    %p29 = scmp.ge.s32.totalorder %s28, 1
    %s30 = scalar_select %p29, 0, %s28
    %s31 = sadd.s32 1, %s22
    %s32 = scalar_select %p29, %s31, %s22
    %p33 = scmp.ge.s32.totalorder %s32, 2
    %s34 = scalar_select %p33, 0, %s32
    %s35 = ssub.s32 %s22, %s34
    %s36 = ssub.s32 %s23, %s30
    %s37 = sor.u32 %s35, %s36
    %p38 = scmp.eq.s32.totalorder %s37, 0
    %s40 = sadd.s32 %s39, 1
    %s41 = scalar_select %p38, %s39, %s40
    %p44 = pneg %p38
    %p45 = scmp.eq.s32.totalorder %s15, 1
    %p46 = por %p44, %p45
    %p47 = scmp.ne.s32.totalorder %s39, %s42
    %p48 = scmp.eq.s32.totalorder %s15, 0
    %p49 = por %p47, %p48
    %p50 = scmp.ne.s32.totalorder %s39, %s42
    %p51 = scmp.eq.s32.totalorder %s20, 1
    %p52 = por %p50, %p51
    %p53 = scmp.ne.s32.totalorder %s42, %s43
    %p54 = scmp.eq.s32.totalorder %s20, 0
    %p55 = por %p53, %p54
    %p56 = scmp.ne.s32.totalorder %s42, %s43
    %p57 = scmp.eq.s32.totalorder %s21, 1
    %p58 = por %p56, %p57
    %p60 = scmp.ne.s32.totalorder %s43, %s59
    %p61 = scmp.eq.s32.totalorder %s21, 0
    %p62 = por %p60, %p61
    %s63 = ssub.s32 %s22, %s34
    %s64 = ssub.s32 %s23, %s30
    %s65 = sor.u32 %s63, %s64
    %p66 = scmp.eq.s32.totalorder %s65, 0
    %s68 = sadd.s32 %s67, 1
    %s69 = scalar_select %p66, %s67, %s68
    %p72 = pneg %p66
    %p73 = scmp.eq.s32.totalorder %s15, 1
    %p74 = por %p72, %p73
    %p75 = scmp.ne.s32.totalorder %s67, %s70
    %p76 = scmp.eq.s32.totalorder %s15, 0
    %p77 = por %p75, %p76
    %p78 = scmp.ne.s32.totalorder %s67, %s70
    %p79 = scmp.eq.s32.totalorder %s20, 1
    %p80 = por %p78, %p79
    %p81 = scmp.ne.s32.totalorder %s70, %s71
    %p82 = scmp.eq.s32.totalorder %s20, 0
    %p83 = por %p81, %p82
    %p84 = scmp.ne.s32.totalorder %s70, %s71
    %p85 = scmp.eq.s32.totalorder %s21, 1
    %p86 = por %p84, %p85
    %p88 = scmp.ne.s32.totalorder %s71, %s87
    %p89 = scmp.eq.s32.totalorder %s21, 0
    %p90 = por %p88, %p89
    %s92 = sadd.s32 %s91, 1
    %p95 = scmp.eq.s32.totalorder %s15, 1
    %p96 = scmp.ne.s32.totalorder %s91, %s93
    %p97 = scmp.eq.s32.totalorder %s15, 0
    %p98 = por %p96, %p97
    %p99 = scmp.ne.s32.totalorder %s91, %s93
    %p100 = scmp.eq.s32.totalorder %s20, 1
    %p101 = por %p99, %p100
    %p102 = scmp.ne.s32.totalorder %s93, %s94
    %p103 = scmp.eq.s32.totalorder %s20, 0
    %p104 = por %p102, %p103
    %p105 = scmp.ne.s32.totalorder %s93, %s94
    %p106 = scmp.eq.s32.totalorder %s21, 1
    %p107 = por %p105, %p106
    %p109 = scmp.ne.s32.totalorder %s94, %s108
    %p110 = scmp.eq.s32.totalorder %s21, 0
    %p111 = por %p109, %p110
    %s113 = sadd.s32 %s112, 1
    %p116 = scmp.eq.s32.totalorder %s15, 1
    %p117 = scmp.ne.s32.totalorder %s112, %s114
    %p118 = scmp.eq.s32.totalorder %s15, 0
    %p119 = por %p117, %p118
    %p120 = scmp.ne.s32.totalorder %s112, %s114
    %p121 = scmp.eq.s32.totalorder %s20, 1
    %p122 = por %p120, %p121
    %p123 = scmp.ne.s32.totalorder %s114, %s115
    %p124 = scmp.eq.s32.totalorder %s20, 0
    %p125 = por %p123, %p124
    %p126 = scmp.ne.s32.totalorder %s114, %s115
    %p127 = scmp.eq.s32.totalorder %s21, 1
    %p128 = por %p126, %p127
    %p130 = scmp.ne.s32.totalorder %s115, %s129
    %p131 = scmp.eq.s32.totalorder %s21, 0
    %p132 = por %p130, %p131
    %s134 = sadd.s32 %s133, 1
    %p137 = scmp.eq.s32.totalorder %s15, 1
    %p138 = scmp.ne.s32.totalorder %s133, %s135
    %p139 = scmp.eq.s32.totalorder %s15, 0
    %p140 = por %p138, %p139
    %p141 = scmp.ne.s32.totalorder %s133, %s135
    %p142 = scmp.eq.s32.totalorder %s20, 1
    %p143 = por %p141, %p142
    %p144 = scmp.ne.s32.totalorder %s135, %s136
    %p145 = scmp.eq.s32.totalorder %s20, 0
    %p146 = por %p144, %p145
    %p147 = scmp.ne.s32.totalorder %s135, %s136
    %p148 = scmp.eq.s32.totalorder %s21, 1
    %p149 = por %p147, %p148
    %p151 = scmp.ne.s32.totalorder %s136, %s150
    %p152 = scmp.eq.s32.totalorder %s21, 0
    %p153 = por %p151, %p152
    %s155 = sadd.s32 %s154, 1
    %p158 = scmp.eq.s32.totalorder %s15, 1
    %p159 = scmp.ne.s32.totalorder %s154, %s156
    %p160 = scmp.eq.s32.totalorder %s15, 0
    %p161 = por %p159, %p160
    %p162 = scmp.ne.s32.totalorder %s154, %s156
    %p163 = scmp.eq.s32.totalorder %s20, 1
    %p164 = por %p162, %p163
    %p165 = scmp.ne.s32.totalorder %s156, %s157
    %p166 = scmp.eq.s32.totalorder %s20, 0
    %p167 = por %p165, %p166
    %p168 = scmp.ne.s32.totalorder %s156, %s157
    %p169 = scmp.eq.s32.totalorder %s21, 1
    %p170 = por %p168, %p169
    %p172 = scmp.ne.s32.totalorder %s157, %s171
    %p173 = scmp.eq.s32.totalorder %s21, 0
    %p174 = por %p172, %p173
    %s176 = sadd.s32 %s175, 1
    %p179 = scmp.eq.s32.totalorder %s15, 1
    %p180 = scmp.ne.s32.totalorder %s175, %s177
    %p181 = scmp.eq.s32.totalorder %s15, 0
    %p182 = por %p180, %p181
    %p183 = scmp.ne.s32.totalorder %s175, %s177
    %p184 = scmp.eq.s32.totalorder %s20, 1
    %p185 = por %p183, %p184
    %p186 = scmp.ne.s32.totalorder %s177, %s178
    %p187 = scmp.eq.s32.totalorder %s20, 0
    %p188 = por %p186, %p187
    %p189 = scmp.ne.s32.totalorder %s177, %s178
    %p190 = scmp.eq.s32.totalorder %s21, 1
    %p191 = por %p189, %p190
    %p193 = scmp.ne.s32.totalorder %s178, %s192
    %p194 = scmp.eq.s32.totalorder %s21, 0
    %p195 = por %p193, %p194
    %s196 = ssub.s32 %s22, %s34
    %s197 = ssub.s32 %s23, %s30
    %s198 = sor.u32 %s196, %s197
    %p199 = scmp.eq.s32.totalorder %s198, 0
    %s201 = sadd.s32 %s200, 1
    %s202 = scalar_select %p199, %s200, %s201
    %p205 = pneg %p199
    %p206 = scmp.eq.s32.totalorder %s15, 1
    %p207 = por %p205, %p206
    %p208 = scmp.ne.s32.totalorder %s200, %s203
    %p209 = scmp.eq.s32.totalorder %s15, 0
    %p210 = por %p208, %p209
    %p211 = scmp.ne.s32.totalorder %s200, %s203
    %p212 = scmp.eq.s32.totalorder %s20, 1
    %p213 = por %p211, %p212
    %p214 = scmp.ne.s32.totalorder %s203, %s204
    %p215 = scmp.eq.s32.totalorder %s20, 0
    %p216 = por %p214, %p215
    %p217 = scmp.ne.s32.totalorder %s203, %s204
    %p218 = scmp.eq.s32.totalorder %s21, 1
    %p219 = por %p217, %p218
    %p221 = scmp.ne.s32.totalorder %s204, %s220
    %p222 = scmp.eq.s32.totalorder %s21, 0
    %p223 = por %p221, %p222
    %s224 = ssub.s32 %s22, %s34
    %s225 = ssub.s32 %s23, %s30
    %s226 = sor.u32 %s224, %s225
    %p227 = scmp.eq.s32.totalorder %s226, 0
    %s229 = sadd.s32 %s228, 1
    %s230 = scalar_select %p227, %s228, %s229
    %p233 = pneg %p227
    %p234 = scmp.eq.s32.totalorder %s15, 1
    %p235 = por %p233, %p234
    %p236 = scmp.ne.s32.totalorder %s228, %s231
    %p237 = scmp.eq.s32.totalorder %s15, 0
    %p238 = por %p236, %p237
    %p239 = scmp.ne.s32.totalorder %s228, %s231
    %p240 = scmp.eq.s32.totalorder %s20, 1
    %p241 = por %p239, %p240
    %p242 = scmp.ne.s32.totalorder %s231, %s232
    %p243 = scmp.eq.s32.totalorder %s20, 0
    %p244 = por %p242, %p243
    %p245 = scmp.ne.s32.totalorder %s231, %s232
    %p246 = scmp.eq.s32.totalorder %s21, 1
    %p247 = por %p245, %p246
    %p249 = scmp.ne.s32.totalorder %s232, %s248
    %p250 = scmp.eq.s32.totalorder %s21, 0
    %p251 = por %p249, %p250
    %p252 = scmp.le.s32.totalorder 1, %s15
    %p253 = scmp.lt.s32.totalorder %s15, 3
    %p254 = pnand %p252, %p253
    %p255 = pneg %p254
    // Predicated region
    $region9: #{_forward_impl.1} parent=5 // pred_check
      _
    $region10: #{_forward_impl.1} parent=5 // pred_check_branch
      %257 = sbr.rel (%p254) target = $region12
    $region11: #{_forward_impl.1} parent=5 // pred_region
      %s258 = ssub.s32 %s15, 1
      // Predicated region
      $region13: #{_forward_impl.1} parent=11 // pred_check
        %p259 = pneg %p104
      $region14: #{_forward_impl.1} parent=11 // pred_check_branch
        %261 = sbr.rel (%p259) target = $region16
      $region15: #{_forward_impl.1} parent=11 // pred_region
        _
      $region16: #{_forward_impl.1} parent=11 // pred_fallthru
        _
      // Predicated region
      $region17: #{_forward_impl.1} parent=11 // pred_check
        %p262 = pneg %p125
      $region18: #{_forward_impl.1} parent=11 // pred_check_branch
        %264 = sbr.rel (%p262) target = $region20
      $region19: #{_forward_impl.1} parent=11 // pred_region
        _
      $region20: #{_forward_impl.1} parent=11 // pred_fallthru
        _
      // Predicated region
      $region21: #{_forward_impl.1} parent=11 // pred_check
        %p265 = pneg %p146
      $region22: #{_forward_impl.1} parent=11 // pred_check_branch
        %267 = sbr.rel (%p265) target = $region24
      $region23: #{_forward_impl.1} parent=11 // pred_region
        _
      $region24: #{_forward_impl.1} parent=11 // pred_fallthru
        _
      // Predicated region
      $region25: #{_forward_impl.1} parent=11 // pred_check
        %p268 = pneg %p167
      $region26: #{_forward_impl.1} parent=11 // pred_check_branch
        %270 = sbr.rel (%p268) target = $region28
      $region27: #{_forward_impl.1} parent=11 // pred_region
        _
      $region28: #{_forward_impl.1} parent=11 // pred_fallthru
        _
      // Predicated region
      $region29: #{_forward_impl.1} parent=11 // pred_check
        %p271 = pneg %p188
      $region30: #{_forward_impl.1} parent=11 // pred_check_branch
        %273 = sbr.rel (%p271) target = $region32
      $region31: #{_forward_impl.1} parent=11 // pred_region
        _
      $region32: #{_forward_impl.1} parent=11 // pred_fallthru
        _
    $region12: #{_forward_impl.1} parent=5 // pred_fallthru
      _
    %p274 = scmp.lt.s32.totalorder %s15, 2
    // Predicated region
    $region33: #{_forward_impl.1} parent=5 // pred_check
      %p275 = pneg %p274
    $region34: #{_forward_impl.1} parent=5 // pred_check_branch
      %277 = sbr.rel (%p275) target = $region36
    $region35: #{_forward_impl.1} parent=5 // pred_region
      // Predicated region
      $region37: #{_forward_impl.1} parent=35 // pred_check
        %p278 = pneg %p49
      $region38: #{_forward_impl.1} parent=35 // pred_check_branch
        %280 = sbr.rel (%p278) target = $region40
      $region39: #{_forward_impl.1} parent=35 // pred_region
        %s281 = smul.u32 16, %s23
        %p282 = scmp.lt.s32.totalorder %s22, 1
        %s283 = scalar_select %p282, %s22, 1
        %p284 = scmp.lt.s32.totalorder %s281, 15
        %s285 = scalar_select %p284, %s281, 15
        %s286 = smul.addr %s283, 16
        %s287 = sadd.s32 %s285, %s286
        %s288 = smul.addr %s287, 4
        %s289 = scalar_lea.vmem %s0, %s288
        %s290 = smul.u32 16, %s23
      $region40: #{_forward_impl.1} parent=35 // pred_fallthru
        _
      // Predicated region
      $region41: #{_forward_impl.1} parent=35 // pred_check
        %p291 = pneg %p77
      $region42: #{_forward_impl.1} parent=35 // pred_check_branch
        %293 = sbr.rel (%p291) target = $region44
      $region43: #{_forward_impl.1} parent=35 // pred_region
        %s294 = smul.u32 16, %s23
        %p295 = scmp.lt.s32.totalorder %s22, 1
        %s296 = scalar_select %p295, %s22, 1
        %p297 = scmp.lt.s32.totalorder %s294, 15
        %s298 = scalar_select %p297, %s294, 15
        %s299 = smul.addr %s296, 16
        %s300 = sadd.s32 %s298, %s299
        %s301 = smul.addr %s300, 4
        %s302 = scalar_lea.vmem %s1, %s301
        %s303 = smul.u32 16, %s23
      $region44: #{_forward_impl.1} parent=35 // pred_fallthru
        _
    $region36: #{_forward_impl.1} parent=5 // pred_fallthru
      _
    %p304 = scmp.le.s32.totalorder 1, %s15
    %p305 = scmp.lt.s32.totalorder %s15, 3
    %p306 = pnand %p304, %p305
    %p307 = pneg %p306
    // Predicated region
    $region45: #{_forward_impl.1} parent=5 // pred_check
      _
    $region46: #{_forward_impl.1} parent=5 // pred_check_branch
      %309 = sbr.rel (%p306) target = $region48
    $region47: #{_forward_impl.1} parent=5 // pred_region
      %s310 = ssub.s32 %s15, 1
      %s311 = smul.u32 16, %s25
      %p312 = scmp.lt.s32.totalorder %s24, 1
      %s313 = scalar_select %p312, %s24, 1
      %p314 = scmp.lt.s32.totalorder %s311, 15
      %s315 = scalar_select %p314, %s311, 15
      %s316 = smul.addr %s313, 16
      %s317 = sadd.s32 %s315, %s316
      %s318 = smul.addr %s317, 4
      %s319 = scalar_lea.vmem %s0, %s318
      %p320 = pneg %p55
      %p321 = pneg %p52
      %s322 = smul.u32 16, %s25
      %p323 = scmp.lt.s32.totalorder %s24, 1
      %s324 = scalar_select %p323, %s24, 1
      %p325 = scmp.lt.s32.totalorder %s322, 15
      %s326 = scalar_select %p325, %s322, 15
      %s327 = smul.addr %s324, 16
      %s328 = sadd.s32 %s326, %s327
      %s329 = smul.addr %s328, 4
      %s330 = scalar_lea.vmem %s1, %s329
      %p331 = pneg %p83
      %p332 = pneg %p80
      %p333 = pneg %p104
      %p334 = pneg %p101
      %p335 = pneg %p125
      %p336 = pneg %p122
      %p337 = pneg %p146
      %p338 = pneg %p143
      %p339 = pneg %p167
      %p340 = pneg %p164
      %p341 = pneg %p188
      %p342 = pneg %p185
      %p343 = pneg %p216
      %p344 = pneg %p213
      %s345 = smul.u32 16, %s25
      %p346 = scmp.lt.s32.totalorder %s24, 1
      %s347 = scalar_select %p346, %s24, 1
      %p348 = scmp.lt.s32.totalorder %s345, 15
      %s349 = scalar_select %p348, %s345, 15
      %s350 = smul.addr %s347, 16
      %s351 = sadd.s32 %s349, %s350
      %s352 = smul.addr %s351, 4
      %s353 = scalar_lea.vmem %s7, %s352
      %p354 = pneg %p244
      %p355 = pneg %p241
      %s356 = smul.u32 16, %s25
      %p357 = scmp.lt.s32.totalorder %s24, 1
      %s358 = scalar_select %p357, %s24, 1
      %p359 = scmp.lt.s32.totalorder %s356, 15
      %s360 = scalar_select %p359, %s356, 15
      %s361 = smul.addr %s358, 16
      %s362 = sadd.s32 %s360, %s361
      %s363 = smul.addr %s362, 4
      %s364 = scalar_lea.vmem %s8, %s363
      %s365 = smul.u32 16, %s25
      %p366 = scmp.lt.s32.totalorder %s24, 1
      %s367 = scalar_select %p366, %s24, 1
      %p368 = scmp.lt.s32.totalorder %s365, 15
      %s369 = scalar_select %p368, %s365, 15
      %s370 = smul.addr %s367, 16
      %s371 = sadd.s32 %s369, %s370
      %s372 = smul.addr %s371, 4
      %s373 = scalar_lea.vmem %s0, %s372
      %s374 = smul.u32 16, %s25
      %s375 = smul.u32 16, %s25
      %p376 = scmp.lt.s32.totalorder %s24, 1
      %s377 = scalar_select %p376, %s24, 1
      %p378 = scmp.lt.s32.totalorder %s375, 15
      %s379 = scalar_select %p378, %s375, 15
      %s380 = smul.addr %s377, 16
      %s381 = sadd.s32 %s379, %s380
      %s382 = smul.addr %s381, 4
      %s383 = scalar_lea.vmem %s1, %s382
      %s384 = smul.u32 16, %s25
      %s385 = smul.u32 16, %s25
      %p386 = scmp.lt.s32.totalorder %s24, 1
      %s387 = scalar_select %p386, %s24, 1
      %p388 = scmp.lt.s32.totalorder %s385, 15
      %s389 = scalar_select %p388, %s385, 15
      %s390 = smul.addr %s387, 16
      %s391 = sadd.s32 %s389, %s390
      %s392 = smul.addr %s391, 4
      %s393 = scalar_lea.vmem %s7, %s392
      %s394 = smul.u32 16, %s25
      %s395 = smul.u32 16, %s25
      %p396 = scmp.lt.s32.totalorder %s24, 1
      %s397 = scalar_select %p396, %s24, 1
      %p398 = scmp.lt.s32.totalorder %s395, 15
      %s399 = scalar_select %p398, %s395, 15
      %s400 = smul.addr %s397, 16
      %s401 = sadd.s32 %s399, %s400
      %s402 = smul.addr %s401, 4
      %s403 = scalar_lea.vmem %s8, %s402
      %s404 = smul.u32 16, %s25
      %v405 = vld [vmem:[%s2] sm:$0xff]
      %v406 = vld [vmem:[%s2 + $0x8] sm:$0xff]
      %v407 = vld [vmem:[%s2 + $0x10] sm:$0xff]
      %v408 = vld [vmem:[%s2 + $0x18] sm:$0xff]
      %v409 = vld [vmem:[%s2 + $0x20] sm:$0xff]
      %v410 = vld [vmem:[%s2 + $0x28] sm:$0xff]
      %v411 = vld [vmem:[%s3] sm:$0xff]
      %v412 = vld [vmem:[%s3 + $0x8] sm:$0xff]
      %v413 = vld [vmem:[%s3 + $0x10] sm:$0xff]
      %v414 = vld [vmem:[%s3 + $0x18] sm:$0xff]
      %v415 = vld [vmem:[%s3 + $0x20] sm:$0xff]
      %v416 = vld [vmem:[%s3 + $0x28] sm:$0xff]
      %v417 = vld [vmem:[%s4] sm:$0xf]
      %v418 = vld [vmem:[%s5] sm:$0xf]
      %v419 = vld [vmem:[%s6] sm:$0xf]
      %v420 = vld [vmem:[%s373] sm:$0xff]
      %v421 = vld [vmem:[%s373 + $0x8] sm:$0xff]
      %v422 = vld [vmem:[%s373 + $0x10] sm:$0xff]
      %v423 = vld [vmem:[%s373 + $0x18] sm:$0xff]
      %v424 = vld [vmem:[%s373 + $0x20] sm:$0xff]
      %v425 = vld [vmem:[%s373 + $0x28] sm:$0xff]
      %v426 = vld [vmem:[%s373 + $0x30] sm:$0xff]
      %v427 = vld [vmem:[%s373 + $0x38] sm:$0xff]
      %429 = vset.pattern.permute.xlu0 0
      %430 = vperm.xlu0 %429, %v411
      %v431 = vpop.permute.xlu0 %430
      %434 = vset.pattern.permute.xlu0 0
      %435 = vperm.xlu0 %434, %v412
      %v436 = vpop.permute.xlu0 %435
      %439 = vset.pattern.permute.xlu0 0
      %440 = vperm.xlu0 %439, %v413
      %v441 = vpop.permute.xlu0 %440
      %444 = vset.pattern.permute.xlu0 0
      %445 = vperm.xlu0 %444, %v414
      %v446 = vpop.permute.xlu0 %445
      %449 = vset.pattern.permute.xlu0 0
      %450 = vperm.xlu0 %449, %v415
      %v451 = vpop.permute.xlu0 %450
      %454 = vset.pattern.permute.xlu0 0
      %455 = vperm.xlu0 %454, %v416
      %v456 = vpop.permute.xlu0 %455
      %v466 = vcombine.high %v420, %v420
      %v467 = vcombine.high %v421, %v421
      %v468 = vcombine.high %v422, %v422
      %v469 = vcombine.high %v423, %v423
      %v470 = vcombine.high %v424, %v424
      %v471 = vcombine.high %v425, %v425
      %v472 = vcombine.high %v426, %v426
      %v473 = vcombine.high %v427, %v427
      %vm474 = vcmask 31744
      %v476 = vsel %vm474, %v405, 0
      %v479 = vsel %vm474, %v406, 0
      %v482 = vsel %vm474, %v407, 0
      %v485 = vsel %vm474, %v408, 0
      %v488 = vsel %vm474, %v409, 0
      %v491 = vsel %vm474, %v410, 0
      %vm493 = vcmask 1043456
      %v494 = vsel %vm493, %v420, 0
      %v496 = vsel %vm493, %v466, 0
      %v498 = vsel %vm493, %v421, 0
      %v500 = vsel %vm493, %v467, 0
      %v502 = vsel %vm493, %v422, 0
      %v504 = vsel %vm493, %v468, 0
      %v506 = vsel %vm493, %v423, 0
      %v508 = vsel %vm493, %v469, 0
      %v510 = vsel %vm493, %v424, 0
      %v512 = vsel %vm493, %v470, 0
      %v514 = vsel %vm493, %v425, 0
      %v516 = vsel %vm493, %v471, 0
      %v518 = vsel %vm493, %v426, 0
      %v520 = vsel %vm493, %v472, 0
      %v522 = vsel %vm493, %v427, 0
      %v524 = vsel %vm493, %v473, 0
      %526 = vmatprep.subr.mxu0 %v496
      %527 = vmatpush1.msra.mxu0 %v494
      %528 = vmatprep.subr.mxu0 0.0
      %529 = vmatpush1.msra.mxu0 0.0
      %530 = vmatprep.subr.mxu0 0.0
      %531 = vmatpush1.msra.mxu0 0.0
      %532 = vmatprep.subr.mxu0 0.0
      %533 = vmatpush1.msra.mxu0 0.0
      %534 = vmatprep.subr.mxu0 0.0
      %535 = vmatpush1.msra.mxu0 0.0
      %536 = vmatprep.subr.mxu0 0.0
      %537 = vmatpush1.msra.mxu0 0.0
      %538 = vmatprep.subr.mxu0 0.0
      %539 = vmatpush1.msra.mxu0 0.0
      %540 = vmatprep.subr.mxu0 0.0
      %541 = vmatpush1.msra.mxu0 0.0
      %542 = vmatprep.subr.mxu0 0.0
      %543 = vmatpush1.msra.mxu0 0.0
      %544 = vmatprep.subr.mxu0 0.0
      %545 = vmatpush1.msra.mxu0 0.0
      %546 = vmatprep.subr.mxu0 0.0
      %547 = vmatpush1.msra.mxu0 0.0
      %548 = vmatprep.subr.mxu0 0.0
      %549 = vmatpush1.msra.mxu0 0.0
      %550 = vmatprep.subr.mxu0 0.0
      %551 = vmatpush1.msra.mxu0 0.0
      %552 = vmatprep.subr.mxu0 0.0
      %553 = vmatpush1.msra.mxu0 0.0
      %554 = vmatprep.subr.mxu0 0.0
      %555 = vmatpush1.msra.mxu0 0.0
      %556 = vmatprep.subr.mxu0 0.0
      %557 = vmatpush1.msra.mxu0 0.0
      %558 = vmatprep.subr.mxu0 0.0
      %559 = vmatpush1.msra.mxu0 0.0
      %560 = vmatprep.subr.mxu0 0.0
      %561 = vmatpush1.msra.mxu0 0.0
      %562 = vmatprep.subr.mxu0 0.0
      %563 = vmatpush1.msra.mxu0 0.0
      %564 = vmatprep.subr.mxu0 0.0
      %565 = vmatpush1.msra.mxu0 0.0
      %566 = vmatprep.subr.mxu0 0.0
      %567 = vmatpush1.msra.mxu0 0.0
      %568 = vmatprep.subr.mxu0 0.0
      %569 = vmatpush1.msra.mxu0 0.0
      %570 = vmatprep.subr.mxu0 0.0
      %571 = vmatpush1.msra.mxu0 0.0
      %572 = vmatprep.subr.mxu0 0.0
      %573 = vmatpush1.msra.mxu0 0.0
      %574 = vmatprep.subr.mxu0 0.0
      %575 = vmatpush1.msra.mxu0 0.0
      %576 = vmatprep.subr.mxu0 0.0
      %577 = vmatpush1.msra.mxu0 0.0
      %578 = vmatprep.subr.mxu0 0.0
      %579 = vmatpush1.msra.mxu0 0.0
      %580 = vmatprep.subr.mxu0 0.0
      %581 = vmatpush1.msra.mxu0 0.0
      %582 = vmatprep.subr.mxu0 0.0
      %583 = vmatpush1.msra.mxu0 0.0
      %584 = vmatprep.subr.mxu0 0.0
      %585 = vmatpush1.msra.mxu0 0.0
      %586 = vmatprep.subr.mxu0 0.0
      %587 = vmatpush1.msra.mxu0 0.0
      %588 = vmatprep.subr.mxu0 0.0
      %589 = vmatpush1.msra.mxu0 0.0
      %590 = vmatprep.mubr.f32.mxu0 0.0
      %591 = vmatmul.mubr.f32.gmra.mrb[0].mxu0 %v476
      %v592 = vpop.f32.mrb[0].mxu0
      %v593 = vadd.f32 %v431, %v592
      %v594 = vpop.f32.mrb[0].mxu0
      %v595 = vadd.f32 %v431, %v594
      %596 = vmatprep.mubr.f32.mxu0 0.0
      %597 = vmatmul.mubr.f32.gmra.mrb[0].mxu0 %v479
      %v598 = vpop.f32.mrb[0].mxu0
      %v599 = vadd.f32 %v436, %v598
      %v600 = vpop.f32.mrb[0].mxu0
      %v601 = vadd.f32 %v436, %v600
      %602 = vmatprep.mubr.f32.mxu0 0.0
      %603 = vmatmul.mubr.f32.gmra.mrb[0].mxu0 %v482
      %v604 = vpop.f32.mrb[0].mxu0
      %v605 = vadd.f32 %v441, %v604
      %v606 = vpop.f32.mrb[0].mxu0
      %v607 = vadd.f32 %v441, %v606
      %608 = vmatprep.mubr.f32.mxu0 0.0
      %609 = vmatmul.mubr.f32.gmra.mrb[0].mxu0 %v485
      %v610 = vpop.f32.mrb[0].mxu0
      %v611 = vadd.f32 %v446, %v610
      %v612 = vpop.f32.mrb[0].mxu0
      %v613 = vadd.f32 %v446, %v612
      %614 = vmatprep.mubr.f32.mxu0 0.0
      %615 = vmatmul.mubr.f32.gmra.mrb[0].mxu0 %v488
      %v616 = vpop.f32.mrb[0].mxu0
      %v617 = vadd.f32 %v451, %v616
      %v618 = vpop.f32.mrb[0].mxu0
      %v619 = vadd.f32 %v451, %v618
      %620 = vmatprep.mubr.f32.mxu0 0.0
      %621 = vmatmul.mubr.f32.gmra.mrb[0].mxu0 %v491
      %v622 = vpop.f32.mrb[0].mxu0
      %v623 = vadd.f32 %v456, %v622
      %v624 = vpop.f32.mrb[0].mxu0
      %v625 = vadd.f32 %v456, %v624
      %626 = vdwg.mxu0
      %627 = vmatprep.subr.mxu0 %v500
      %628 = vmatpush1.msra.mxu0 %v498
      %629 = vmatprep.subr.mxu0 0.0
      %630 = vmatpush1.msra.mxu0 0.0
      %631 = vmatprep.subr.mxu0 0.0
      %632 = vmatpush1.msra.mxu0 0.0
      %633 = vmatprep.subr.mxu0 0.0
      %634 = vmatpush1.msra.mxu0 0.0
      %635 = vmatprep.subr.mxu0 0.0
      %636 = vmatpush1.msra.mxu0 0.0
      %637 = vmatprep.subr.mxu0 0.0
      %638 = vmatpush1.msra.mxu0 0.0
      %639 = vmatprep.subr.mxu0 0.0
      %640 = vmatpush1.msra.mxu0 0.0
      %641 = vmatprep.subr.mxu0 0.0
      %642 = vmatpush1.msra.mxu0 0.0
      %643 = vmatprep.subr.mxu0 0.0
      %644 = vmatpush1.msra.mxu0 0.0
      %645 = vmatprep.subr.mxu0 0.0
      %646 = vmatpush1.msra.mxu0 0.0
      %647 = vmatprep.subr.mxu0 0.0
      %648 = vmatpush1.msra.mxu0 0.0
      %649 = vmatprep.subr.mxu0 0.0
      %650 = vmatpush1.msra.mxu0 0.0
      %651 = vmatprep.subr.mxu0 0.0
      %652 = vmatpush1.msra.mxu0 0.0
      %653 = vmatprep.subr.mxu0 0.0
      %654 = vmatpush1.msra.mxu0 0.0
      %655 = vmatprep.subr.mxu0 0.0
      %656 = vmatpush1.msra.mxu0 0.0
      %657 = vmatprep.subr.mxu0 0.0
      %658 = vmatpush1.msra.mxu0 0.0
      %659 = vmatprep.subr.mxu0 0.0
      %660 = vmatpush1.msra.mxu0 0.0
      %661 = vmatprep.subr.mxu0 0.0
      %662 = vmatpush1.msra.mxu0 0.0
      %663 = vmatprep.subr.mxu0 0.0
      %664 = vmatpush1.msra.mxu0 0.0
      %665 = vmatprep.subr.mxu0 0.0
      %666 = vmatpush1.msra.mxu0 0.0
      %667 = vmatprep.subr.mxu0 0.0
      %668 = vmatpush1.msra.mxu0 0.0
      %669 = vmatprep.subr.mxu0 0.0
      %670 = vmatpush1.msra.mxu0 0.0
      %671 = vmatprep.subr.mxu0 0.0
      %672 = vmatpush1.msra.mxu0 0.0
      %673 = vmatprep.subr.mxu0 0.0
      %674 = vmatpush1.msra.mxu0 0.0
      %675 = vmatprep.subr.mxu0 0.0
      %676 = vmatpush1.msra.mxu0 0.0
      %677 = vmatprep.subr.mxu0 0.0
      %678 = vmatpush1.msra.mxu0 0.0
      %679 = vmatprep.subr.mxu0 0.0
      %680 = vmatpush1.msra.mxu0 0.0
      %681 = vmatprep.subr.mxu0 0.0
      %682 = vmatpush1.msra.mxu0 0.0
      %683 = vmatprep.subr.mxu0 0.0
      %684 = vmatpush1.msra.mxu0 0.0
      %685 = vmatprep.subr.mxu0 0.0
      %686 = vmatpush1.msra.mxu0 0.0
      %687 = vmatprep.subr.mxu0 0.0
      %688 = vmatpush1.msra.mxu0 0.0
      %689 = vmatprep.subr.mxu0 0.0
      %690 = vmatpush1.msra.mxu0 0.0
      %691 = vmatprep.mubr.f32.mxu0 0.0
      %692 = vmatmul.mubr.f32.gmra.mrb[0].mxu0 %v476
      %v693 = vpop.f32.mrb[0].mxu0
      %v694 = vadd.f32 %v431, %v693
      %v695 = vpop.f32.mrb[0].mxu0
      %v696 = vadd.f32 %v431, %v695
      %697 = vmatprep.mubr.f32.mxu0 0.0
      %698 = vmatmul.mubr.f32.gmra.mrb[0].mxu0 %v479
      %v699 = vpop.f32.mrb[0].mxu0
      %v700 = vadd.f32 %v436, %v699
      %v701 = vpop.f32.mrb[0].mxu0
      %v702 = vadd.f32 %v436, %v701
      %703 = vmatprep.mubr.f32.mxu0 0.0
      %704 = vmatmul.mubr.f32.gmra.mrb[0].mxu0 %v482
      %v705 = vpop.f32.mrb[0].mxu0
      %v706 = vadd.f32 %v441, %v705
      %v707 = vpop.f32.mrb[0].mxu0
      %v708 = vadd.f32 %v441, %v707
      %709 = vmatprep.mubr.f32.mxu0 0.0
      %710 = vmatmul.mubr.f32.gmra.mrb[0].mxu0 %v485
      %v711 = vpop.f32.mrb[0].mxu0
      %v712 = vadd.f32 %v446, %v711
      %v713 = vpop.f32.mrb[0].mxu0
      %v714 = vadd.f32 %v446, %v713
      %715 = vmatprep.mubr.f32.mxu0 0.0
      %716 = vmatmul.mubr.f32.gmra.mrb[0].mxu0 %v488
      %v717 = vpop.f32.mrb[0].mxu0
      %v718 = vadd.f32 %v451, %v717
      %v719 = vpop.f32.mrb[0].mxu0
      %v720 = vadd.f32 %v451, %v719
      %721 = vmatprep.mubr.f32.mxu0 0.0
      %722 = vmatmul.mubr.f32.gmra.mrb[0].mxu0 %v491
      %v723 = vpop.f32.mrb[0].mxu0
      %v724 = vadd.f32 %v456, %v723
      %v725 = vpop.f32.mrb[0].mxu0
      %v726 = vadd.f32 %v456, %v725
      %727 = vdwg.mxu0
      %728 = vmatprep.subr.mxu0 %v504
      %729 = vmatpush1.msra.mxu0 %v502
      %730 = vmatprep.subr.mxu0 0.0
      %731 = vmatpush1.msra.mxu0 0.0
      %732 = vmatprep.subr.mxu0 0.0
      %733 = vmatpush1.msra.mxu0 0.0
      %734 = vmatprep.subr.mxu0 0.0
      %735 = vmatpush1.msra.mxu0 0.0
      %736 = vmatprep.subr.mxu0 0.0
      %737 = vmatpush1.msra.mxu0 0.0
      %738 = vmatprep.subr.mxu0 0.0
      %739 = vmatpush1.msra.mxu0 0.0
      %740 = vmatprep.subr.mxu0 0.0
      %741 = vmatpush1.msra.mxu0 0.0
      %742 = vmatprep.subr.mxu0 0.0
      %743 = vmatpush1.msra.mxu0 0.0
      %744 = vmatprep.subr.mxu0 0.0
      %745 = vmatpush1.msra.mxu0 0.0
      %746 = vmatprep.subr.mxu0 0.0
      %747 = vmatpush1.msra.mxu0 0.0
      %748 = vmatprep.subr.mxu0 0.0
      %749 = vmatpush1.msra.mxu0 0.0
      %750 = vmatprep.subr.mxu0 0.0
      %751 = vmatpush1.msra.mxu0 0.0
      %752 = vmatprep.subr.mxu0 0.0
      %753 = vmatpush1.msra.mxu0 0.0
      %754 = vmatprep.subr.mxu0 0.0
      %755 = vmatpush1.msra.mxu0 0.0
      %756 = vmatprep.subr.mxu0 0.0
      %757 = vmatpush1.msra.mxu0 0.0
      %758 = vmatprep.subr.mxu0 0.0
      %759 = vmatpush1.msra.mxu0 0.0
      %760 = vmatprep.subr.mxu0 0.0
      %761 = vmatpush1.msra.mxu0 0.0
      %762 = vmatprep.subr.mxu0 0.0
      %763 = vmatpush1.msra.mxu0 0.0
      %764 = vmatprep.subr.mxu0 0.0
      %765 = vmatpush1.msra.mxu0 0.0
      %766 = vmatprep.subr.mxu0 0.0
      %767 = vmatpush1.msra.mxu0 0.0
      %768 = vmatprep.subr.mxu0 0.0
      %769 = vmatpush1.msra.mxu0 0.0
      %770 = vmatprep.subr.mxu0 0.0
      %771 = vmatpush1.msra.mxu0 0.0
      %772 = vmatprep.subr.mxu0 0.0
      %773 = vmatpush1.msra.mxu0 0.0
      %774 = vmatprep.subr.mxu0 0.0
      %775 = vmatpush1.msra.mxu0 0.0
      %776 = vmatprep.subr.mxu0 0.0
      %777 = vmatpush1.msra.mxu0 0.0
      %778 = vmatprep.subr.mxu0 0.0
      %779 = vmatpush1.msra.mxu0 0.0
      %780 = vmatprep.subr.mxu0 0.0
      %781 = vmatpush1.msra.mxu0 0.0
      %782 = vmatprep.subr.mxu0 0.0
      %783 = vmatpush1.msra.mxu0 0.0
      %784 = vmatprep.subr.mxu0 0.0
      %785 = vmatpush1.msra.mxu0 0.0
      %786 = vmatprep.subr.mxu0 0.0
      %787 = vmatpush1.msra.mxu0 0.0
      %788 = vmatprep.subr.mxu0 0.0
      %789 = vmatpush1.msra.mxu0 0.0
      %790 = vmatprep.subr.mxu0 0.0
      %791 = vmatpush1.msra.mxu0 0.0
      %792 = vmatprep.mubr.f32.mxu0 0.0
      %793 = vmatmul.mubr.f32.gmra.mrb[0].mxu0 %v476
      %v794 = vpop.f32.mrb[0].mxu0
      %v795 = vadd.f32 %v431, %v794
      %v796 = vpop.f32.mrb[0].mxu0
      %v797 = vadd.f32 %v431, %v796
      %798 = vmatprep.mubr.f32.mxu0 0.0
      %799 = vmatmul.mubr.f32.gmra.mrb[0].mxu0 %v479
      %v800 = vpop.f32.mrb[0].mxu0
      %v801 = vadd.f32 %v436, %v800
      %v802 = vpop.f32.mrb[0].mxu0
      %v803 = vadd.f32 %v436, %v802
      %804 = vmatprep.mubr.f32.mxu0 0.0
      %805 = vmatmul.mubr.f32.gmra.mrb[0].mxu0 %v482
      %v806 = vpop.f32.mrb[0].mxu0
      %v807 = vadd.f32 %v441, %v806
      %v808 = vpop.f32.mrb[0].mxu0
      %v809 = vadd.f32 %v441, %v808
      %810 = vmatprep.mubr.f32.mxu0 0.0
      %811 = vmatmul.mubr.f32.gmra.mrb[0].mxu0 %v485
      %v812 = vpop.f32.mrb[0].mxu0
      %v813 = vadd.f32 %v446, %v812
      %v814 = vpop.f32.mrb[0].mxu0
      %v815 = vadd.f32 %v446, %v814
      %816 = vmatprep.mubr.f32.mxu0 0.0
      %817 = vmatmul.mubr.f32.gmra.mrb[0].mxu0 %v488
      %v818 = vpop.f32.mrb[0].mxu0
      %v819 = vadd.f32 %v451, %v818
      %v820 = vpop.f32.mrb[0].mxu0
      %v821 = vadd.f32 %v451, %v820
      %822 = vmatprep.mubr.f32.mxu0 0.0
      %823 = vmatmul.mubr.f32.gmra.mrb[0].mxu0 %v491
      %v824 = vpop.f32.mrb[0].mxu0
      %v825 = vadd.f32 %v456, %v824
      %v826 = vpop.f32.mrb[0].mxu0
      %v827 = vadd.f32 %v456, %v826
      %828 = vdwg.mxu0
      %829 = vmatprep.subr.mxu0 %v508
      %830 = vmatpush1.msra.mxu0 %v506
      %831 = vmatprep.subr.mxu0 0.0
      %832 = vmatpush1.msra.mxu0 0.0
      %833 = vmatprep.subr.mxu0 0.0
      %834 = vmatpush1.msra.mxu0 0.0
      %835 = vmatprep.subr.mxu0 0.0
      %836 = vmatpush1.msra.mxu0 0.0
      %837 = vmatprep.subr.mxu0 0.0
      %838 = vmatpush1.msra.mxu0 0.0
      %839 = vmatprep.subr.mxu0 0.0
      %840 = vmatpush1.msra.mxu0 0.0
      %841 = vmatprep.subr.mxu0 0.0
      %842 = vmatpush1.msra.mxu0 0.0
      %843 = vmatprep.subr.mxu0 0.0
      %844 = vmatpush1.msra.mxu0 0.0
      %845 = vmatprep.subr.mxu0 0.0
      %846 = vmatpush1.msra.mxu0 0.0
      %847 = vmatprep.subr.mxu0 0.0
      %848 = vmatpush1.msra.mxu0 0.0
      %849 = vmatprep.subr.mxu0 0.0
      %850 = vmatpush1.msra.mxu0 0.0
      %851 = vmatprep.subr.mxu0 0.0
      %852 = vmatpush1.msra.mxu0 0.0
      %853 = vmatprep.subr.mxu0 0.0
      %854 = vmatpush1.msra.mxu0 0.0
      %855 = vmatprep.subr.mxu0 0.0
      %856 = vmatpush1.msra.mxu0 0.0
      %857 = vmatprep.subr.mxu0 0.0
      %858 = vmatpush1.msra.mxu0 0.0
      %859 = vmatprep.subr.mxu0 0.0
      %860 = vmatpush1.msra.mxu0 0.0
      %861 = vmatprep.subr.mxu0 0.0
      %862 = vmatpush1.msra.mxu0 0.0
      %863 = vmatprep.subr.mxu0 0.0
      %864 = vmatpush1.msra.mxu0 0.0
      %865 = vmatprep.subr.mxu0 0.0
      %866 = vmatpush1.msra.mxu0 0.0
      %867 = vmatprep.subr.mxu0 0.0
      %868 = vmatpush1.msra.mxu0 0.0
      %869 = vmatprep.subr.mxu0 0.0
      %870 = vmatpush1.msra.mxu0 0.0
      %871 = vmatprep.subr.mxu0 0.0
      %872 = vmatpush1.msra.mxu0 0.0
      %873 = vmatprep.subr.mxu0 0.0
      %874 = vmatpush1.msra.mxu0 0.0
      %875 = vmatprep.subr.mxu0 0.0
      %876 = vmatpush1.msra.mxu0 0.0
      %877 = vmatprep.subr.mxu0 0.0
      %878 = vmatpush1.msra.mxu0 0.0
      %879 = vmatprep.subr.mxu0 0.0
      %880 = vmatpush1.msra.mxu0 0.0
      %881 = vmatprep.subr.mxu0 0.0
      %882 = vmatpush1.msra.mxu0 0.0
      %883 = vmatprep.subr.mxu0 0.0
      %884 = vmatpush1.msra.mxu0 0.0
      %885 = vmatprep.subr.mxu0 0.0
      %886 = vmatpush1.msra.mxu0 0.0
      %887 = vmatprep.subr.mxu0 0.0
      %888 = vmatpush1.msra.mxu0 0.0
      %889 = vmatprep.subr.mxu0 0.0
      %890 = vmatpush1.msra.mxu0 0.0
      %891 = vmatprep.subr.mxu0 0.0
      %892 = vmatpush1.msra.mxu0 0.0
      %893 = vmatprep.mubr.f32.mxu0 0.0
      %894 = vmatmul.mubr.f32.gmra.mrb[0].mxu0 %v476
      %v895 = vpop.f32.mrb[0].mxu0
      %v896 = vadd.f32 %v431, %v895
      %v897 = vpop.f32.mrb[0].mxu0
      %v898 = vadd.f32 %v431, %v897
      %899 = vmatprep.mubr.f32.mxu0 0.0
      %900 = vmatmul.mubr.f32.gmra.mrb[0].mxu0 %v479
      %v901 = vpop.f32.mrb[0].mxu0
      %v902 = vadd.f32 %v436, %v901
      %v903 = vpop.f32.mrb[0].mxu0
      %v904 = vadd.f32 %v436, %v903
      %905 = vmatprep.mubr.f32.mxu0 0.0
      %906 = vmatmul.mubr.f32.gmra.mrb[0].mxu0 %v482
      %v907 = vpop.f32.mrb[0].mxu0
      %v908 = vadd.f32 %v441, %v907
      %v909 = vpop.f32.mrb[0].mxu0
      %v910 = vadd.f32 %v441, %v909
      %911 = vmatprep.mubr.f32.mxu0 0.0
      %912 = vmatmul.mubr.f32.gmra.mrb[0].mxu0 %v485
      %v913 = vpop.f32.mrb[0].mxu0
      %v914 = vadd.f32 %v446, %v913
      %v915 = vpop.f32.mrb[0].mxu0
      %v916 = vadd.f32 %v446, %v915
      %917 = vmatprep.mubr.f32.mxu0 0.0
      %918 = vmatmul.mubr.f32.gmra.mrb[0].mxu0 %v488
      %v919 = vpop.f32.mrb[0].mxu0
      %v920 = vadd.f32 %v451, %v919
      %v921 = vpop.f32.mrb[0].mxu0
      %v922 = vadd.f32 %v451, %v921
      %923 = vmatprep.mubr.f32.mxu0 0.0
      %924 = vmatmul.mubr.f32.gmra.mrb[0].mxu0 %v491
      %v925 = vpop.f32.mrb[0].mxu0
      %v926 = vadd.f32 %v456, %v925
      %v927 = vpop.f32.mrb[0].mxu0
      %v928 = vadd.f32 %v456, %v927
      %929 = vdwg.mxu0
      %930 = vmatprep.subr.mxu0 %v512
      %931 = vmatpush1.msra.mxu0 %v510
      %932 = vmatprep.subr.mxu0 0.0
      %933 = vmatpush1.msra.mxu0 0.0
      %934 = vmatprep.subr.mxu0 0.0
      %935 = vmatpush1.msra.mxu0 0.0
      %936 = vmatprep.subr.mxu0 0.0
      %937 = vmatpush1.msra.mxu0 0.0
      %938 = vmatprep.subr.mxu0 0.0
      %939 = vmatpush1.msra.mxu0 0.0
      %940 = vmatprep.subr.mxu0 0.0
      %941 = vmatpush1.msra.mxu0 0.0
      %942 = vmatprep.subr.mxu0 0.0
      %943 = vmatpush1.msra.mxu0 0.0
      %944 = vmatprep.subr.mxu0 0.0
      %945 = vmatpush1.msra.mxu0 0.0
      %946 = vmatprep.subr.mxu0 0.0
      %947 = vmatpush1.msra.mxu0 0.0
      %948 = vmatprep.subr.mxu0 0.0
      %949 = vmatpush1.msra.mxu0 0.0
      %950 = vmatprep.subr.mxu0 0.0
      %951 = vmatpush1.msra.mxu0 0.0
      %952 = vmatprep.subr.mxu0 0.0
      %953 = vmatpush1.msra.mxu0 0.0
      %954 = vmatprep.subr.mxu0 0.0
      %955 = vmatpush1.msra.mxu0 0.0
      %956 = vmatprep.subr.mxu0 0.0
      %957 = vmatpush1.msra.mxu0 0.0
      %958 = vmatprep.subr.mxu0 0.0
      %959 = vmatpush1.msra.mxu0 0.0
      %960 = vmatprep.subr.mxu0 0.0
      %961 = vmatpush1.msra.mxu0 0.0
      %962 = vmatprep.subr.mxu0 0.0
      %963 = vmatpush1.msra.mxu0 0.0
      %964 = vmatprep.subr.mxu0 0.0
      %965 = vmatpush1.msra.mxu0 0.0
      %966 = vmatprep.subr.mxu0 0.0
      %967 = vmatpush1.msra.mxu0 0.0
      %968 = vmatprep.subr.mxu0 0.0
      %969 = vmatpush1.msra.mxu0 0.0
      %970 = vmatprep.subr.mxu0 0.0
      %971 = vmatpush1.msra.mxu0 0.0
      %972 = vmatprep.subr.mxu0 0.0
      %973 = vmatpush1.msra.mxu0 0.0
      %974 = vmatprep.subr.mxu0 0.0
      %975 = vmatpush1.msra.mxu0 0.0
      %976 = vmatprep.subr.mxu0 0.0
      %977 = vmatpush1.msra.mxu0 0.0
      %978 = vmatprep.subr.mxu0 0.0
      %979 = vmatpush1.msra.mxu0 0.0
      %980 = vmatprep.subr.mxu0 0.0
      %981 = vmatpush1.msra.mxu0 0.0
      %982 = vmatprep.subr.mxu0 0.0
      %983 = vmatpush1.msra.mxu0 0.0
      %984 = vmatprep.subr.mxu0 0.0
      %985 = vmatpush1.msra.mxu0 0.0
      %986 = vmatprep.subr.mxu0 0.0
      %987 = vmatpush1.msra.mxu0 0.0
      %988 = vmatprep.subr.mxu0 0.0
      %989 = vmatpush1.msra.mxu0 0.0
      %990 = vmatprep.subr.mxu0 0.0
      %991 = vmatpush1.msra.mxu0 0.0
      %992 = vmatprep.subr.mxu0 0.0
      %993 = vmatpush1.msra.mxu0 0.0
      %994 = vmatprep.mubr.f32.mxu0 0.0
      %995 = vmatmul.mubr.f32.gmra.mrb[0].mxu0 %v476
      %v996 = vpop.f32.mrb[0].mxu0
      %v997 = vadd.f32 %v431, %v996
      %v998 = vpop.f32.mrb[0].mxu0
      %v999 = vadd.f32 %v431, %v998
      %1000 = vmatprep.mubr.f32.mxu0 0.0
      %1001 = vmatmul.mubr.f32.gmra.mrb[0].mxu0 %v479
      %v1002 = vpop.f32.mrb[0].mxu0
      %v1003 = vadd.f32 %v436, %v1002
      %v1004 = vpop.f32.mrb[0].mxu0
      %v1005 = vadd.f32 %v436, %v1004
      %1006 = vmatprep.mubr.f32.mxu0 0.0
      %1007 = vmatmul.mubr.f32.gmra.mrb[0].mxu0 %v482
      %v1008 = vpop.f32.mrb[0].mxu0
      %v1009 = vadd.f32 %v441, %v1008
      %v1010 = vpop.f32.mrb[0].mxu0
      %v1011 = vadd.f32 %v441, %v1010
      %1012 = vmatprep.mubr.f32.mxu0 0.0
      %1013 = vmatmul.mubr.f32.gmra.mrb[0].mxu0 %v485
      %v1014 = vpop.f32.mrb[0].mxu0
      %v1015 = vadd.f32 %v446, %v1014
      %v1016 = vpop.f32.mrb[0].mxu0
      %v1017 = vadd.f32 %v446, %v1016
      %1018 = vmatprep.mubr.f32.mxu0 0.0
      %1019 = vmatmul.mubr.f32.gmra.mrb[0].mxu0 %v488
      %v1020 = vpop.f32.mrb[0].mxu0
      %v1021 = vadd.f32 %v451, %v1020
      %v1022 = vpop.f32.mrb[0].mxu0
      %v1023 = vadd.f32 %v451, %v1022
      %1024 = vmatprep.mubr.f32.mxu0 0.0
      %1025 = vmatmul.mubr.f32.gmra.mrb[0].mxu0 %v491
      %v1026 = vpop.f32.mrb[0].mxu0
      %v1027 = vadd.f32 %v456, %v1026
      %v1028 = vpop.f32.mrb[0].mxu0
      %v1029 = vadd.f32 %v456, %v1028
      %1030 = vdwg.mxu0
      %1031 = vmatprep.subr.mxu0 %v516
      %1032 = vmatpush1.msra.mxu0 %v514
      %1033 = vmatprep.subr.mxu0 0.0
      %1034 = vmatpush1.msra.mxu0 0.0
      %1035 = vmatprep.subr.mxu0 0.0
      %1036 = vmatpush1.msra.mxu0 0.0
      %1037 = vmatprep.subr.mxu0 0.0
      %1038 = vmatpush1.msra.mxu0 0.0
      %1039 = vmatprep.subr.mxu0 0.0
      %1040 = vmatpush1.msra.mxu0 0.0
      %1041 = vmatprep.subr.mxu0 0.0
      %1042 = vmatpush1.msra.mxu0 0.0
      %1043 = vmatprep.subr.mxu0 0.0
      %1044 = vmatpush1.msra.mxu0 0.0
      %1045 = vmatprep.subr.mxu0 0.0
      %1046 = vmatpush1.msra.mxu0 0.0
      %1047 = vmatprep.subr.mxu0 0.0
      %1048 = vmatpush1.msra.mxu0 0.0
      %1049 = vmatprep.subr.mxu0 0.0
      %1050 = vmatpush1.msra.mxu0 0.0
      %1051 = vmatprep.subr.mxu0 0.0
      %1052 = vmatpush1.msra.mxu0 0.0
      %1053 = vmatprep.subr.mxu0 0.0
      %1054 = vmatpush1.msra.mxu0 0.0
      %1055 = vmatprep.subr.mxu0 0.0
      %1056 = vmatpush1.msra.mxu0 0.0
      %1057 = vmatprep.subr.mxu0 0.0
      %1058 = vmatpush1.msra.mxu0 0.0
      %1059 = vmatprep.subr.mxu0 0.0
      %1060 = vmatpush1.msra.mxu0 0.0
      %1061 = vmatprep.subr.mxu0 0.0
      %1062 = vmatpush1.msra.mxu0 0.0
      %1063 = vmatprep.subr.mxu0 0.0
      %1064 = vmatpush1.msra.mxu0 0.0
      %1065 = vmatprep.subr.mxu0 0.0
      %1066 = vmatpush1.msra.mxu0 0.0
      %1067 = vmatprep.subr.mxu0 0.0
      %1068 = vmatpush1.msra.mxu0 0.0
      %1069 = vmatprep.subr.mxu0 0.0
      %1070 = vmatpush1.msra.mxu0 0.0
      %1071 = vmatprep.subr.mxu0 0.0
      %1072 = vmatpush1.msra.mxu0 0.0
      %1073 = vmatprep.subr.mxu0 0.0
      %1074 = vmatpush1.msra.mxu0 0.0
      %1075 = vmatprep.subr.mxu0 0.0
      %1076 = vmatpush1.msra.mxu0 0.0
      %1077 = vmatprep.subr.mxu0 0.0
      %1078 = vmatpush1.msra.mxu0 0.0
      %1079 = vmatprep.subr.mxu0 0.0
      %1080 = vmatpush1.msra.mxu0 0.0
      %1081 = vmatprep.subr.mxu0 0.0
      %1082 = vmatpush1.msra.mxu0 0.0
      %1083 = vmatprep.subr.mxu0 0.0
      %1084 = vmatpush1.msra.mxu0 0.0
      %1085 = vmatprep.subr.mxu0 0.0
      %1086 = vmatpush1.msra.mxu0 0.0
      %1087 = vmatprep.subr.mxu0 0.0
      %1088 = vmatpush1.msra.mxu0 0.0
      %1089 = vmatprep.subr.mxu0 0.0
      %1090 = vmatpush1.msra.mxu0 0.0
      %1091 = vmatprep.subr.mxu0 0.0
      %1092 = vmatpush1.msra.mxu0 0.0
      %1093 = vmatprep.subr.mxu0 0.0
      %1094 = vmatpush1.msra.mxu0 0.0
      %1095 = vmatprep.mubr.f32.mxu0 0.0
      %1096 = vmatmul.mubr.f32.gmra.mrb[0].mxu0 %v476
      %v1097 = vpop.f32.mrb[0].mxu0
      %v1098 = vadd.f32 %v431, %v1097
      %v1099 = vpop.f32.mrb[0].mxu0
      %v1100 = vadd.f32 %v431, %v1099
      %1101 = vmatprep.mubr.f32.mxu0 0.0
      %1102 = vmatmul.mubr.f32.gmra.mrb[0].mxu0 %v479
      %v1103 = vpop.f32.mrb[0].mxu0
      %v1104 = vadd.f32 %v436, %v1103
      %v1105 = vpop.f32.mrb[0].mxu0
      %v1106 = vadd.f32 %v436, %v1105
      %1107 = vmatprep.mubr.f32.mxu0 0.0
      %1108 = vmatmul.mubr.f32.gmra.mrb[0].mxu0 %v482
      %v1109 = vpop.f32.mrb[0].mxu0
      %v1110 = vadd.f32 %v441, %v1109
      %v1111 = vpop.f32.mrb[0].mxu0
      %v1112 = vadd.f32 %v441, %v1111
      %1113 = vmatprep.mubr.f32.mxu0 0.0
      %1114 = vmatmul.mubr.f32.gmra.mrb[0].mxu0 %v485
      %v1115 = vpop.f32.mrb[0].mxu0
      %v1116 = vadd.f32 %v446, %v1115
      %v1117 = vpop.f32.mrb[0].mxu0
      %v1118 = vadd.f32 %v446, %v1117
      %1119 = vmatprep.mubr.f32.mxu0 0.0
      %1120 = vmatmul.mubr.f32.gmra.mrb[0].mxu0 %v488
      %v1121 = vpop.f32.mrb[0].mxu0
      %v1122 = vadd.f32 %v451, %v1121
      %v1123 = vpop.f32.mrb[0].mxu0
      %v1124 = vadd.f32 %v451, %v1123
      %1125 = vmatprep.mubr.f32.mxu0 0.0
      %1126 = vmatmul.mubr.f32.gmra.mrb[0].mxu0 %v491
      %v1127 = vpop.f32.mrb[0].mxu0
      %v1128 = vadd.f32 %v456, %v1127
      %v1129 = vpop.f32.mrb[0].mxu0
      %v1130 = vadd.f32 %v456, %v1129
      %1131 = vdwg.mxu0
      %1132 = vmatprep.subr.mxu0 %v520
      %1133 = vmatpush1.msra.mxu0 %v518
      %1134 = vmatprep.subr.mxu0 0.0
      %1135 = vmatpush1.msra.mxu0 0.0
      %1136 = vmatprep.subr.mxu0 0.0
      %1137 = vmatpush1.msra.mxu0 0.0
      %1138 = vmatprep.subr.mxu0 0.0
      %1139 = vmatpush1.msra.mxu0 0.0
      %1140 = vmatprep.subr.mxu0 0.0
      %1141 = vmatpush1.msra.mxu0 0.0
      %1142 = vmatprep.subr.mxu0 0.0
      %1143 = vmatpush1.msra.mxu0 0.0
      %1144 = vmatprep.subr.mxu0 0.0
      %1145 = vmatpush1.msra.mxu0 0.0
      %1146 = vmatprep.subr.mxu0 0.0
      %1147 = vmatpush1.msra.mxu0 0.0
      %1148 = vmatprep.subr.mxu0 0.0
      %1149 = vmatpush1.msra.mxu0 0.0
      %1150 = vmatprep.subr.mxu0 0.0
      %1151 = vmatpush1.msra.mxu0 0.0
      %1152 = vmatprep.subr.mxu0 0.0
      %1153 = vmatpush1.msra.mxu0 0.0
      %1154 = vmatprep.subr.mxu0 0.0
      %1155 = vmatpush1.msra.mxu0 0.0
      %1156 = vmatprep.subr.mxu0 0.0
      %1157 = vmatpush1.msra.mxu0 0.0
      %1158 = vmatprep.subr.mxu0 0.0
      %1159 = vmatpush1.msra.mxu0 0.0
      %1160 = vmatprep.subr.mxu0 0.0
      %1161 = vmatpush1.msra.mxu0 0.0
      %1162 = vmatprep.subr.mxu0 0.0
      %1163 = vmatpush1.msra.mxu0 0.0
      %1164 = vmatprep.subr.mxu0 0.0
      %1165 = vmatpush1.msra.mxu0 0.0
      %1166 = vmatprep.subr.mxu0 0.0
      %1167 = vmatpush1.msra.mxu0 0.0
      %1168 = vmatprep.subr.mxu0 0.0
      %1169 = vmatpush1.msra.mxu0 0.0
      %1170 = vmatprep.subr.mxu0 0.0
      %1171 = vmatpush1.msra.mxu0 0.0
      %1172 = vmatprep.subr.mxu0 0.0
      %1173 = vmatpush1.msra.mxu0 0.0
      %1174 = vmatprep.subr.mxu0 0.0
      %1175 = vmatpush1.msra.mxu0 0.0
      %1176 = vmatprep.subr.mxu0 0.0
      %1177 = vmatpush1.msra.mxu0 0.0
      %1178 = vmatprep.subr.mxu0 0.0
      %1179 = vmatpush1.msra.mxu0 0.0
      %1180 = vmatprep.subr.mxu0 0.0
      %1181 = vmatpush1.msra.mxu0 0.0
      %1182 = vmatprep.subr.mxu0 0.0
      %1183 = vmatpush1.msra.mxu0 0.0
      %1184 = vmatprep.subr.mxu0 0.0
      %1185 = vmatpush1.msra.mxu0 0.0
      %1186 = vmatprep.subr.mxu0 0.0
      %1187 = vmatpush1.msra.mxu0 0.0
      %1188 = vmatprep.subr.mxu0 0.0
      %1189 = vmatpush1.msra.mxu0 0.0
      %1190 = vmatprep.subr.mxu0 0.0
      %1191 = vmatpush1.msra.mxu0 0.0
      %1192 = vmatprep.subr.mxu0 0.0
      %1193 = vmatpush1.msra.mxu0 0.0
      %1194 = vmatprep.subr.mxu0 0.0
      %1195 = vmatpush1.msra.mxu0 0.0
      %1196 = vmatprep.mubr.f32.mxu0 0.0
      %1197 = vmatmul.mubr.f32.gmra.mrb[0].mxu0 %v476
      %v1198 = vpop.f32.mrb[0].mxu0
      %v1199 = vadd.f32 %v431, %v1198
      %v1200 = vpop.f32.mrb[0].mxu0
      %v1201 = vadd.f32 %v431, %v1200
      %1202 = vmatprep.mubr.f32.mxu0 0.0
      %1203 = vmatmul.mubr.f32.gmra.mrb[0].mxu0 %v479
      %v1204 = vpop.f32.mrb[0].mxu0
      %v1205 = vadd.f32 %v436, %v1204
      %v1206 = vpop.f32.mrb[0].mxu0
      %v1207 = vadd.f32 %v436, %v1206
      %1208 = vmatprep.mubr.f32.mxu0 0.0
      %1209 = vmatmul.mubr.f32.gmra.mrb[0].mxu0 %v482
      %v1210 = vpop.f32.mrb[0].mxu0
      %v1211 = vadd.f32 %v441, %v1210
      %v1212 = vpop.f32.mrb[0].mxu0
      %v1213 = vadd.f32 %v441, %v1212
      %1214 = vmatprep.mubr.f32.mxu0 0.0
      %1215 = vmatmul.mubr.f32.gmra.mrb[0].mxu0 %v485
      %v1216 = vpop.f32.mrb[0].mxu0
      %v1217 = vadd.f32 %v446, %v1216
      %v1218 = vpop.f32.mrb[0].mxu0
      %v1219 = vadd.f32 %v446, %v1218
      %1220 = vmatprep.mubr.f32.mxu0 0.0
      %1221 = vmatmul.mubr.f32.gmra.mrb[0].mxu0 %v488
      %v1222 = vpop.f32.mrb[0].mxu0
      %v1223 = vadd.f32 %v451, %v1222
      %v1224 = vpop.f32.mrb[0].mxu0
      %v1225 = vadd.f32 %v451, %v1224
      %1226 = vmatprep.mubr.f32.mxu0 0.0
      %1227 = vmatmul.mubr.f32.gmra.mrb[0].mxu0 %v491
      %v1228 = vpop.f32.mrb[0].mxu0
      %v1229 = vadd.f32 %v456, %v1228
      %v1230 = vpop.f32.mrb[0].mxu0
      %v1231 = vadd.f32 %v456, %v1230
      %1232 = vdwg.mxu0
      %1233 = vmatprep.subr.mxu0 %v524
      %1234 = vmatpush1.msra.mxu0 %v522
      %1235 = vmatprep.subr.mxu0 0.0
      %1236 = vmatpush1.msra.mxu0 0.0
      %1237 = vmatprep.subr.mxu0 0.0
      %1238 = vmatpush1.msra.mxu0 0.0
      %1239 = vmatprep.subr.mxu0 0.0
      %1240 = vmatpush1.msra.mxu0 0.0
      %1241 = vmatprep.subr.mxu0 0.0
      %1242 = vmatpush1.msra.mxu0 0.0
      %1243 = vmatprep.subr.mxu0 0.0
      %1244 = vmatpush1.msra.mxu0 0.0
      %1245 = vmatprep.subr.mxu0 0.0
      %1246 = vmatpush1.msra.mxu0 0.0
      %1247 = vmatprep.subr.mxu0 0.0
      %1248 = vmatpush1.msra.mxu0 0.0
      %1249 = vmatprep.subr.mxu0 0.0
      %1250 = vmatpush1.msra.mxu0 0.0
      %1251 = vmatprep.subr.mxu0 0.0
      %1252 = vmatpush1.msra.mxu0 0.0
      %1253 = vmatprep.subr.mxu0 0.0
      %1254 = vmatpush1.msra.mxu0 0.0
      %1255 = vmatprep.subr.mxu0 0.0
      %1256 = vmatpush1.msra.mxu0 0.0
      %1257 = vmatprep.subr.mxu0 0.0
      %1258 = vmatpush1.msra.mxu0 0.0
      %1259 = vmatprep.subr.mxu0 0.0
      %1260 = vmatpush1.msra.mxu0 0.0
      %1261 = vmatprep.subr.mxu0 0.0
      %1262 = vmatpush1.msra.mxu0 0.0
      %1263 = vmatprep.subr.mxu0 0.0
      %1264 = vmatpush1.msra.mxu0 0.0
      %1265 = vmatprep.subr.mxu0 0.0
      %1266 = vmatpush1.msra.mxu0 0.0
      %1267 = vmatprep.subr.mxu0 0.0
      %1268 = vmatpush1.msra.mxu0 0.0
      %1269 = vmatprep.subr.mxu0 0.0
      %1270 = vmatpush1.msra.mxu0 0.0
      %1271 = vmatprep.subr.mxu0 0.0
      %1272 = vmatpush1.msra.mxu0 0.0
      %1273 = vmatprep.subr.mxu0 0.0
      %1274 = vmatpush1.msra.mxu0 0.0
      %1275 = vmatprep.subr.mxu0 0.0
      %1276 = vmatpush1.msra.mxu0 0.0
      %1277 = vmatprep.subr.mxu0 0.0
      %1278 = vmatpush1.msra.mxu0 0.0
      %1279 = vmatprep.subr.mxu0 0.0
      %1280 = vmatpush1.msra.mxu0 0.0
      %1281 = vmatprep.subr.mxu0 0.0
      %1282 = vmatpush1.msra.mxu0 0.0
      %1283 = vmatprep.subr.mxu0 0.0
      %1284 = vmatpush1.msra.mxu0 0.0
      %1285 = vmatprep.subr.mxu0 0.0
      %1286 = vmatpush1.msra.mxu0 0.0
      %1287 = vmatprep.subr.mxu0 0.0
      %1288 = vmatpush1.msra.mxu0 0.0
      %1289 = vmatprep.subr.mxu0 0.0
      %1290 = vmatpush1.msra.mxu0 0.0
      %1291 = vmatprep.subr.mxu0 0.0
      %1292 = vmatpush1.msra.mxu0 0.0
      %1293 = vmatprep.subr.mxu0 0.0
      %1294 = vmatpush1.msra.mxu0 0.0
      %1295 = vmatprep.subr.mxu0 0.0
      %1296 = vmatpush1.msra.mxu0 0.0
      %1297 = vmatprep.mubr.f32.mxu0 0.0
      %1298 = vmatmul.mubr.f32.gmra.mrb[0].mxu0 %v476
      %v1299 = vpop.f32.mrb[0].mxu0
      %v1300 = vadd.f32 %v431, %v1299
      %v1301 = vpop.f32.mrb[0].mxu0
      %v1302 = vadd.f32 %v431, %v1301
      %1303 = vmatprep.mubr.f32.mxu0 0.0
      %1304 = vmatmul.mubr.f32.gmra.mrb[0].mxu0 %v479
      %v1305 = vpop.f32.mrb[0].mxu0
      %v1306 = vadd.f32 %v436, %v1305
      %v1307 = vpop.f32.mrb[0].mxu0
      %v1308 = vadd.f32 %v436, %v1307
      %1309 = vmatprep.mubr.f32.mxu0 0.0
      %1310 = vmatmul.mubr.f32.gmra.mrb[0].mxu0 %v482
      %v1311 = vpop.f32.mrb[0].mxu0
      %v1312 = vadd.f32 %v441, %v1311
      %v1313 = vpop.f32.mrb[0].mxu0
      %v1314 = vadd.f32 %v441, %v1313
      %1315 = vmatprep.mubr.f32.mxu0 0.0
      %1316 = vmatmul.mubr.f32.gmra.mrb[0].mxu0 %v485
      %v1317 = vpop.f32.mrb[0].mxu0
      %v1318 = vadd.f32 %v446, %v1317
      %v1319 = vpop.f32.mrb[0].mxu0
      %v1320 = vadd.f32 %v446, %v1319
      %1321 = vmatprep.mubr.f32.mxu0 0.0
      %1322 = vmatmul.mubr.f32.gmra.mrb[0].mxu0 %v488
      %v1323 = vpop.f32.mrb[0].mxu0
      %v1324 = vadd.f32 %v451, %v1323
      %v1325 = vpop.f32.mrb[0].mxu0
      %v1326 = vadd.f32 %v451, %v1325
      %1327 = vmatprep.mubr.f32.mxu0 0.0
      %1328 = vmatmul.mubr.f32.gmra.mrb[0].mxu0 %v491
      %v1329 = vpop.f32.mrb[0].mxu0
      %v1330 = vadd.f32 %v456, %v1329
      %v1331 = vpop.f32.mrb[0].mxu0
      %v1332 = vadd.f32 %v456, %v1331
      %1333 = vdwg.mxu0
      %v1334 = vmax.f32 %v593, 0.0
      %v1335 = vmax.f32 %v595, 0.0
      %v1336 = vmax.f32 %v694, 0.0
      %v1337 = vmax.f32 %v696, 0.0
      %v1338 = vmax.f32 %v795, 0.0
      %v1339 = vmax.f32 %v797, 0.0
      %v1340 = vmax.f32 %v896, 0.0
      %v1341 = vmax.f32 %v898, 0.0
      %v1342 = vmax.f32 %v997, 0.0
      %v1343 = vmax.f32 %v999, 0.0
      %v1344 = vmax.f32 %v1098, 0.0
      %v1345 = vmax.f32 %v1100, 0.0
      %v1346 = vmax.f32 %v1199, 0.0
      %v1347 = vmax.f32 %v1201, 0.0
      %v1348 = vmax.f32 %v1300, 0.0
      %v1349 = vmax.f32 %v1302, 0.0
      %v1350 = vmax.f32 %v599, 0.0
      %v1351 = vmax.f32 %v601, 0.0
      %v1352 = vmax.f32 %v700, 0.0
      %v1353 = vmax.f32 %v702, 0.0
      %v1354 = vmax.f32 %v801, 0.0
      %v1355 = vmax.f32 %v803, 0.0
      %v1356 = vmax.f32 %v902, 0.0
      %v1357 = vmax.f32 %v904, 0.0
      %v1358 = vmax.f32 %v1003, 0.0
      %v1359 = vmax.f32 %v1005, 0.0
      %v1360 = vmax.f32 %v1104, 0.0
      %v1361 = vmax.f32 %v1106, 0.0
      %v1362 = vmax.f32 %v1205, 0.0
      %v1363 = vmax.f32 %v1207, 0.0
      %v1364 = vmax.f32 %v1306, 0.0
      %v1365 = vmax.f32 %v1308, 0.0
      %v1366 = vmax.f32 %v605, 0.0
      %v1367 = vmax.f32 %v607, 0.0
      %v1368 = vmax.f32 %v706, 0.0
      %v1369 = vmax.f32 %v708, 0.0
      %v1370 = vmax.f32 %v807, 0.0
      %v1371 = vmax.f32 %v809, 0.0
      %v1372 = vmax.f32 %v908, 0.0
      %v1373 = vmax.f32 %v910, 0.0
      %v1374 = vmax.f32 %v1009, 0.0
      %v1375 = vmax.f32 %v1011, 0.0
      %v1376 = vmax.f32 %v1110, 0.0
      %v1377 = vmax.f32 %v1112, 0.0
      %v1378 = vmax.f32 %v1211, 0.0
      %v1379 = vmax.f32 %v1213, 0.0
      %v1380 = vmax.f32 %v1312, 0.0
      %v1381 = vmax.f32 %v1314, 0.0
      %v1382 = vmax.f32 %v611, 0.0
      %v1383 = vmax.f32 %v613, 0.0
      %v1384 = vmax.f32 %v712, 0.0
      %v1385 = vmax.f32 %v714, 0.0
      %v1386 = vmax.f32 %v813, 0.0
      %v1387 = vmax.f32 %v815, 0.0
      %v1388 = vmax.f32 %v914, 0.0
      %v1389 = vmax.f32 %v916, 0.0
      %v1390 = vmax.f32 %v1015, 0.0
      %v1391 = vmax.f32 %v1017, 0.0
      %v1392 = vmax.f32 %v1116, 0.0
      %v1393 = vmax.f32 %v1118, 0.0
      %v1394 = vmax.f32 %v1217, 0.0
      %v1395 = vmax.f32 %v1219, 0.0
      %v1396 = vmax.f32 %v1318, 0.0
      %v1397 = vmax.f32 %v1320, 0.0
      %v1398 = vmax.f32 %v617, 0.0
      %v1399 = vmax.f32 %v619, 0.0
      %v1400 = vmax.f32 %v718, 0.0
      %v1401 = vmax.f32 %v720, 0.0
      %v1402 = vmax.f32 %v819, 0.0
      %v1403 = vmax.f32 %v821, 0.0
      %v1404 = vmax.f32 %v920, 0.0
      %v1405 = vmax.f32 %v922, 0.0
      %v1406 = vmax.f32 %v1021, 0.0
      %v1407 = vmax.f32 %v1023, 0.0
      %v1408 = vmax.f32 %v1122, 0.0
      %v1409 = vmax.f32 %v1124, 0.0
      %v1410 = vmax.f32 %v1223, 0.0
      %v1411 = vmax.f32 %v1225, 0.0
      %v1412 = vmax.f32 %v1324, 0.0
      %v1413 = vmax.f32 %v1326, 0.0
      %v1414 = vmax.f32 %v623, 0.0
      %v1415 = vmax.f32 %v625, 0.0
      %v1416 = vmax.f32 %v724, 0.0
      %v1417 = vmax.f32 %v726, 0.0
      %v1418 = vmax.f32 %v825, 0.0
      %v1419 = vmax.f32 %v827, 0.0
      %v1420 = vmax.f32 %v926, 0.0
      %v1421 = vmax.f32 %v928, 0.0
      %v1422 = vmax.f32 %v1027, 0.0
      %v1423 = vmax.f32 %v1029, 0.0
      %v1424 = vmax.f32 %v1128, 0.0
      %v1425 = vmax.f32 %v1130, 0.0
      %v1426 = vmax.f32 %v1229, 0.0
      %v1427 = vmax.f32 %v1231, 0.0
      %v1428 = vmax.f32 %v1330, 0.0
      %v1429 = vmax.f32 %v1332, 0.0
      %v1431 = vsel %vm474, %v418, 0
      %1433 = vmatprep.subr.mxu0 %v496
      %1434 = vmatpush1.msra.mxu0 %v494
      %1435 = vmatprep.subr.mxu0 0.0
      %1436 = vmatpush1.msra.mxu0 0.0
      %1437 = vmatprep.subr.mxu0 0.0
      %1438 = vmatpush1.msra.mxu0 0.0
      %1439 = vmatprep.subr.mxu0 0.0
      %1440 = vmatpush1.msra.mxu0 0.0
      %1441 = vmatprep.subr.mxu0 0.0
      %1442 = vmatpush1.msra.mxu0 0.0
      %1443 = vmatprep.subr.mxu0 0.0
      %1444 = vmatpush1.msra.mxu0 0.0
      %1445 = vmatprep.subr.mxu0 0.0
      %1446 = vmatpush1.msra.mxu0 0.0
      %1447 = vmatprep.subr.mxu0 0.0
      %1448 = vmatpush1.msra.mxu0 0.0
      %1449 = vmatprep.subr.mxu0 0.0
      %1450 = vmatpush1.msra.mxu0 0.0
      %1451 = vmatprep.subr.mxu0 0.0
      %1452 = vmatpush1.msra.mxu0 0.0
      %1453 = vmatprep.subr.mxu0 0.0
      %1454 = vmatpush1.msra.mxu0 0.0
      %1455 = vmatprep.subr.mxu0 0.0
      %1456 = vmatpush1.msra.mxu0 0.0
      %1457 = vmatprep.subr.mxu0 0.0
      %1458 = vmatpush1.msra.mxu0 0.0
      %1459 = vmatprep.subr.mxu0 0.0
      %1460 = vmatpush1.msra.mxu0 0.0
      %1461 = vmatprep.subr.mxu0 0.0
      %1462 = vmatpush1.msra.mxu0 0.0
      %1463 = vmatprep.subr.mxu0 0.0
      %1464 = vmatpush1.msra.mxu0 0.0
      %1465 = vmatprep.subr.mxu0 0.0
      %1466 = vmatpush1.msra.mxu0 0.0
      %1467 = vmatprep.subr.mxu0 0.0
      %1468 = vmatpush1.msra.mxu0 0.0
      %1469 = vmatprep.subr.mxu0 0.0
      %1470 = vmatpush1.msra.mxu0 0.0
      %1471 = vmatprep.subr.mxu0 0.0
      %1472 = vmatpush1.msra.mxu0 0.0
      %1473 = vmatprep.subr.mxu0 0.0
      %1474 = vmatpush1.msra.mxu0 0.0
      %1475 = vmatprep.subr.mxu0 0.0
      %1476 = vmatpush1.msra.mxu0 0.0
      %1477 = vmatprep.subr.mxu0 0.0
      %1478 = vmatpush1.msra.mxu0 0.0
      %1479 = vmatprep.subr.mxu0 0.0
      %1480 = vmatpush1.msra.mxu0 0.0
      %1481 = vmatprep.subr.mxu0 0.0
      %1482 = vmatpush1.msra.mxu0 0.0
      %1483 = vmatprep.subr.mxu0 0.0
      %1484 = vmatpush1.msra.mxu0 0.0
      %1485 = vmatprep.subr.mxu0 0.0
      %1486 = vmatpush1.msra.mxu0 0.0
      %1487 = vmatprep.subr.mxu0 0.0
      %1488 = vmatpush1.msra.mxu0 0.0
      %1489 = vmatprep.subr.mxu0 0.0
      %1490 = vmatpush1.msra.mxu0 0.0
      %1491 = vmatprep.subr.mxu0 0.0
      %1492 = vmatpush1.msra.mxu0 0.0
      %1493 = vmatprep.subr.mxu0 0.0
      %1494 = vmatpush1.msra.mxu0 0.0
      %1495 = vmatprep.subr.mxu0 0.0
      %1496 = vmatpush1.msra.mxu0 0.0
      %1497 = vmatprep.mubr.f32.mxu0 0.0
      %1498 = vmatmul.mubr.f32.gmra.mrb[0].mxu0 %v1431
      %v1499 = vpop.f32.mrb[0].mxu0
      %v1500 = vadd.f32 0.0, %v1499
      %v1501 = vpop.f32.mrb[0].mxu0
      %v1502 = vadd.f32 0.0, %v1501
      %1503 = vdwg.mxu0
      %1504 = vmatprep.subr.mxu0 %v500
      %1505 = vmatpush1.msra.mxu0 %v498
      %1506 = vmatprep.subr.mxu0 0.0
      %1507 = vmatpush1.msra.mxu0 0.0
      %1508 = vmatprep.subr.mxu0 0.0
      %1509 = vmatpush1.msra.mxu0 0.0
      %1510 = vmatprep.subr.mxu0 0.0
      %1511 = vmatpush1.msra.mxu0 0.0
      %1512 = vmatprep.subr.mxu0 0.0
      %1513 = vmatpush1.msra.mxu0 0.0
      %1514 = vmatprep.subr.mxu0 0.0
      %1515 = vmatpush1.msra.mxu0 0.0
      %1516 = vmatprep.subr.mxu0 0.0
      %1517 = vmatpush1.msra.mxu0 0.0
      %1518 = vmatprep.subr.mxu0 0.0
      %1519 = vmatpush1.msra.mxu0 0.0
      %1520 = vmatprep.subr.mxu0 0.0
      %1521 = vmatpush1.msra.mxu0 0.0
      %1522 = vmatprep.subr.mxu0 0.0
      %1523 = vmatpush1.msra.mxu0 0.0
      %1524 = vmatprep.subr.mxu0 0.0
      %1525 = vmatpush1.msra.mxu0 0.0
      %1526 = vmatprep.subr.mxu0 0.0
      %1527 = vmatpush1.msra.mxu0 0.0
      %1528 = vmatprep.subr.mxu0 0.0
      %1529 = vmatpush1.msra.mxu0 0.0
      %1530 = vmatprep.subr.mxu0 0.0
      %1531 = vmatpush1.msra.mxu0 0.0
      %1532 = vmatprep.subr.mxu0 0.0
      %1533 = vmatpush1.msra.mxu0 0.0
      %1534 = vmatprep.subr.mxu0 0.0
      %1535 = vmatpush1.msra.mxu0 0.0
      %1536 = vmatprep.subr.mxu0 0.0
      %1537 = vmatpush1.msra.mxu0 0.0
      %1538 = vmatprep.subr.mxu0 0.0
      %1539 = vmatpush1.msra.mxu0 0.0
      %1540 = vmatprep.subr.mxu0 0.0
      %1541 = vmatpush1.msra.mxu0 0.0
      %1542 = vmatprep.subr.mxu0 0.0
      %1543 = vmatpush1.msra.mxu0 0.0
      %1544 = vmatprep.subr.mxu0 0.0
      %1545 = vmatpush1.msra.mxu0 0.0
      %1546 = vmatprep.subr.mxu0 0.0
      %1547 = vmatpush1.msra.mxu0 0.0
      %1548 = vmatprep.subr.mxu0 0.0
      %1549 = vmatpush1.msra.mxu0 0.0
      %1550 = vmatprep.subr.mxu0 0.0
      %1551 = vmatpush1.msra.mxu0 0.0
      %1552 = vmatprep.subr.mxu0 0.0
      %1553 = vmatpush1.msra.mxu0 0.0
      %1554 = vmatprep.subr.mxu0 0.0
      %1555 = vmatpush1.msra.mxu0 0.0
      %1556 = vmatprep.subr.mxu0 0.0
      %1557 = vmatpush1.msra.mxu0 0.0
      %1558 = vmatprep.subr.mxu0 0.0
      %1559 = vmatpush1.msra.mxu0 0.0
      %1560 = vmatprep.subr.mxu0 0.0
      %1561 = vmatpush1.msra.mxu0 0.0
      %1562 = vmatprep.subr.mxu0 0.0
      %1563 = vmatpush1.msra.mxu0 0.0
      %1564 = vmatprep.subr.mxu0 0.0
      %1565 = vmatpush1.msra.mxu0 0.0
      %1566 = vmatprep.subr.mxu0 0.0
      %1567 = vmatpush1.msra.mxu0 0.0
      %1568 = vmatprep.mubr.f32.mxu0 0.0
      %1569 = vmatmul.mubr.f32.gmra.mrb[0].mxu0 %v1431
      %v1570 = vpop.f32.mrb[0].mxu0
      %v1571 = vadd.f32 0.0, %v1570
      %v1572 = vpop.f32.mrb[0].mxu0
      %v1573 = vadd.f32 0.0, %v1572
      %1574 = vdwg.mxu0
      %1575 = vmatprep.subr.mxu0 %v504
      %1576 = vmatpush1.msra.mxu0 %v502
      %1577 = vmatprep.subr.mxu0 0.0
      %1578 = vmatpush1.msra.mxu0 0.0
      %1579 = vmatprep.subr.mxu0 0.0
      %1580 = vmatpush1.msra.mxu0 0.0
      %1581 = vmatprep.subr.mxu0 0.0
      %1582 = vmatpush1.msra.mxu0 0.0
      %1583 = vmatprep.subr.mxu0 0.0
      %1584 = vmatpush1.msra.mxu0 0.0
      %1585 = vmatprep.subr.mxu0 0.0
      %1586 = vmatpush1.msra.mxu0 0.0
      %1587 = vmatprep.subr.mxu0 0.0
      %1588 = vmatpush1.msra.mxu0 0.0
      %1589 = vmatprep.subr.mxu0 0.0
      %1590 = vmatpush1.msra.mxu0 0.0
      %1591 = vmatprep.subr.mxu0 0.0
      %1592 = vmatpush1.msra.mxu0 0.0
      %1593 = vmatprep.subr.mxu0 0.0
      %1594 = vmatpush1.msra.mxu0 0.0
      %1595 = vmatprep.subr.mxu0 0.0
      %1596 = vmatpush1.msra.mxu0 0.0
      %1597 = vmatprep.subr.mxu0 0.0
      %1598 = vmatpush1.msra.mxu0 0.0
      %1599 = vmatprep.subr.mxu0 0.0
      %1600 = vmatpush1.msra.mxu0 0.0
      %1601 = vmatprep.subr.mxu0 0.0
      %1602 = vmatpush1.msra.mxu0 0.0
      %1603 = vmatprep.subr.mxu0 0.0
      %1604 = vmatpush1.msra.mxu0 0.0
      %1605 = vmatprep.subr.mxu0 0.0
      %1606 = vmatpush1.msra.mxu0 0.0
      %1607 = vmatprep.subr.mxu0 0.0
      %1608 = vmatpush1.msra.mxu0 0.0
      %1609 = vmatprep.subr.mxu0 0.0
      %1610 = vmatpush1.msra.mxu0 0.0
      %1611 = vmatprep.subr.mxu0 0.0
      %1612 = vmatpush1.msra.mxu0 0.0
      %1613 = vmatprep.subr.mxu0 0.0
      %1614 = vmatpush1.msra.mxu0 0.0
      %1615 = vmatprep.subr.mxu0 0.0
      %1616 = vmatpush1.msra.mxu0 0.0
      %1617 = vmatprep.subr.mxu0 0.0
      %1618 = vmatpush1.msra.mxu0 0.0
      %1619 = vmatprep.subr.mxu0 0.0
      %1620 = vmatpush1.msra.mxu0 0.0
      %1621 = vmatprep.subr.mxu0 0.0
      %1622 = vmatpush1.msra.mxu0 0.0
      %1623 = vmatprep.subr.mxu0 0.0
      %1624 = vmatpush1.msra.mxu0 0.0
      %1625 = vmatprep.subr.mxu0 0.0
      %1626 = vmatpush1.msra.mxu0 0.0
      %1627 = vmatprep.subr.mxu0 0.0
      %1628 = vmatpush1.msra.mxu0 0.0
      %1629 = vmatprep.subr.mxu0 0.0
      %1630 = vmatpush1.msra.mxu0 0.0
      %1631 = vmatprep.subr.mxu0 0.0
      %1632 = vmatpush1.msra.mxu0 0.0
      %1633 = vmatprep.subr.mxu0 0.0
      %1634 = vmatpush1.msra.mxu0 0.0
      %1635 = vmatprep.subr.mxu0 0.0
      %1636 = vmatpush1.msra.mxu0 0.0
      %1637 = vmatprep.subr.mxu0 0.0
      %1638 = vmatpush1.msra.mxu0 0.0
      %1639 = vmatprep.mubr.f32.mxu0 0.0
      %1640 = vmatmul.mubr.f32.gmra.mrb[0].mxu0 %v1431
      %v1641 = vpop.f32.mrb[0].mxu0
      %v1642 = vadd.f32 0.0, %v1641
      %v1643 = vpop.f32.mrb[0].mxu0
      %v1644 = vadd.f32 0.0, %v1643
      %1645 = vdwg.mxu0
      %1646 = vmatprep.subr.mxu0 %v508
      %1647 = vmatpush1.msra.mxu0 %v506
      %1648 = vmatprep.subr.mxu0 0.0
      %1649 = vmatpush1.msra.mxu0 0.0
      %1650 = vmatprep.subr.mxu0 0.0
      %1651 = vmatpush1.msra.mxu0 0.0
      %1652 = vmatprep.subr.mxu0 0.0
      %1653 = vmatpush1.msra.mxu0 0.0
      %1654 = vmatprep.subr.mxu0 0.0
      %1655 = vmatpush1.msra.mxu0 0.0
      %1656 = vmatprep.subr.mxu0 0.0
      %1657 = vmatpush1.msra.mxu0 0.0
      %1658 = vmatprep.subr.mxu0 0.0
      %1659 = vmatpush1.msra.mxu0 0.0
      %1660 = vmatprep.subr.mxu0 0.0
      %1661 = vmatpush1.msra.mxu0 0.0
      %1662 = vmatprep.subr.mxu0 0.0
      %1663 = vmatpush1.msra.mxu0 0.0
      %1664 = vmatprep.subr.mxu0 0.0
      %1665 = vmatpush1.msra.mxu0 0.0
      %1666 = vmatprep.subr.mxu0 0.0
      %1667 = vmatpush1.msra.mxu0 0.0
      %1668 = vmatprep.subr.mxu0 0.0
      %1669 = vmatpush1.msra.mxu0 0.0
      %1670 = vmatprep.subr.mxu0 0.0
      %1671 = vmatpush1.msra.mxu0 0.0
      %1672 = vmatprep.subr.mxu0 0.0
      %1673 = vmatpush1.msra.mxu0 0.0
      %1674 = vmatprep.subr.mxu0 0.0
      %1675 = vmatpush1.msra.mxu0 0.0
      %1676 = vmatprep.subr.mxu0 0.0
      %1677 = vmatpush1.msra.mxu0 0.0
      %1678 = vmatprep.subr.mxu0 0.0
      %1679 = vmatpush1.msra.mxu0 0.0
      %1680 = vmatprep.subr.mxu0 0.0
      %1681 = vmatpush1.msra.mxu0 0.0
      %1682 = vmatprep.subr.mxu0 0.0
      %1683 = vmatpush1.msra.mxu0 0.0
      %1684 = vmatprep.subr.mxu0 0.0
      %1685 = vmatpush1.msra.mxu0 0.0
      %1686 = vmatprep.subr.mxu0 0.0
      %1687 = vmatpush1.msra.mxu0 0.0
      %1688 = vmatprep.subr.mxu0 0.0
      %1689 = vmatpush1.msra.mxu0 0.0
      %1690 = vmatprep.subr.mxu0 0.0
      %1691 = vmatpush1.msra.mxu0 0.0
      %1692 = vmatprep.subr.mxu0 0.0
      %1693 = vmatpush1.msra.mxu0 0.0
      %1694 = vmatprep.subr.mxu0 0.0
      %1695 = vmatpush1.msra.mxu0 0.0
      %1696 = vmatprep.subr.mxu0 0.0
      %1697 = vmatpush1.msra.mxu0 0.0
      %1698 = vmatprep.subr.mxu0 0.0
      %1699 = vmatpush1.msra.mxu0 0.0
      %1700 = vmatprep.subr.mxu0 0.0
      %1701 = vmatpush1.msra.mxu0 0.0
      %1702 = vmatprep.subr.mxu0 0.0
      %1703 = vmatpush1.msra.mxu0 0.0
      %1704 = vmatprep.subr.mxu0 0.0
      %1705 = vmatpush1.msra.mxu0 0.0
      %1706 = vmatprep.subr.mxu0 0.0
      %1707 = vmatpush1.msra.mxu0 0.0
      %1708 = vmatprep.subr.mxu0 0.0
      %1709 = vmatpush1.msra.mxu0 0.0
      %1710 = vmatprep.mubr.f32.mxu0 0.0
      %1711 = vmatmul.mubr.f32.gmra.mrb[0].mxu0 %v1431
      %v1712 = vpop.f32.mrb[0].mxu0
      %v1713 = vadd.f32 0.0, %v1712
      %v1714 = vpop.f32.mrb[0].mxu0
      %v1715 = vadd.f32 0.0, %v1714
      %1716 = vdwg.mxu0
      %1717 = vmatprep.subr.mxu0 %v512
      %1718 = vmatpush1.msra.mxu0 %v510
      %1719 = vmatprep.subr.mxu0 0.0
      %1720 = vmatpush1.msra.mxu0 0.0
      %1721 = vmatprep.subr.mxu0 0.0
      %1722 = vmatpush1.msra.mxu0 0.0
      %1723 = vmatprep.subr.mxu0 0.0
      %1724 = vmatpush1.msra.mxu0 0.0
      %1725 = vmatprep.subr.mxu0 0.0
      %1726 = vmatpush1.msra.mxu0 0.0
      %1727 = vmatprep.subr.mxu0 0.0
      %1728 = vmatpush1.msra.mxu0 0.0
      %1729 = vmatprep.subr.mxu0 0.0
      %1730 = vmatpush1.msra.mxu0 0.0
      %1731 = vmatprep.subr.mxu0 0.0
      %1732 = vmatpush1.msra.mxu0 0.0
      %1733 = vmatprep.subr.mxu0 0.0
      %1734 = vmatpush1.msra.mxu0 0.0
      %1735 = vmatprep.subr.mxu0 0.0
      %1736 = vmatpush1.msra.mxu0 0.0
      %1737 = vmatprep.subr.mxu0 0.0
      %1738 = vmatpush1.msra.mxu0 0.0
      %1739 = vmatprep.subr.mxu0 0.0
      %1740 = vmatpush1.msra.mxu0 0.0
      %1741 = vmatprep.subr.mxu0 0.0
      %1742 = vmatpush1.msra.mxu0 0.0
      %1743 = vmatprep.subr.mxu0 0.0
      %1744 = vmatpush1.msra.mxu0 0.0
      %1745 = vmatprep.subr.mxu0 0.0
      %1746 = vmatpush1.msra.mxu0 0.0
      %1747 = vmatprep.subr.mxu0 0.0
      %1748 = vmatpush1.msra.mxu0 0.0
      %1749 = vmatprep.subr.mxu0 0.0
      %1750 = vmatpush1.msra.mxu0 0.0
      %1751 = vmatprep.subr.mxu0 0.0
      %1752 = vmatpush1.msra.mxu0 0.0
      %1753 = vmatprep.subr.mxu0 0.0
      %1754 = vmatpush1.msra.mxu0 0.0
      %1755 = vmatprep.subr.mxu0 0.0
      %1756 = vmatpush1.msra.mxu0 0.0
      %1757 = vmatprep.subr.mxu0 0.0
      %1758 = vmatpush1.msra.mxu0 0.0
      %1759 = vmatprep.subr.mxu0 0.0
      %1760 = vmatpush1.msra.mxu0 0.0
      %1761 = vmatprep.subr.mxu0 0.0
      %1762 = vmatpush1.msra.mxu0 0.0
      %1763 = vmatprep.subr.mxu0 0.0
      %1764 = vmatpush1.msra.mxu0 0.0
      %1765 = vmatprep.subr.mxu0 0.0
      %1766 = vmatpush1.msra.mxu0 0.0
      %1767 = vmatprep.subr.mxu0 0.0
      %1768 = vmatpush1.msra.mxu0 0.0
      %1769 = vmatprep.subr.mxu0 0.0
      %1770 = vmatpush1.msra.mxu0 0.0
      %1771 = vmatprep.subr.mxu0 0.0
      %1772 = vmatpush1.msra.mxu0 0.0
      %1773 = vmatprep.subr.mxu0 0.0
      %1774 = vmatpush1.msra.mxu0 0.0
      %1775 = vmatprep.subr.mxu0 0.0
      %1776 = vmatpush1.msra.mxu0 0.0
      %1777 = vmatprep.subr.mxu0 0.0
      %1778 = vmatpush1.msra.mxu0 0.0
      %1779 = vmatprep.subr.mxu0 0.0
      %1780 = vmatpush1.msra.mxu0 0.0
      %1781 = vmatprep.mubr.f32.mxu0 0.0
      %1782 = vmatmul.mubr.f32.gmra.mrb[0].mxu0 %v1431
      %v1783 = vpop.f32.mrb[0].mxu0
      %v1784 = vadd.f32 0.0, %v1783
      %v1785 = vpop.f32.mrb[0].mxu0
      %v1786 = vadd.f32 0.0, %v1785
      %1787 = vdwg.mxu0
      %1788 = vmatprep.subr.mxu0 %v516
      %1789 = vmatpush1.msra.mxu0 %v514
      %1790 = vmatprep.subr.mxu0 0.0
      %1791 = vmatpush1.msra.mxu0 0.0
      %1792 = vmatprep.subr.mxu0 0.0
      %1793 = vmatpush1.msra.mxu0 0.0
      %1794 = vmatprep.subr.mxu0 0.0
      %1795 = vmatpush1.msra.mxu0 0.0
      %1796 = vmatprep.subr.mxu0 0.0
      %1797 = vmatpush1.msra.mxu0 0.0
      %1798 = vmatprep.subr.mxu0 0.0
      %1799 = vmatpush1.msra.mxu0 0.0
      %1800 = vmatprep.subr.mxu0 0.0
      %1801 = vmatpush1.msra.mxu0 0.0
      %1802 = vmatprep.subr.mxu0 0.0
      %1803 = vmatpush1.msra.mxu0 0.0
      %1804 = vmatprep.subr.mxu0 0.0
      %1805 = vmatpush1.msra.mxu0 0.0
      %1806 = vmatprep.subr.mxu0 0.0
      %1807 = vmatpush1.msra.mxu0 0.0
      %1808 = vmatprep.subr.mxu0 0.0
      %1809 = vmatpush1.msra.mxu0 0.0
      %1810 = vmatprep.subr.mxu0 0.0
      %1811 = vmatpush1.msra.mxu0 0.0
      %1812 = vmatprep.subr.mxu0 0.0
      %1813 = vmatpush1.msra.mxu0 0.0
      %1814 = vmatprep.subr.mxu0 0.0
      %1815 = vmatpush1.msra.mxu0 0.0
      %1816 = vmatprep.subr.mxu0 0.0
      %1817 = vmatpush1.msra.mxu0 0.0
      %1818 = vmatprep.subr.mxu0 0.0
      %1819 = vmatpush1.msra.mxu0 0.0
      %1820 = vmatprep.subr.mxu0 0.0
      %1821 = vmatpush1.msra.mxu0 0.0
      %1822 = vmatprep.subr.mxu0 0.0
      %1823 = vmatpush1.msra.mxu0 0.0
      %1824 = vmatprep.subr.mxu0 0.0
      %1825 = vmatpush1.msra.mxu0 0.0
      %1826 = vmatprep.subr.mxu0 0.0
      %1827 = vmatpush1.msra.mxu0 0.0
      %1828 = vmatprep.subr.mxu0 0.0
      %1829 = vmatpush1.msra.mxu0 0.0
      %1830 = vmatprep.subr.mxu0 0.0
      %1831 = vmatpush1.msra.mxu0 0.0
      %1832 = vmatprep.subr.mxu0 0.0
      %1833 = vmatpush1.msra.mxu0 0.0
      %1834 = vmatprep.subr.mxu0 0.0
      %1835 = vmatpush1.msra.mxu0 0.0
      %1836 = vmatprep.subr.mxu0 0.0
      %1837 = vmatpush1.msra.mxu0 0.0
      %1838 = vmatprep.subr.mxu0 0.0
      %1839 = vmatpush1.msra.mxu0 0.0
      %1840 = vmatprep.subr.mxu0 0.0
      %1841 = vmatpush1.msra.mxu0 0.0
      %1842 = vmatprep.subr.mxu0 0.0
      %1843 = vmatpush1.msra.mxu0 0.0
      %1844 = vmatprep.subr.mxu0 0.0
      %1845 = vmatpush1.msra.mxu0 0.0
      %1846 = vmatprep.subr.mxu0 0.0
      %1847 = vmatpush1.msra.mxu0 0.0
      %1848 = vmatprep.subr.mxu0 0.0
      %1849 = vmatpush1.msra.mxu0 0.0
      %1850 = vmatprep.subr.mxu0 0.0
      %1851 = vmatpush1.msra.mxu0 0.0
      %1852 = vmatprep.mubr.f32.mxu0 0.0
      %1853 = vmatmul.mubr.f32.gmra.mrb[0].mxu0 %v1431
      %v1854 = vpop.f32.mrb[0].mxu0
      %v1855 = vadd.f32 0.0, %v1854
      %v1856 = vpop.f32.mrb[0].mxu0
      %v1857 = vadd.f32 0.0, %v1856
      %1858 = vdwg.mxu0
      %1859 = vmatprep.subr.mxu0 %v520
      %1860 = vmatpush1.msra.mxu0 %v518
      %1861 = vmatprep.subr.mxu0 0.0
      %1862 = vmatpush1.msra.mxu0 0.0
      %1863 = vmatprep.subr.mxu0 0.0
      %1864 = vmatpush1.msra.mxu0 0.0
      %1865 = vmatprep.subr.mxu0 0.0
      %1866 = vmatpush1.msra.mxu0 0.0
      %1867 = vmatprep.subr.mxu0 0.0
      %1868 = vmatpush1.msra.mxu0 0.0
      %1869 = vmatprep.subr.mxu0 0.0
      %1870 = vmatpush1.msra.mxu0 0.0
      %1871 = vmatprep.subr.mxu0 0.0
      %1872 = vmatpush1.msra.mxu0 0.0
      %1873 = vmatprep.subr.mxu0 0.0
      %1874 = vmatpush1.msra.mxu0 0.0
      %1875 = vmatprep.subr.mxu0 0.0
      %1876 = vmatpush1.msra.mxu0 0.0
      %1877 = vmatprep.subr.mxu0 0.0
      %1878 = vmatpush1.msra.mxu0 0.0
      %1879 = vmatprep.subr.mxu0 0.0
      %1880 = vmatpush1.msra.mxu0 0.0
      %1881 = vmatprep.subr.mxu0 0.0
      %1882 = vmatpush1.msra.mxu0 0.0
      %1883 = vmatprep.subr.mxu0 0.0
      %1884 = vmatpush1.msra.mxu0 0.0
      %1885 = vmatprep.subr.mxu0 0.0
      %1886 = vmatpush1.msra.mxu0 0.0
      %1887 = vmatprep.subr.mxu0 0.0
      %1888 = vmatpush1.msra.mxu0 0.0
      %1889 = vmatprep.subr.mxu0 0.0
      %1890 = vmatpush1.msra.mxu0 0.0
      %1891 = vmatprep.subr.mxu0 0.0
      %1892 = vmatpush1.msra.mxu0 0.0
      %1893 = vmatprep.subr.mxu0 0.0
      %1894 = vmatpush1.msra.mxu0 0.0
      %1895 = vmatprep.subr.mxu0 0.0
      %1896 = vmatpush1.msra.mxu0 0.0
      %1897 = vmatprep.subr.mxu0 0.0
      %1898 = vmatpush1.msra.mxu0 0.0
      %1899 = vmatprep.subr.mxu0 0.0
      %1900 = vmatpush1.msra.mxu0 0.0
      %1901 = vmatprep.subr.mxu0 0.0
      %1902 = vmatpush1.msra.mxu0 0.0
      %1903 = vmatprep.subr.mxu0 0.0
      %1904 = vmatpush1.msra.mxu0 0.0
      %1905 = vmatprep.subr.mxu0 0.0
      %1906 = vmatpush1.msra.mxu0 0.0
      %1907 = vmatprep.subr.mxu0 0.0
      %1908 = vmatpush1.msra.mxu0 0.0
      %1909 = vmatprep.subr.mxu0 0.0
      %1910 = vmatpush1.msra.mxu0 0.0
      %1911 = vmatprep.subr.mxu0 0.0
      %1912 = vmatpush1.msra.mxu0 0.0
      %1913 = vmatprep.subr.mxu0 0.0
      %1914 = vmatpush1.msra.mxu0 0.0
      %1915 = vmatprep.subr.mxu0 0.0
      %1916 = vmatpush1.msra.mxu0 0.0
      %1917 = vmatprep.subr.mxu0 0.0
      %1918 = vmatpush1.msra.mxu0 0.0
      %1919 = vmatprep.subr.mxu0 0.0
      %1920 = vmatpush1.msra.mxu0 0.0
      %1921 = vmatprep.subr.mxu0 0.0
      %1922 = vmatpush1.msra.mxu0 0.0
      %1923 = vmatprep.mubr.f32.mxu0 0.0
      %1924 = vmatmul.mubr.f32.gmra.mrb[0].mxu0 %v1431
      %v1925 = vpop.f32.mrb[0].mxu0
      %v1926 = vadd.f32 0.0, %v1925
      %v1927 = vpop.f32.mrb[0].mxu0
      %v1928 = vadd.f32 0.0, %v1927
      %1929 = vdwg.mxu0
      %1930 = vmatprep.subr.mxu0 %v524
      %1931 = vmatpush1.msra.mxu0 %v522
      %1932 = vmatprep.subr.mxu0 0.0
      %1933 = vmatpush1.msra.mxu0 0.0
      %1934 = vmatprep.subr.mxu0 0.0
      %1935 = vmatpush1.msra.mxu0 0.0
      %1936 = vmatprep.subr.mxu0 0.0
      %1937 = vmatpush1.msra.mxu0 0.0
      %1938 = vmatprep.subr.mxu0 0.0
      %1939 = vmatpush1.msra.mxu0 0.0
      %1940 = vmatprep.subr.mxu0 0.0
      %1941 = vmatpush1.msra.mxu0 0.0
      %1942 = vmatprep.subr.mxu0 0.0
      %1943 = vmatpush1.msra.mxu0 0.0
      %1944 = vmatprep.subr.mxu0 0.0
      %1945 = vmatpush1.msra.mxu0 0.0
      %1946 = vmatprep.subr.mxu0 0.0
      %1947 = vmatpush1.msra.mxu0 0.0
      %1948 = vmatprep.subr.mxu0 0.0
      %1949 = vmatpush1.msra.mxu0 0.0
      %1950 = vmatprep.subr.mxu0 0.0
      %1951 = vmatpush1.msra.mxu0 0.0
      %1952 = vmatprep.subr.mxu0 0.0
      %1953 = vmatpush1.msra.mxu0 0.0
      %1954 = vmatprep.subr.mxu0 0.0
      %1955 = vmatpush1.msra.mxu0 0.0
      %1956 = vmatprep.subr.mxu0 0.0
      %1957 = vmatpush1.msra.mxu0 0.0
      %1958 = vmatprep.subr.mxu0 0.0
      %1959 = vmatpush1.msra.mxu0 0.0
      %1960 = vmatprep.subr.mxu0 0.0
      %1961 = vmatpush1.msra.mxu0 0.0
      %1962 = vmatprep.subr.mxu0 0.0
      %1963 = vmatpush1.msra.mxu0 0.0
      %1964 = vmatprep.subr.mxu0 0.0
      %1965 = vmatpush1.msra.mxu0 0.0
      %1966 = vmatprep.subr.mxu0 0.0
      %1967 = vmatpush1.msra.mxu0 0.0
      %1968 = vmatprep.subr.mxu0 0.0
      %1969 = vmatpush1.msra.mxu0 0.0
      %1970 = vmatprep.subr.mxu0 0.0
      %1971 = vmatpush1.msra.mxu0 0.0
      %1972 = vmatprep.subr.mxu0 0.0
      %1973 = vmatpush1.msra.mxu0 0.0
      %1974 = vmatprep.subr.mxu0 0.0
      %1975 = vmatpush1.msra.mxu0 0.0
      %1976 = vmatprep.subr.mxu0 0.0
      %1977 = vmatpush1.msra.mxu0 0.0
      %1978 = vmatprep.subr.mxu0 0.0
      %1979 = vmatpush1.msra.mxu0 0.0
      %1980 = vmatprep.subr.mxu0 0.0
      %1981 = vmatpush1.msra.mxu0 0.0
      %1982 = vmatprep.subr.mxu0 0.0
      %1983 = vmatpush1.msra.mxu0 0.0
      %1984 = vmatprep.subr.mxu0 0.0
      %1985 = vmatpush1.msra.mxu0 0.0
      %1986 = vmatprep.subr.mxu0 0.0
      %1987 = vmatpush1.msra.mxu0 0.0
      %1988 = vmatprep.subr.mxu0 0.0
      %1989 = vmatpush1.msra.mxu0 0.0
      %1990 = vmatprep.subr.mxu0 0.0
      %1991 = vmatpush1.msra.mxu0 0.0
      %1992 = vmatprep.subr.mxu0 0.0
      %1993 = vmatpush1.msra.mxu0 0.0
      %1994 = vmatprep.mubr.f32.mxu0 0.0
      %1995 = vmatmul.mubr.f32.gmra.mrb[0].mxu0 %v1431
      %v1996 = vpop.f32.mrb[0].mxu0
      %v1997 = vadd.f32 0.0, %v1996
      %v1998 = vpop.f32.mrb[0].mxu0
      %v1999 = vadd.f32 0.0, %v1998
      %2000 = vdwg.mxu0
      %vm2001 = vcmask 392192
      %v2003 = vsel %vm2001, %v417, 0
      %2005 = vmatprep.subr.mxu0 %v1335
      %2006 = vmatpush1.msra.mxu0 %v1334
      %2007 = vmatprep.subr.mxu0 %v1351
      %2008 = vmatpush1.msra.mxu0 %v1350
      %2009 = vmatprep.subr.mxu0 %v1367
      %2010 = vmatpush1.msra.mxu0 %v1366
      %2011 = vmatprep.subr.mxu0 %v1383
      %2012 = vmatpush1.msra.mxu0 %v1382
      %2013 = vmatprep.subr.mxu0 %v1399
      %2014 = vmatpush1.msra.mxu0 %v1398
      %2015 = vmatprep.subr.mxu0 %v1415
      %2016 = vmatpush1.msra.mxu0 %v1414
      %2017 = vmatprep.subr.mxu0 0.0
      %2018 = vmatpush1.msra.mxu0 0.0
      %2019 = vmatprep.subr.mxu0 0.0
      %2020 = vmatpush1.msra.mxu0 0.0
      %2021 = vmatprep.subr.mxu0 0.0
      %2022 = vmatpush1.msra.mxu0 0.0
      %2023 = vmatprep.subr.mxu0 0.0
      %2024 = vmatpush1.msra.mxu0 0.0
      %2025 = vmatprep.subr.mxu0 0.0
      %2026 = vmatpush1.msra.mxu0 0.0
      %2027 = vmatprep.subr.mxu0 0.0
      %2028 = vmatpush1.msra.mxu0 0.0
      %2029 = vmatprep.subr.mxu0 0.0
      %2030 = vmatpush1.msra.mxu0 0.0
      %2031 = vmatprep.subr.mxu0 0.0
      %2032 = vmatpush1.msra.mxu0 0.0
      %2033 = vmatprep.subr.mxu0 0.0
      %2034 = vmatpush1.msra.mxu0 0.0
      %2035 = vmatprep.subr.mxu0 0.0
      %2036 = vmatpush1.msra.mxu0 0.0
      %2037 = vmatprep.subr.mxu0 0.0
      %2038 = vmatpush1.msra.mxu0 0.0
      %2039 = vmatprep.subr.mxu0 0.0
      %2040 = vmatpush1.msra.mxu0 0.0
      %2041 = vmatprep.subr.mxu0 0.0
      %2042 = vmatpush1.msra.mxu0 0.0
      %2043 = vmatprep.subr.mxu0 0.0
      %2044 = vmatpush1.msra.mxu0 0.0
      %2045 = vmatprep.subr.mxu0 0.0
      %2046 = vmatpush1.msra.mxu0 0.0
      %2047 = vmatprep.subr.mxu0 0.0
      %2048 = vmatpush1.msra.mxu0 0.0
      %2049 = vmatprep.subr.mxu0 0.0
      %2050 = vmatpush1.msra.mxu0 0.0
      %2051 = vmatprep.subr.mxu0 0.0
      %2052 = vmatpush1.msra.mxu0 0.0
      %2053 = vmatprep.subr.mxu0 0.0
      %2054 = vmatpush1.msra.mxu0 0.0
      %2055 = vmatprep.subr.mxu0 0.0
      %2056 = vmatpush1.msra.mxu0 0.0
      %2057 = vmatprep.subr.mxu0 0.0
      %2058 = vmatpush1.msra.mxu0 0.0
      %2059 = vmatprep.subr.mxu0 0.0
      %2060 = vmatpush1.msra.mxu0 0.0
      %2061 = vmatprep.subr.mxu0 0.0
      %2062 = vmatpush1.msra.mxu0 0.0
      %2063 = vmatprep.subr.mxu0 0.0
      %2064 = vmatpush1.msra.mxu0 0.0
      %2065 = vmatprep.subr.mxu0 0.0
      %2066 = vmatpush1.msra.mxu0 0.0
      %2067 = vmatprep.subr.mxu0 0.0
      %2068 = vmatpush1.msra.mxu0 0.0
      %2069 = vmatprep.mubr.f32.mxu0 0.0
      %2070 = vmatmul.mubr.f32.gmra.mrb[0].mxu0 %v2003
      %v2071 = vpop.f32.mrb[0].mxu0
      %v2072 = vadd.f32 %v1500, %v2071
      %v2073 = vpop.f32.mrb[0].mxu0
      %v2074 = vadd.f32 %v1502, %v2073
      %2075 = vdwg.mxu0
      %2076 = vmatprep.subr.mxu0 %v1337
      %2077 = vmatpush1.msra.mxu0 %v1336
      %2078 = vmatprep.subr.mxu0 %v1353
      %2079 = vmatpush1.msra.mxu0 %v1352
      %2080 = vmatprep.subr.mxu0 %v1369
      %2081 = vmatpush1.msra.mxu0 %v1368
      %2082 = vmatprep.subr.mxu0 %v1385
      %2083 = vmatpush1.msra.mxu0 %v1384
      %2084 = vmatprep.subr.mxu0 %v1401
      %2085 = vmatpush1.msra.mxu0 %v1400
      %2086 = vmatprep.subr.mxu0 %v1417
      %2087 = vmatpush1.msra.mxu0 %v1416
      %2088 = vmatprep.subr.mxu0 0.0
      %2089 = vmatpush1.msra.mxu0 0.0
      %2090 = vmatprep.subr.mxu0 0.0
      %2091 = vmatpush1.msra.mxu0 0.0
      %2092 = vmatprep.subr.mxu0 0.0
      %2093 = vmatpush1.msra.mxu0 0.0
      %2094 = vmatprep.subr.mxu0 0.0
      %2095 = vmatpush1.msra.mxu0 0.0
      %2096 = vmatprep.subr.mxu0 0.0
      %2097 = vmatpush1.msra.mxu0 0.0
      %2098 = vmatprep.subr.mxu0 0.0
      %2099 = vmatpush1.msra.mxu0 0.0
      %2100 = vmatprep.subr.mxu0 0.0
      %2101 = vmatpush1.msra.mxu0 0.0
      %2102 = vmatprep.subr.mxu0 0.0
      %2103 = vmatpush1.msra.mxu0 0.0
      %2104 = vmatprep.subr.mxu0 0.0
      %2105 = vmatpush1.msra.mxu0 0.0
      %2106 = vmatprep.subr.mxu0 0.0
      %2107 = vmatpush1.msra.mxu0 0.0
      %2108 = vmatprep.subr.mxu0 0.0
      %2109 = vmatpush1.msra.mxu0 0.0
      %2110 = vmatprep.subr.mxu0 0.0
      %2111 = vmatpush1.msra.mxu0 0.0
      %2112 = vmatprep.subr.mxu0 0.0
      %2113 = vmatpush1.msra.mxu0 0.0
      %2114 = vmatprep.subr.mxu0 0.0
      %2115 = vmatpush1.msra.mxu0 0.0
      %2116 = vmatprep.subr.mxu0 0.0
      %2117 = vmatpush1.msra.mxu0 0.0
      %2118 = vmatprep.subr.mxu0 0.0
      %2119 = vmatpush1.msra.mxu0 0.0
      %2120 = vmatprep.subr.mxu0 0.0
      %2121 = vmatpush1.msra.mxu0 0.0
      %2122 = vmatprep.subr.mxu0 0.0
      %2123 = vmatpush1.msra.mxu0 0.0
      %2124 = vmatprep.subr.mxu0 0.0
      %2125 = vmatpush1.msra.mxu0 0.0
      %2126 = vmatprep.subr.mxu0 0.0
      %2127 = vmatpush1.msra.mxu0 0.0
      %2128 = vmatprep.subr.mxu0 0.0
      %2129 = vmatpush1.msra.mxu0 0.0
      %2130 = vmatprep.subr.mxu0 0.0
      %2131 = vmatpush1.msra.mxu0 0.0
      %2132 = vmatprep.subr.mxu0 0.0
      %2133 = vmatpush1.msra.mxu0 0.0
      %2134 = vmatprep.subr.mxu0 0.0
      %2135 = vmatpush1.msra.mxu0 0.0
      %2136 = vmatprep.subr.mxu0 0.0
      %2137 = vmatpush1.msra.mxu0 0.0
      %2138 = vmatprep.subr.mxu0 0.0
      %2139 = vmatpush1.msra.mxu0 0.0
      %2140 = vmatprep.mubr.f32.mxu0 0.0
      %2141 = vmatmul.mubr.f32.gmra.mrb[0].mxu0 %v2003
      %v2142 = vpop.f32.mrb[0].mxu0
      %v2143 = vadd.f32 %v1571, %v2142
      %v2144 = vpop.f32.mrb[0].mxu0
      %v2145 = vadd.f32 %v1573, %v2144
      %2146 = vdwg.mxu0
      %2147 = vmatprep.subr.mxu0 %v1339
      %2148 = vmatpush1.msra.mxu0 %v1338
      %2149 = vmatprep.subr.mxu0 %v1355
      %2150 = vmatpush1.msra.mxu0 %v1354
      %2151 = vmatprep.subr.mxu0 %v1371
      %2152 = vmatpush1.msra.mxu0 %v1370
      %2153 = vmatprep.subr.mxu0 %v1387
      %2154 = vmatpush1.msra.mxu0 %v1386
      %2155 = vmatprep.subr.mxu0 %v1403
      %2156 = vmatpush1.msra.mxu0 %v1402
      %2157 = vmatprep.subr.mxu0 %v1419
      %2158 = vmatpush1.msra.mxu0 %v1418
      %2159 = vmatprep.subr.mxu0 0.0
      %2160 = vmatpush1.msra.mxu0 0.0
      %2161 = vmatprep.subr.mxu0 0.0
      %2162 = vmatpush1.msra.mxu0 0.0
      %2163 = vmatprep.subr.mxu0 0.0
      %2164 = vmatpush1.msra.mxu0 0.0
      %2165 = vmatprep.subr.mxu0 0.0
      %2166 = vmatpush1.msra.mxu0 0.0
      %2167 = vmatprep.subr.mxu0 0.0
      %2168 = vmatpush1.msra.mxu0 0.0
      %2169 = vmatprep.subr.mxu0 0.0
      %2170 = vmatpush1.msra.mxu0 0.0
      %2171 = vmatprep.subr.mxu0 0.0
      %2172 = vmatpush1.msra.mxu0 0.0
      %2173 = vmatprep.subr.mxu0 0.0
      %2174 = vmatpush1.msra.mxu0 0.0
      %2175 = vmatprep.subr.mxu0 0.0
      %2176 = vmatpush1.msra.mxu0 0.0
      %2177 = vmatprep.subr.mxu0 0.0
      %2178 = vmatpush1.msra.mxu0 0.0
      %2179 = vmatprep.subr.mxu0 0.0
      %2180 = vmatpush1.msra.mxu0 0.0
      %2181 = vmatprep.subr.mxu0 0.0
      %2182 = vmatpush1.msra.mxu0 0.0
      %2183 = vmatprep.subr.mxu0 0.0
      %2184 = vmatpush1.msra.mxu0 0.0
      %2185 = vmatprep.subr.mxu0 0.0
      %2186 = vmatpush1.msra.mxu0 0.0
      %2187 = vmatprep.subr.mxu0 0.0
      %2188 = vmatpush1.msra.mxu0 0.0
      %2189 = vmatprep.subr.mxu0 0.0
      %2190 = vmatpush1.msra.mxu0 0.0
      %2191 = vmatprep.subr.mxu0 0.0
      %2192 = vmatpush1.msra.mxu0 0.0
      %2193 = vmatprep.subr.mxu0 0.0
      %2194 = vmatpush1.msra.mxu0 0.0
      %2195 = vmatprep.subr.mxu0 0.0
      %2196 = vmatpush1.msra.mxu0 0.0
      %2197 = vmatprep.subr.mxu0 0.0
      %2198 = vmatpush1.msra.mxu0 0.0
      %2199 = vmatprep.subr.mxu0 0.0
      %2200 = vmatpush1.msra.mxu0 0.0
      %2201 = vmatprep.subr.mxu0 0.0
      %2202 = vmatpush1.msra.mxu0 0.0
      %2203 = vmatprep.subr.mxu0 0.0
      %2204 = vmatpush1.msra.mxu0 0.0
      %2205 = vmatprep.subr.mxu0 0.0
      %2206 = vmatpush1.msra.mxu0 0.0
      %2207 = vmatprep.subr.mxu0 0.0
      %2208 = vmatpush1.msra.mxu0 0.0
      %2209 = vmatprep.subr.mxu0 0.0
      %2210 = vmatpush1.msra.mxu0 0.0
      %2211 = vmatprep.mubr.f32.mxu0 0.0
      %2212 = vmatmul.mubr.f32.gmra.mrb[0].mxu0 %v2003
      %v2213 = vpop.f32.mrb[0].mxu0
      %v2214 = vadd.f32 %v1642, %v2213
      %v2215 = vpop.f32.mrb[0].mxu0
      %v2216 = vadd.f32 %v1644, %v2215
      %2217 = vdwg.mxu0
      %2218 = vmatprep.subr.mxu0 %v1341
      %2219 = vmatpush1.msra.mxu0 %v1340
      %2220 = vmatprep.subr.mxu0 %v1357
      %2221 = vmatpush1.msra.mxu0 %v1356
      %2222 = vmatprep.subr.mxu0 %v1373
      %2223 = vmatpush1.msra.mxu0 %v1372
      %2224 = vmatprep.subr.mxu0 %v1389
      %2225 = vmatpush1.msra.mxu0 %v1388
      %2226 = vmatprep.subr.mxu0 %v1405
      %2227 = vmatpush1.msra.mxu0 %v1404
      %2228 = vmatprep.subr.mxu0 %v1421
      %2229 = vmatpush1.msra.mxu0 %v1420
      %2230 = vmatprep.subr.mxu0 0.0
      %2231 = vmatpush1.msra.mxu0 0.0
      %2232 = vmatprep.subr.mxu0 0.0
      %2233 = vmatpush1.msra.mxu0 0.0
      %2234 = vmatprep.subr.mxu0 0.0
      %2235 = vmatpush1.msra.mxu0 0.0
      %2236 = vmatprep.subr.mxu0 0.0
      %2237 = vmatpush1.msra.mxu0 0.0
      %2238 = vmatprep.subr.mxu0 0.0
      %2239 = vmatpush1.msra.mxu0 0.0
      %2240 = vmatprep.subr.mxu0 0.0
      %2241 = vmatpush1.msra.mxu0 0.0
      %2242 = vmatprep.subr.mxu0 0.0
      %2243 = vmatpush1.msra.mxu0 0.0
      %2244 = vmatprep.subr.mxu0 0.0
      %2245 = vmatpush1.msra.mxu0 0.0
      %2246 = vmatprep.subr.mxu0 0.0
      %2247 = vmatpush1.msra.mxu0 0.0
      %2248 = vmatprep.subr.mxu0 0.0
      %2249 = vmatpush1.msra.mxu0 0.0
      %2250 = vmatprep.subr.mxu0 0.0
      %2251 = vmatpush1.msra.mxu0 0.0
      %2252 = vmatprep.subr.mxu0 0.0
      %2253 = vmatpush1.msra.mxu0 0.0
      %2254 = vmatprep.subr.mxu0 0.0
      %2255 = vmatpush1.msra.mxu0 0.0
      %2256 = vmatprep.subr.mxu0 0.0
      %2257 = vmatpush1.msra.mxu0 0.0
      %2258 = vmatprep.subr.mxu0 0.0
      %2259 = vmatpush1.msra.mxu0 0.0
      %2260 = vmatprep.subr.mxu0 0.0
      %2261 = vmatpush1.msra.mxu0 0.0
      %2262 = vmatprep.subr.mxu0 0.0
      %2263 = vmatpush1.msra.mxu0 0.0
      %2264 = vmatprep.subr.mxu0 0.0
      %2265 = vmatpush1.msra.mxu0 0.0
      %2266 = vmatprep.subr.mxu0 0.0
      %2267 = vmatpush1.msra.mxu0 0.0
      %2268 = vmatprep.subr.mxu0 0.0
      %2269 = vmatpush1.msra.mxu0 0.0
      %2270 = vmatprep.subr.mxu0 0.0
      %2271 = vmatpush1.msra.mxu0 0.0
      %2272 = vmatprep.subr.mxu0 0.0
      %2273 = vmatpush1.msra.mxu0 0.0
      %2274 = vmatprep.subr.mxu0 0.0
      %2275 = vmatpush1.msra.mxu0 0.0
      %2276 = vmatprep.subr.mxu0 0.0
      %2277 = vmatpush1.msra.mxu0 0.0
      %2278 = vmatprep.subr.mxu0 0.0
      %2279 = vmatpush1.msra.mxu0 0.0
      %2280 = vmatprep.subr.mxu0 0.0
      %2281 = vmatpush1.msra.mxu0 0.0
      %2282 = vmatprep.mubr.f32.mxu0 0.0
      %2283 = vmatmul.mubr.f32.gmra.mrb[0].mxu0 %v2003
      %v2284 = vpop.f32.mrb[0].mxu0
      %v2285 = vadd.f32 %v1713, %v2284
      %v2286 = vpop.f32.mrb[0].mxu0
      %v2287 = vadd.f32 %v1715, %v2286
      %2288 = vdwg.mxu0
      %2289 = vmatprep.subr.mxu0 %v1343
      %2290 = vmatpush1.msra.mxu0 %v1342
      %2291 = vmatprep.subr.mxu0 %v1359
      %2292 = vmatpush1.msra.mxu0 %v1358
      %2293 = vmatprep.subr.mxu0 %v1375
      %2294 = vmatpush1.msra.mxu0 %v1374
      %2295 = vmatprep.subr.mxu0 %v1391
      %2296 = vmatpush1.msra.mxu0 %v1390
      %2297 = vmatprep.subr.mxu0 %v1407
      %2298 = vmatpush1.msra.mxu0 %v1406
      %2299 = vmatprep.subr.mxu0 %v1423
      %2300 = vmatpush1.msra.mxu0 %v1422
      %2301 = vmatprep.subr.mxu0 0.0
      %2302 = vmatpush1.msra.mxu0 0.0
      %2303 = vmatprep.subr.mxu0 0.0
      %2304 = vmatpush1.msra.mxu0 0.0
      %2305 = vmatprep.subr.mxu0 0.0
      %2306 = vmatpush1.msra.mxu0 0.0
      %2307 = vmatprep.subr.mxu0 0.0
      %2308 = vmatpush1.msra.mxu0 0.0
      %2309 = vmatprep.subr.mxu0 0.0
      %2310 = vmatpush1.msra.mxu0 0.0
      %2311 = vmatprep.subr.mxu0 0.0
      %2312 = vmatpush1.msra.mxu0 0.0
      %2313 = vmatprep.subr.mxu0 0.0
      %2314 = vmatpush1.msra.mxu0 0.0
      %2315 = vmatprep.subr.mxu0 0.0
      %2316 = vmatpush1.msra.mxu0 0.0
      %2317 = vmatprep.subr.mxu0 0.0
      %2318 = vmatpush1.msra.mxu0 0.0
      %2319 = vmatprep.subr.mxu0 0.0
      %2320 = vmatpush1.msra.mxu0 0.0
      %2321 = vmatprep.subr.mxu0 0.0
      %2322 = vmatpush1.msra.mxu0 0.0
      %2323 = vmatprep.subr.mxu0 0.0
      %2324 = vmatpush1.msra.mxu0 0.0
      %2325 = vmatprep.subr.mxu0 0.0
      %2326 = vmatpush1.msra.mxu0 0.0
      %2327 = vmatprep.subr.mxu0 0.0
      %2328 = vmatpush1.msra.mxu0 0.0
      %2329 = vmatprep.subr.mxu0 0.0
      %2330 = vmatpush1.msra.mxu0 0.0
      %2331 = vmatprep.subr.mxu0 0.0
      %2332 = vmatpush1.msra.mxu0 0.0
      %2333 = vmatprep.subr.mxu0 0.0
      %2334 = vmatpush1.msra.mxu0 0.0
      %2335 = vmatprep.subr.mxu0 0.0
      %2336 = vmatpush1.msra.mxu0 0.0
      %2337 = vmatprep.subr.mxu0 0.0
      %2338 = vmatpush1.msra.mxu0 0.0
      %2339 = vmatprep.subr.mxu0 0.0
      %2340 = vmatpush1.msra.mxu0 0.0
      %2341 = vmatprep.subr.mxu0 0.0
      %2342 = vmatpush1.msra.mxu0 0.0
      %2343 = vmatprep.subr.mxu0 0.0
      %2344 = vmatpush1.msra.mxu0 0.0
      %2345 = vmatprep.subr.mxu0 0.0
      %2346 = vmatpush1.msra.mxu0 0.0
      %2347 = vmatprep.subr.mxu0 0.0
      %2348 = vmatpush1.msra.mxu0 0.0
      %2349 = vmatprep.subr.mxu0 0.0
      %2350 = vmatpush1.msra.mxu0 0.0
      %2351 = vmatprep.subr.mxu0 0.0
      %2352 = vmatpush1.msra.mxu0 0.0
      %2353 = vmatprep.mubr.f32.mxu0 0.0
      %2354 = vmatmul.mubr.f32.gmra.mrb[0].mxu0 %v2003
      %v2355 = vpop.f32.mrb[0].mxu0
      %v2356 = vadd.f32 %v1784, %v2355
      %v2357 = vpop.f32.mrb[0].mxu0
      %v2358 = vadd.f32 %v1786, %v2357
      %2359 = vdwg.mxu0
      %2360 = vmatprep.subr.mxu0 %v1345
      %2361 = vmatpush1.msra.mxu0 %v1344
      %2362 = vmatprep.subr.mxu0 %v1361
      %2363 = vmatpush1.msra.mxu0 %v1360
      %2364 = vmatprep.subr.mxu0 %v1377
      %2365 = vmatpush1.msra.mxu0 %v1376
      %2366 = vmatprep.subr.mxu0 %v1393
      %2367 = vmatpush1.msra.mxu0 %v1392
      %2368 = vmatprep.subr.mxu0 %v1409
      %2369 = vmatpush1.msra.mxu0 %v1408
      %2370 = vmatprep.subr.mxu0 %v1425
      %2371 = vmatpush1.msra.mxu0 %v1424
      %2372 = vmatprep.subr.mxu0 0.0
      %2373 = vmatpush1.msra.mxu0 0.0
      %2374 = vmatprep.subr.mxu0 0.0
      %2375 = vmatpush1.msra.mxu0 0.0
      %2376 = vmatprep.subr.mxu0 0.0
      %2377 = vmatpush1.msra.mxu0 0.0
      %2378 = vmatprep.subr.mxu0 0.0
      %2379 = vmatpush1.msra.mxu0 0.0
      %2380 = vmatprep.subr.mxu0 0.0
      %2381 = vmatpush1.msra.mxu0 0.0
      %2382 = vmatprep.subr.mxu0 0.0
      %2383 = vmatpush1.msra.mxu0 0.0
      %2384 = vmatprep.subr.mxu0 0.0
      %2385 = vmatpush1.msra.mxu0 0.0
      %2386 = vmatprep.subr.mxu0 0.0
      %2387 = vmatpush1.msra.mxu0 0.0
      %2388 = vmatprep.subr.mxu0 0.0
      %2389 = vmatpush1.msra.mxu0 0.0
      %2390 = vmatprep.subr.mxu0 0.0
      %2391 = vmatpush1.msra.mxu0 0.0
      %2392 = vmatprep.subr.mxu0 0.0
      %2393 = vmatpush1.msra.mxu0 0.0
      %2394 = vmatprep.subr.mxu0 0.0
      %2395 = vmatpush1.msra.mxu0 0.0
      %2396 = vmatprep.subr.mxu0 0.0
      %2397 = vmatpush1.msra.mxu0 0.0
      %2398 = vmatprep.subr.mxu0 0.0
      %2399 = vmatpush1.msra.mxu0 0.0
      %2400 = vmatprep.subr.mxu0 0.0
      %2401 = vmatpush1.msra.mxu0 0.0
      %2402 = vmatprep.subr.mxu0 0.0
      %2403 = vmatpush1.msra.mxu0 0.0
      %2404 = vmatprep.subr.mxu0 0.0
      %2405 = vmatpush1.msra.mxu0 0.0
      %2406 = vmatprep.subr.mxu0 0.0
      %2407 = vmatpush1.msra.mxu0 0.0
      %2408 = vmatprep.subr.mxu0 0.0
      %2409 = vmatpush1.msra.mxu0 0.0
      %2410 = vmatprep.subr.mxu0 0.0
      %2411 = vmatpush1.msra.mxu0 0.0
      %2412 = vmatprep.subr.mxu0 0.0
      %2413 = vmatpush1.msra.mxu0 0.0
      %2414 = vmatprep.subr.mxu0 0.0
      %2415 = vmatpush1.msra.mxu0 0.0
      %2416 = vmatprep.subr.mxu0 0.0
      %2417 = vmatpush1.msra.mxu0 0.0
      %2418 = vmatprep.subr.mxu0 0.0
      %2419 = vmatpush1.msra.mxu0 0.0
      %2420 = vmatprep.subr.mxu0 0.0
      %2421 = vmatpush1.msra.mxu0 0.0
      %2422 = vmatprep.subr.mxu0 0.0
      %2423 = vmatpush1.msra.mxu0 0.0
      %2424 = vmatprep.mubr.f32.mxu0 0.0
      %2425 = vmatmul.mubr.f32.gmra.mrb[0].mxu0 %v2003
      %v2426 = vpop.f32.mrb[0].mxu0
      %v2427 = vadd.f32 %v1855, %v2426
      %v2428 = vpop.f32.mrb[0].mxu0
      %v2429 = vadd.f32 %v1857, %v2428
      %2430 = vdwg.mxu0
      %2431 = vmatprep.subr.mxu0 %v1347
      %2432 = vmatpush1.msra.mxu0 %v1346
      %2433 = vmatprep.subr.mxu0 %v1363
      %2434 = vmatpush1.msra.mxu0 %v1362
      %2435 = vmatprep.subr.mxu0 %v1379
      %2436 = vmatpush1.msra.mxu0 %v1378
      %2437 = vmatprep.subr.mxu0 %v1395
      %2438 = vmatpush1.msra.mxu0 %v1394
      %2439 = vmatprep.subr.mxu0 %v1411
      %2440 = vmatpush1.msra.mxu0 %v1410
      %2441 = vmatprep.subr.mxu0 %v1427
      %2442 = vmatpush1.msra.mxu0 %v1426
      %2443 = vmatprep.subr.mxu0 0.0
      %2444 = vmatpush1.msra.mxu0 0.0
      %2445 = vmatprep.subr.mxu0 0.0
      %2446 = vmatpush1.msra.mxu0 0.0
      %2447 = vmatprep.subr.mxu0 0.0
      %2448 = vmatpush1.msra.mxu0 0.0
      %2449 = vmatprep.subr.mxu0 0.0
      %2450 = vmatpush1.msra.mxu0 0.0
      %2451 = vmatprep.subr.mxu0 0.0
      %2452 = vmatpush1.msra.mxu0 0.0
      %2453 = vmatprep.subr.mxu0 0.0
      %2454 = vmatpush1.msra.mxu0 0.0
      %2455 = vmatprep.subr.mxu0 0.0
      %2456 = vmatpush1.msra.mxu0 0.0
      %2457 = vmatprep.subr.mxu0 0.0
      %2458 = vmatpush1.msra.mxu0 0.0
      %2459 = vmatprep.subr.mxu0 0.0
      %2460 = vmatpush1.msra.mxu0 0.0
      %2461 = vmatprep.subr.mxu0 0.0
      %2462 = vmatpush1.msra.mxu0 0.0
      %2463 = vmatprep.subr.mxu0 0.0
      %2464 = vmatpush1.msra.mxu0 0.0
      %2465 = vmatprep.subr.mxu0 0.0
      %2466 = vmatpush1.msra.mxu0 0.0
      %2467 = vmatprep.subr.mxu0 0.0
      %2468 = vmatpush1.msra.mxu0 0.0
      %2469 = vmatprep.subr.mxu0 0.0
      %2470 = vmatpush1.msra.mxu0 0.0
      %2471 = vmatprep.subr.mxu0 0.0
      %2472 = vmatpush1.msra.mxu0 0.0
      %2473 = vmatprep.subr.mxu0 0.0
      %2474 = vmatpush1.msra.mxu0 0.0
      %2475 = vmatprep.subr.mxu0 0.0
      %2476 = vmatpush1.msra.mxu0 0.0
      %2477 = vmatprep.subr.mxu0 0.0
      %2478 = vmatpush1.msra.mxu0 0.0
      %2479 = vmatprep.subr.mxu0 0.0
      %2480 = vmatpush1.msra.mxu0 0.0
      %2481 = vmatprep.subr.mxu0 0.0
      %2482 = vmatpush1.msra.mxu0 0.0
      %2483 = vmatprep.subr.mxu0 0.0
      %2484 = vmatpush1.msra.mxu0 0.0
      %2485 = vmatprep.subr.mxu0 0.0
      %2486 = vmatpush1.msra.mxu0 0.0
      %2487 = vmatprep.subr.mxu0 0.0
      %2488 = vmatpush1.msra.mxu0 0.0
      %2489 = vmatprep.subr.mxu0 0.0
      %2490 = vmatpush1.msra.mxu0 0.0
      %2491 = vmatprep.subr.mxu0 0.0
      %2492 = vmatpush1.msra.mxu0 0.0
      %2493 = vmatprep.subr.mxu0 0.0
      %2494 = vmatpush1.msra.mxu0 0.0
      %2495 = vmatprep.mubr.f32.mxu0 0.0
      %2496 = vmatmul.mubr.f32.gmra.mrb[0].mxu0 %v2003
      %v2497 = vpop.f32.mrb[0].mxu0
      %v2498 = vadd.f32 %v1926, %v2497
      %v2499 = vpop.f32.mrb[0].mxu0
      %v2500 = vadd.f32 %v1928, %v2499
      %2501 = vdwg.mxu0
      %2502 = vmatprep.subr.mxu0 %v1349
      %2503 = vmatpush1.msra.mxu0 %v1348
      %2504 = vmatprep.subr.mxu0 %v1365
      %2505 = vmatpush1.msra.mxu0 %v1364
      %2506 = vmatprep.subr.mxu0 %v1381
      %2507 = vmatpush1.msra.mxu0 %v1380
      %2508 = vmatprep.subr.mxu0 %v1397
      %2509 = vmatpush1.msra.mxu0 %v1396
      %2510 = vmatprep.subr.mxu0 %v1413
      %2511 = vmatpush1.msra.mxu0 %v1412
      %2512 = vmatprep.subr.mxu0 %v1429
      %2513 = vmatpush1.msra.mxu0 %v1428
      %2514 = vmatprep.subr.mxu0 0.0
      %2515 = vmatpush1.msra.mxu0 0.0
      %2516 = vmatprep.subr.mxu0 0.0
      %2517 = vmatpush1.msra.mxu0 0.0
      %2518 = vmatprep.subr.mxu0 0.0
      %2519 = vmatpush1.msra.mxu0 0.0
      %2520 = vmatprep.subr.mxu0 0.0
      %2521 = vmatpush1.msra.mxu0 0.0
      %2522 = vmatprep.subr.mxu0 0.0
      %2523 = vmatpush1.msra.mxu0 0.0
      %2524 = vmatprep.subr.mxu0 0.0
      %2525 = vmatpush1.msra.mxu0 0.0
      %2526 = vmatprep.subr.mxu0 0.0
      %2527 = vmatpush1.msra.mxu0 0.0
      %2528 = vmatprep.subr.mxu0 0.0
      %2529 = vmatpush1.msra.mxu0 0.0
      %2530 = vmatprep.subr.mxu0 0.0
      %2531 = vmatpush1.msra.mxu0 0.0
      %2532 = vmatprep.subr.mxu0 0.0
      %2533 = vmatpush1.msra.mxu0 0.0
      %2534 = vmatprep.subr.mxu0 0.0
      %2535 = vmatpush1.msra.mxu0 0.0
      %2536 = vmatprep.subr.mxu0 0.0
      %2537 = vmatpush1.msra.mxu0 0.0
      %2538 = vmatprep.subr.mxu0 0.0
      %2539 = vmatpush1.msra.mxu0 0.0
      %2540 = vmatprep.subr.mxu0 0.0
      %2541 = vmatpush1.msra.mxu0 0.0
      %2542 = vmatprep.subr.mxu0 0.0
      %2543 = vmatpush1.msra.mxu0 0.0
      %2544 = vmatprep.subr.mxu0 0.0
      %2545 = vmatpush1.msra.mxu0 0.0
      %2546 = vmatprep.subr.mxu0 0.0
      %2547 = vmatpush1.msra.mxu0 0.0
      %2548 = vmatprep.subr.mxu0 0.0
      %2549 = vmatpush1.msra.mxu0 0.0
      %2550 = vmatprep.subr.mxu0 0.0
      %2551 = vmatpush1.msra.mxu0 0.0
      %2552 = vmatprep.subr.mxu0 0.0
      %2553 = vmatpush1.msra.mxu0 0.0
      %2554 = vmatprep.subr.mxu0 0.0
      %2555 = vmatpush1.msra.mxu0 0.0
      %2556 = vmatprep.subr.mxu0 0.0
      %2557 = vmatpush1.msra.mxu0 0.0
      %2558 = vmatprep.subr.mxu0 0.0
      %2559 = vmatpush1.msra.mxu0 0.0
      %2560 = vmatprep.subr.mxu0 0.0
      %2561 = vmatpush1.msra.mxu0 0.0
      %2562 = vmatprep.subr.mxu0 0.0
      %2563 = vmatpush1.msra.mxu0 0.0
      %2564 = vmatprep.subr.mxu0 0.0
      %2565 = vmatpush1.msra.mxu0 0.0
      %2566 = vmatprep.mubr.f32.mxu0 0.0
      %2567 = vmatmul.mubr.f32.gmra.mrb[0].mxu0 %v2003
      %v2568 = vpop.f32.mrb[0].mxu0
      %v2569 = vadd.f32 %v1997, %v2568
      %v2570 = vpop.f32.mrb[0].mxu0
      %v2571 = vadd.f32 %v1999, %v2570
      %2572 = vdwg.mxu0
      %2574 = vset.pattern.permute.xlu0 0
      %2575 = vperm.xlu0 %2574, %v419
      %v2576 = vpop.permute.xlu0 %2575
      %v2578 = vadd.f32 %v2072, %v2576
      %v2579 = vadd.f32 %v2074, %v2576
      %v2580 = vadd.f32 %v2143, %v2576
      %v2581 = vadd.f32 %v2145, %v2576
      %v2582 = vadd.f32 %v2214, %v2576
      %v2583 = vadd.f32 %v2216, %v2576
      %v2584 = vadd.f32 %v2285, %v2576
      %v2585 = vadd.f32 %v2287, %v2576
      %v2586 = vadd.f32 %v2356, %v2576
      %v2587 = vadd.f32 %v2358, %v2576
      %v2588 = vadd.f32 %v2427, %v2576
      %v2589 = vadd.f32 %v2429, %v2576
      %v2590 = vadd.f32 %v2498, %v2576
      %v2591 = vadd.f32 %v2500, %v2576
      %v2592 = vadd.f32 %v2569, %v2576
      %v2593 = vadd.f32 %v2571, %v2576
      %v2594 = vsub.f32 0.0, %v2578
      %v2595 = vsub.f32 0.0, %v2579
      %v2596 = vsub.f32 0.0, %v2580
      %v2597 = vsub.f32 0.0, %v2581
      %v2598 = vsub.f32 0.0, %v2582
      %v2599 = vsub.f32 0.0, %v2583
      %v2600 = vsub.f32 0.0, %v2584
      %v2601 = vsub.f32 0.0, %v2585
      %v2602 = vsub.f32 0.0, %v2586
      %v2603 = vsub.f32 0.0, %v2587
      %v2604 = vsub.f32 0.0, %v2588
      %v2605 = vsub.f32 0.0, %v2589
      %v2606 = vsub.f32 0.0, %v2590
      %v2607 = vsub.f32 0.0, %v2591
      %v2608 = vsub.f32 0.0, %v2592
      %v2609 = vsub.f32 0.0, %v2593
      %v2610 = vmul.f32 %v2594, 1.442695
      %v2611 = vpow.pop %v2610
      %v2612 = vmul.f32 %v2595, 1.442695
      %v2613 = vpow.pop %v2612
      %v2614 = vmul.f32 %v2596, 1.442695
      %v2615 = vpow.pop %v2614
      %v2616 = vmul.f32 %v2597, 1.442695
      %v2617 = vpow.pop %v2616
      %v2618 = vmul.f32 %v2598, 1.442695
      %v2619 = vpow.pop %v2618
      %v2620 = vmul.f32 %v2599, 1.442695
      %v2621 = vpow.pop %v2620
      %v2622 = vmul.f32 %v2600, 1.442695
      %v2623 = vpow.pop %v2622
      %v2624 = vmul.f32 %v2601, 1.442695
      %v2625 = vpow.pop %v2624
      %v2626 = vmul.f32 %v2602, 1.442695
      %v2627 = vpow.pop %v2626
      %v2628 = vmul.f32 %v2603, 1.442695
      %v2629 = vpow.pop %v2628
      %v2630 = vmul.f32 %v2604, 1.442695
      %v2631 = vpow.pop %v2630
      %v2632 = vmul.f32 %v2605, 1.442695
      %v2633 = vpow.pop %v2632
      %v2634 = vmul.f32 %v2606, 1.442695
      %v2635 = vpow.pop %v2634
      %v2636 = vmul.f32 %v2607, 1.442695
      %v2637 = vpow.pop %v2636
      %v2638 = vmul.f32 %v2608, 1.442695
      %v2639 = vpow.pop %v2638
      %v2640 = vmul.f32 %v2609, 1.442695
      %v2641 = vpow.pop %v2640
      %v2642 = vadd.f32 %v2611, 1.0
      %v2643 = vadd.f32 %v2613, 1.0
      %v2644 = vadd.f32 %v2615, 1.0
      %v2645 = vadd.f32 %v2617, 1.0
      %v2646 = vadd.f32 %v2619, 1.0
      %v2647 = vadd.f32 %v2621, 1.0
      %v2648 = vadd.f32 %v2623, 1.0
      %v2649 = vadd.f32 %v2625, 1.0
      %v2650 = vadd.f32 %v2627, 1.0
      %v2651 = vadd.f32 %v2629, 1.0
      %v2652 = vadd.f32 %v2631, 1.0
      %v2653 = vadd.f32 %v2633, 1.0
      %v2654 = vadd.f32 %v2635, 1.0
      %v2655 = vadd.f32 %v2637, 1.0
      %v2656 = vadd.f32 %v2639, 1.0
      %v2657 = vadd.f32 %v2641, 1.0
      %v2658 = vrcp.pop %v2642
      %v2659 = vrcp.pop %v2643
      %v2660 = vrcp.pop %v2644
      %v2661 = vrcp.pop %v2645
      %v2662 = vrcp.pop %v2646
      %v2663 = vrcp.pop %v2647
      %v2664 = vrcp.pop %v2648
      %v2665 = vrcp.pop %v2649
      %v2666 = vrcp.pop %v2650
      %v2667 = vrcp.pop %v2651
      %v2668 = vrcp.pop %v2652
      %v2669 = vrcp.pop %v2653
      %v2670 = vrcp.pop %v2654
      %v2671 = vrcp.pop %v2655
      %v2672 = vrcp.pop %v2656
      %v2673 = vrcp.pop %v2657
      %v2690 = vcombine.low %v2658, %v2659
      %v2691 = vcombine.low %v2660, %v2661
      %v2692 = vcombine.low %v2662, %v2663
      %v2693 = vcombine.low %v2664, %v2665
      %v2694 = vcombine.low %v2666, %v2667
      %v2695 = vcombine.low %v2668, %v2669
      %v2696 = vcombine.low %v2670, %v2671
      %v2697 = vcombine.low %v2672, %v2673
      %2706 = vst [vmem:[%s393] sm:$0xff] %v2690
      %2707 = vst [vmem:[%s393 + $0x8] sm:$0xff] %v2691
      %2708 = vst [vmem:[%s393 + $0x10] sm:$0xff] %v2692
      %2709 = vst [vmem:[%s393 + $0x18] sm:$0xff] %v2693
      %2710 = vst [vmem:[%s393 + $0x20] sm:$0xff] %v2694
      %2711 = vst [vmem:[%s393 + $0x28] sm:$0xff] %v2695
      %2712 = vst [vmem:[%s393 + $0x30] sm:$0xff] %v2696
      %2713 = vst [vmem:[%s393 + $0x38] sm:$0xff] %v2697
      %v2714 = vld [vmem:[%s383] sm:$0xff]
      %v2715 = vld [vmem:[%s383 + $0x8] sm:$0xff]
      %v2716 = vld [vmem:[%s383 + $0x10] sm:$0xff]
      %v2717 = vld [vmem:[%s383 + $0x18] sm:$0xff]
      %v2718 = vld [vmem:[%s383 + $0x20] sm:$0xff]
      %v2719 = vld [vmem:[%s383 + $0x28] sm:$0xff]
      %v2720 = vld [vmem:[%s383 + $0x30] sm:$0xff]
      %v2721 = vld [vmem:[%s383 + $0x38] sm:$0xff]
      %v2730 = vcombine.high %v2714, %v2714
      %v2731 = vcombine.high %v2715, %v2715
      %v2732 = vcombine.high %v2716, %v2716
      %v2733 = vcombine.high %v2717, %v2717
      %v2734 = vcombine.high %v2718, %v2718
      %v2735 = vcombine.high %v2719, %v2719
      %v2736 = vcombine.high %v2720, %v2720
      %v2737 = vcombine.high %v2721, %v2721
      %v2738 = vsel %vm493, %v2714, 0
      %v2740 = vsel %vm493, %v2730, 0
      %v2742 = vsel %vm493, %v2715, 0
      %v2744 = vsel %vm493, %v2731, 0
      %v2746 = vsel %vm493, %v2716, 0
      %v2748 = vsel %vm493, %v2732, 0
      %v2750 = vsel %vm493, %v2717, 0
      %v2752 = vsel %vm493, %v2733, 0
      %v2754 = vsel %vm493, %v2718, 0
      %v2756 = vsel %vm493, %v2734, 0
      %v2758 = vsel %vm493, %v2719, 0
      %v2760 = vsel %vm493, %v2735, 0
      %v2762 = vsel %vm493, %v2720, 0
      %v2764 = vsel %vm493, %v2736, 0
      %v2766 = vsel %vm493, %v2721, 0
      %v2768 = vsel %vm493, %v2737, 0
      %2770 = vmatprep.subr.mxu0 %v2740
      %2771 = vmatpush1.msra.mxu0 %v2738
      %2772 = vmatprep.subr.mxu0 0.0
      %2773 = vmatpush1.msra.mxu0 0.0
      %2774 = vmatprep.subr.mxu0 0.0
      %2775 = vmatpush1.msra.mxu0 0.0
      %2776 = vmatprep.subr.mxu0 0.0
      %2777 = vmatpush1.msra.mxu0 0.0
      %2778 = vmatprep.subr.mxu0 0.0
      %2779 = vmatpush1.msra.mxu0 0.0
      %2780 = vmatprep.subr.mxu0 0.0
      %2781 = vmatpush1.msra.mxu0 0.0
      %2782 = vmatprep.subr.mxu0 0.0
      %2783 = vmatpush1.msra.mxu0 0.0
      %2784 = vmatprep.subr.mxu0 0.0
      %2785 = vmatpush1.msra.mxu0 0.0
      %2786 = vmatprep.subr.mxu0 0.0
      %2787 = vmatpush1.msra.mxu0 0.0
      %2788 = vmatprep.subr.mxu0 0.0
      %2789 = vmatpush1.msra.mxu0 0.0
      %2790 = vmatprep.subr.mxu0 0.0
      %2791 = vmatpush1.msra.mxu0 0.0
      %2792 = vmatprep.subr.mxu0 0.0
      %2793 = vmatpush1.msra.mxu0 0.0
      %2794 = vmatprep.subr.mxu0 0.0
      %2795 = vmatpush1.msra.mxu0 0.0
      %2796 = vmatprep.subr.mxu0 0.0
      %2797 = vmatpush1.msra.mxu0 0.0
      %2798 = vmatprep.subr.mxu0 0.0
      %2799 = vmatpush1.msra.mxu0 0.0
      %2800 = vmatprep.subr.mxu0 0.0
      %2801 = vmatpush1.msra.mxu0 0.0
      %2802 = vmatprep.subr.mxu0 0.0
      %2803 = vmatpush1.msra.mxu0 0.0
      %2804 = vmatprep.subr.mxu0 0.0
      %2805 = vmatpush1.msra.mxu0 0.0
      %2806 = vmatprep.subr.mxu0 0.0
      %2807 = vmatpush1.msra.mxu0 0.0
      %2808 = vmatprep.subr.mxu0 0.0
      %2809 = vmatpush1.msra.mxu0 0.0
      %2810 = vmatprep.subr.mxu0 0.0
      %2811 = vmatpush1.msra.mxu0 0.0
      %2812 = vmatprep.subr.mxu0 0.0
      %2813 = vmatpush1.msra.mxu0 0.0
      %2814 = vmatprep.subr.mxu0 0.0
      %2815 = vmatpush1.msra.mxu0 0.0
      %2816 = vmatprep.subr.mxu0 0.0
      %2817 = vmatpush1.msra.mxu0 0.0
      %2818 = vmatprep.subr.mxu0 0.0
      %2819 = vmatpush1.msra.mxu0 0.0
      %2820 = vmatprep.subr.mxu0 0.0
      %2821 = vmatpush1.msra.mxu0 0.0
      %2822 = vmatprep.subr.mxu0 0.0
      %2823 = vmatpush1.msra.mxu0 0.0
      %2824 = vmatprep.subr.mxu0 0.0
      %2825 = vmatpush1.msra.mxu0 0.0
      %2826 = vmatprep.subr.mxu0 0.0
      %2827 = vmatpush1.msra.mxu0 0.0
      %2828 = vmatprep.subr.mxu0 0.0
      %2829 = vmatpush1.msra.mxu0 0.0
      %2830 = vmatprep.subr.mxu0 0.0
      %2831 = vmatpush1.msra.mxu0 0.0
      %2832 = vmatprep.subr.mxu0 0.0
      %2833 = vmatpush1.msra.mxu0 0.0
      %2834 = vmatprep.mubr.f32.mxu0 0.0
      %2835 = vmatmul.mubr.f32.gmra.mrb[0].mxu0 %v476
      %v2836 = vpop.f32.mrb[0].mxu0
      %v2837 = vadd.f32 %v431, %v2836
      %v2838 = vpop.f32.mrb[0].mxu0
      %v2839 = vadd.f32 %v431, %v2838
      %2840 = vmatprep.mubr.f32.mxu0 0.0
      %2841 = vmatmul.mubr.f32.gmra.mrb[0].mxu0 %v479
      %v2842 = vpop.f32.mrb[0].mxu0
      %v2843 = vadd.f32 %v436, %v2842
      %v2844 = vpop.f32.mrb[0].mxu0
      %v2845 = vadd.f32 %v436, %v2844
      %2846 = vmatprep.mubr.f32.mxu0 0.0
      %2847 = vmatmul.mubr.f32.gmra.mrb[0].mxu0 %v482
      %v2848 = vpop.f32.mrb[0].mxu0
      %v2849 = vadd.f32 %v441, %v2848
      %v2850 = vpop.f32.mrb[0].mxu0
      %v2851 = vadd.f32 %v441, %v2850
      %2852 = vmatprep.mubr.f32.mxu0 0.0
      %2853 = vmatmul.mubr.f32.gmra.mrb[0].mxu0 %v485
      %v2854 = vpop.f32.mrb[0].mxu0
      %v2855 = vadd.f32 %v446, %v2854
      %v2856 = vpop.f32.mrb[0].mxu0
      %v2857 = vadd.f32 %v446, %v2856
      %2858 = vmatprep.mubr.f32.mxu0 0.0
      %2859 = vmatmul.mubr.f32.gmra.mrb[0].mxu0 %v488
      %v2860 = vpop.f32.mrb[0].mxu0
      %v2861 = vadd.f32 %v451, %v2860
      %v2862 = vpop.f32.mrb[0].mxu0
      %v2863 = vadd.f32 %v451, %v2862
      %2864 = vmatprep.mubr.f32.mxu0 0.0
      %2865 = vmatmul.mubr.f32.gmra.mrb[0].mxu0 %v491
      %v2866 = vpop.f32.mrb[0].mxu0
      %v2867 = vadd.f32 %v456, %v2866
      %v2868 = vpop.f32.mrb[0].mxu0
      %v2869 = vadd.f32 %v456, %v2868
      %2870 = vdwg.mxu0
      %2871 = vmatprep.subr.mxu0 %v2744
      %2872 = vmatpush1.msra.mxu0 %v2742
      %2873 = vmatprep.subr.mxu0 0.0
      %2874 = vmatpush1.msra.mxu0 0.0
      %2875 = vmatprep.subr.mxu0 0.0
      %2876 = vmatpush1.msra.mxu0 0.0
      %2877 = vmatprep.subr.mxu0 0.0
      %2878 = vmatpush1.msra.mxu0 0.0
      %2879 = vmatprep.subr.mxu0 0.0
      %2880 = vmatpush1.msra.mxu0 0.0
      %2881 = vmatprep.subr.mxu0 0.0
      %2882 = vmatpush1.msra.mxu0 0.0
      %2883 = vmatprep.subr.mxu0 0.0
      %2884 = vmatpush1.msra.mxu0 0.0
      %2885 = vmatprep.subr.mxu0 0.0
      %2886 = vmatpush1.msra.mxu0 0.0
      %2887 = vmatprep.subr.mxu0 0.0
      %2888 = vmatpush1.msra.mxu0 0.0
      %2889 = vmatprep.subr.mxu0 0.0
      %2890 = vmatpush1.msra.mxu0 0.0
      %2891 = vmatprep.subr.mxu0 0.0
      %2892 = vmatpush1.msra.mxu0 0.0
      %2893 = vmatprep.subr.mxu0 0.0
      %2894 = vmatpush1.msra.mxu0 0.0
      %2895 = vmatprep.subr.mxu0 0.0
      %2896 = vmatpush1.msra.mxu0 0.0
      %2897 = vmatprep.subr.mxu0 0.0
      %2898 = vmatpush1.msra.mxu0 0.0
      %2899 = vmatprep.subr.mxu0 0.0
      %2900 = vmatpush1.msra.mxu0 0.0
      %2901 = vmatprep.subr.mxu0 0.0
      %2902 = vmatpush1.msra.mxu0 0.0
      %2903 = vmatprep.subr.mxu0 0.0
      %2904 = vmatpush1.msra.mxu0 0.0
      %2905 = vmatprep.subr.mxu0 0.0
      %2906 = vmatpush1.msra.mxu0 0.0
      %2907 = vmatprep.subr.mxu0 0.0
      %2908 = vmatpush1.msra.mxu0 0.0
      %2909 = vmatprep.subr.mxu0 0.0
      %2910 = vmatpush1.msra.mxu0 0.0
      %2911 = vmatprep.subr.mxu0 0.0
      %2912 = vmatpush1.msra.mxu0 0.0
      %2913 = vmatprep.subr.mxu0 0.0
      %2914 = vmatpush1.msra.mxu0 0.0
      %2915 = vmatprep.subr.mxu0 0.0
      %2916 = vmatpush1.msra.mxu0 0.0
      %2917 = vmatprep.subr.mxu0 0.0
      %2918 = vmatpush1.msra.mxu0 0.0
      %2919 = vmatprep.subr.mxu0 0.0
      %2920 = vmatpush1.msra.mxu0 0.0
      %2921 = vmatprep.subr.mxu0 0.0
      %2922 = vmatpush1.msra.mxu0 0.0
      %2923 = vmatprep.subr.mxu0 0.0
      %2924 = vmatpush1.msra.mxu0 0.0
      %2925 = vmatprep.subr.mxu0 0.0
      %2926 = vmatpush1.msra.mxu0 0.0
      %2927 = vmatprep.subr.mxu0 0.0
      %2928 = vmatpush1.msra.mxu0 0.0
      %2929 = vmatprep.subr.mxu0 0.0
      %2930 = vmatpush1.msra.mxu0 0.0
      %2931 = vmatprep.subr.mxu0 0.0
      %2932 = vmatpush1.msra.mxu0 0.0
      %2933 = vmatprep.subr.mxu0 0.0
      %2934 = vmatpush1.msra.mxu0 0.0
      %2935 = vmatprep.mubr.f32.mxu0 0.0
      %2936 = vmatmul.mubr.f32.gmra.mrb[0].mxu0 %v476
      %v2937 = vpop.f32.mrb[0].mxu0
      %v2938 = vadd.f32 %v431, %v2937
      %v2939 = vpop.f32.mrb[0].mxu0
      %v2940 = vadd.f32 %v431, %v2939
      %2941 = vmatprep.mubr.f32.mxu0 0.0
      %2942 = vmatmul.mubr.f32.gmra.mrb[0].mxu0 %v479
      %v2943 = vpop.f32.mrb[0].mxu0
      %v2944 = vadd.f32 %v436, %v2943
      %v2945 = vpop.f32.mrb[0].mxu0
      %v2946 = vadd.f32 %v436, %v2945
      %2947 = vmatprep.mubr.f32.mxu0 0.0
      %2948 = vmatmul.mubr.f32.gmra.mrb[0].mxu0 %v482
      %v2949 = vpop.f32.mrb[0].mxu0
      %v2950 = vadd.f32 %v441, %v2949
      %v2951 = vpop.f32.mrb[0].mxu0
      %v2952 = vadd.f32 %v441, %v2951
      %2953 = vmatprep.mubr.f32.mxu0 0.0
      %2954 = vmatmul.mubr.f32.gmra.mrb[0].mxu0 %v485
      %v2955 = vpop.f32.mrb[0].mxu0
      %v2956 = vadd.f32 %v446, %v2955
      %v2957 = vpop.f32.mrb[0].mxu0
      %v2958 = vadd.f32 %v446, %v2957
      %2959 = vmatprep.mubr.f32.mxu0 0.0
      %2960 = vmatmul.mubr.f32.gmra.mrb[0].mxu0 %v488
      %v2961 = vpop.f32.mrb[0].mxu0
      %v2962 = vadd.f32 %v451, %v2961
      %v2963 = vpop.f32.mrb[0].mxu0
      %v2964 = vadd.f32 %v451, %v2963
      %2965 = vmatprep.mubr.f32.mxu0 0.0
      %2966 = vmatmul.mubr.f32.gmra.mrb[0].mxu0 %v491
      %v2967 = vpop.f32.mrb[0].mxu0
      %v2968 = vadd.f32 %v456, %v2967
      %v2969 = vpop.f32.mrb[0].mxu0
      %v2970 = vadd.f32 %v456, %v2969
      %2971 = vdwg.mxu0
      %2972 = vmatprep.subr.mxu0 %v2748
      %2973 = vmatpush1.msra.mxu0 %v2746
      %2974 = vmatprep.subr.mxu0 0.0
      %2975 = vmatpush1.msra.mxu0 0.0
      %2976 = vmatprep.subr.mxu0 0.0
      %2977 = vmatpush1.msra.mxu0 0.0
      %2978 = vmatprep.subr.mxu0 0.0
      %2979 = vmatpush1.msra.mxu0 0.0
      %2980 = vmatprep.subr.mxu0 0.0
      %2981 = vmatpush1.msra.mxu0 0.0
      %2982 = vmatprep.subr.mxu0 0.0
      %2983 = vmatpush1.msra.mxu0 0.0
      %2984 = vmatprep.subr.mxu0 0.0
      %2985 = vmatpush1.msra.mxu0 0.0
      %2986 = vmatprep.subr.mxu0 0.0
      %2987 = vmatpush1.msra.mxu0 0.0
      %2988 = vmatprep.subr.mxu0 0.0
      %2989 = vmatpush1.msra.mxu0 0.0
      %2990 = vmatprep.subr.mxu0 0.0
      %2991 = vmatpush1.msra.mxu0 0.0
      %2992 = vmatprep.subr.mxu0 0.0
      %2993 = vmatpush1.msra.mxu0 0.0
      %2994 = vmatprep.subr.mxu0 0.0
      %2995 = vmatpush1.msra.mxu0 0.0
      %2996 = vmatprep.subr.mxu0 0.0
      %2997 = vmatpush1.msra.mxu0 0.0
      %2998 = vmatprep.subr.mxu0 0.0
      %2999 = vmatpush1.msra.mxu0 0.0
      %3000 = vmatprep.subr.mxu0 0.0
      %3001 = vmatpush1.msra.mxu0 0.0
      %3002 = vmatprep.subr.mxu0 0.0
      %3003 = vmatpush1.msra.mxu0 0.0
      %3004 = vmatprep.subr.mxu0 0.0
      %3005 = vmatpush1.msra.mxu0 0.0
      %3006 = vmatprep.subr.mxu0 0.0
      %3007 = vmatpush1.msra.mxu0 0.0
      %3008 = vmatprep.subr.mxu0 0.0
      %3009 = vmatpush1.msra.mxu0 0.0
      %3010 = vmatprep.subr.mxu0 0.0
      %3011 = vmatpush1.msra.mxu0 0.0
      %3012 = vmatprep.subr.mxu0 0.0
      %3013 = vmatpush1.msra.mxu0 0.0
      %3014 = vmatprep.subr.mxu0 0.0
      %3015 = vmatpush1.msra.mxu0 0.0
      %3016 = vmatprep.subr.mxu0 0.0
      %3017 = vmatpush1.msra.mxu0 0.0
      %3018 = vmatprep.subr.mxu0 0.0
      %3019 = vmatpush1.msra.mxu0 0.0
      %3020 = vmatprep.subr.mxu0 0.0
      %3021 = vmatpush1.msra.mxu0 0.0
      %3022 = vmatprep.subr.mxu0 0.0
      %3023 = vmatpush1.msra.mxu0 0.0
      %3024 = vmatprep.subr.mxu0 0.0
      %3025 = vmatpush1.msra.mxu0 0.0
      %3026 = vmatprep.subr.mxu0 0.0
      %3027 = vmatpush1.msra.mxu0 0.0
      %3028 = vmatprep.subr.mxu0 0.0
      %3029 = vmatpush1.msra.mxu0 0.0
      %3030 = vmatprep.subr.mxu0 0.0
      %3031 = vmatpush1.msra.mxu0 0.0
      %3032 = vmatprep.subr.mxu0 0.0
      %3033 = vmatpush1.msra.mxu0 0.0
      %3034 = vmatprep.subr.mxu0 0.0
      %3035 = vmatpush1.msra.mxu0 0.0
      %3036 = vmatprep.mubr.f32.mxu0 0.0
      %3037 = vmatmul.mubr.f32.gmra.mrb[0].mxu0 %v476
      %v3038 = vpop.f32.mrb[0].mxu0
      %v3039 = vadd.f32 %v431, %v3038
      %v3040 = vpop.f32.mrb[0].mxu0
      %v3041 = vadd.f32 %v431, %v3040
      %3042 = vmatprep.mubr.f32.mxu0 0.0
      %3043 = vmatmul.mubr.f32.gmra.mrb[0].mxu0 %v479
      %v3044 = vpop.f32.mrb[0].mxu0
      %v3045 = vadd.f32 %v436, %v3044
      %v3046 = vpop.f32.mrb[0].mxu0
      %v3047 = vadd.f32 %v436, %v3046
      %3048 = vmatprep.mubr.f32.mxu0 0.0
      %3049 = vmatmul.mubr.f32.gmra.mrb[0].mxu0 %v482
      %v3050 = vpop.f32.mrb[0].mxu0
      %v3051 = vadd.f32 %v441, %v3050
      %v3052 = vpop.f32.mrb[0].mxu0
      %v3053 = vadd.f32 %v441, %v3052
      %3054 = vmatprep.mubr.f32.mxu0 0.0
      %3055 = vmatmul.mubr.f32.gmra.mrb[0].mxu0 %v485
      %v3056 = vpop.f32.mrb[0].mxu0
      %v3057 = vadd.f32 %v446, %v3056
      %v3058 = vpop.f32.mrb[0].mxu0
      %v3059 = vadd.f32 %v446, %v3058
      %3060 = vmatprep.mubr.f32.mxu0 0.0
      %3061 = vmatmul.mubr.f32.gmra.mrb[0].mxu0 %v488
      %v3062 = vpop.f32.mrb[0].mxu0
      %v3063 = vadd.f32 %v451, %v3062
      %v3064 = vpop.f32.mrb[0].mxu0
      %v3065 = vadd.f32 %v451, %v3064
      %3066 = vmatprep.mubr.f32.mxu0 0.0
      %3067 = vmatmul.mubr.f32.gmra.mrb[0].mxu0 %v491
      %v3068 = vpop.f32.mrb[0].mxu0
      %v3069 = vadd.f32 %v456, %v3068
      %v3070 = vpop.f32.mrb[0].mxu0
      %v3071 = vadd.f32 %v456, %v3070
      %3072 = vdwg.mxu0
      %3073 = vmatprep.subr.mxu0 %v2752
      %3074 = vmatpush1.msra.mxu0 %v2750
      %3075 = vmatprep.subr.mxu0 0.0
      %3076 = vmatpush1.msra.mxu0 0.0
      %3077 = vmatprep.subr.mxu0 0.0
      %3078 = vmatpush1.msra.mxu0 0.0
      %3079 = vmatprep.subr.mxu0 0.0
      %3080 = vmatpush1.msra.mxu0 0.0
      %3081 = vmatprep.subr.mxu0 0.0
      %3082 = vmatpush1.msra.mxu0 0.0
      %3083 = vmatprep.subr.mxu0 0.0
      %3084 = vmatpush1.msra.mxu0 0.0
      %3085 = vmatprep.subr.mxu0 0.0
      %3086 = vmatpush1.msra.mxu0 0.0
      %3087 = vmatprep.subr.mxu0 0.0
      %3088 = vmatpush1.msra.mxu0 0.0
      %3089 = vmatprep.subr.mxu0 0.0
      %3090 = vmatpush1.msra.mxu0 0.0
      %3091 = vmatprep.subr.mxu0 0.0
      %3092 = vmatpush1.msra.mxu0 0.0
      %3093 = vmatprep.subr.mxu0 0.0
      %3094 = vmatpush1.msra.mxu0 0.0
      %3095 = vmatprep.subr.mxu0 0.0
      %3096 = vmatpush1.msra.mxu0 0.0
      %3097 = vmatprep.subr.mxu0 0.0
      %3098 = vmatpush1.msra.mxu0 0.0
      %3099 = vmatprep.subr.mxu0 0.0
      %3100 = vmatpush1.msra.mxu0 0.0
      %3101 = vmatprep.subr.mxu0 0.0
      %3102 = vmatpush1.msra.mxu0 0.0
      %3103 = vmatprep.subr.mxu0 0.0
      %3104 = vmatpush1.msra.mxu0 0.0
      %3105 = vmatprep.subr.mxu0 0.0
      %3106 = vmatpush1.msra.mxu0 0.0
      %3107 = vmatprep.subr.mxu0 0.0
      %3108 = vmatpush1.msra.mxu0 0.0
      %3109 = vmatprep.subr.mxu0 0.0
      %3110 = vmatpush1.msra.mxu0 0.0
      %3111 = vmatprep.subr.mxu0 0.0
      %3112 = vmatpush1.msra.mxu0 0.0
      %3113 = vmatprep.subr.mxu0 0.0
      %3114 = vmatpush1.msra.mxu0 0.0
      %3115 = vmatprep.subr.mxu0 0.0
      %3116 = vmatpush1.msra.mxu0 0.0
      %3117 = vmatprep.subr.mxu0 0.0
      %3118 = vmatpush1.msra.mxu0 0.0
      %3119 = vmatprep.subr.mxu0 0.0
      %3120 = vmatpush1.msra.mxu0 0.0
      %3121 = vmatprep.subr.mxu0 0.0
      %3122 = vmatpush1.msra.mxu0 0.0
      %3123 = vmatprep.subr.mxu0 0.0
      %3124 = vmatpush1.msra.mxu0 0.0
      %3125 = vmatprep.subr.mxu0 0.0
      %3126 = vmatpush1.msra.mxu0 0.0
      %3127 = vmatprep.subr.mxu0 0.0
      %3128 = vmatpush1.msra.mxu0 0.0
      %3129 = vmatprep.subr.mxu0 0.0
      %3130 = vmatpush1.msra.mxu0 0.0
      %3131 = vmatprep.subr.mxu0 0.0
      %3132 = vmatpush1.msra.mxu0 0.0
      %3133 = vmatprep.subr.mxu0 0.0
      %3134 = vmatpush1.msra.mxu0 0.0
      %3135 = vmatprep.subr.mxu0 0.0
      %3136 = vmatpush1.msra.mxu0 0.0
      %3137 = vmatprep.mubr.f32.mxu0 0.0
      %3138 = vmatmul.mubr.f32.gmra.mrb[0].mxu0 %v476
      %v3139 = vpop.f32.mrb[0].mxu0
      %v3140 = vadd.f32 %v431, %v3139
      %v3141 = vpop.f32.mrb[0].mxu0
      %v3142 = vadd.f32 %v431, %v3141
      %3143 = vmatprep.mubr.f32.mxu0 0.0
      %3144 = vmatmul.mubr.f32.gmra.mrb[0].mxu0 %v479
      %v3145 = vpop.f32.mrb[0].mxu0
      %v3146 = vadd.f32 %v436, %v3145
      %v3147 = vpop.f32.mrb[0].mxu0
      %v3148 = vadd.f32 %v436, %v3147
      %3149 = vmatprep.mubr.f32.mxu0 0.0
      %3150 = vmatmul.mubr.f32.gmra.mrb[0].mxu0 %v482
      %v3151 = vpop.f32.mrb[0].mxu0
      %v3152 = vadd.f32 %v441, %v3151
      %v3153 = vpop.f32.mrb[0].mxu0
      %v3154 = vadd.f32 %v441, %v3153
      %3155 = vmatprep.mubr.f32.mxu0 0.0
      %3156 = vmatmul.mubr.f32.gmra.mrb[0].mxu0 %v485
      %v3157 = vpop.f32.mrb[0].mxu0
      %v3158 = vadd.f32 %v446, %v3157
      %v3159 = vpop.f32.mrb[0].mxu0
      %v3160 = vadd.f32 %v446, %v3159
      %3161 = vmatprep.mubr.f32.mxu0 0.0
      %3162 = vmatmul.mubr.f32.gmra.mrb[0].mxu0 %v488
      %v3163 = vpop.f32.mrb[0].mxu0
      %v3164 = vadd.f32 %v451, %v3163
      %v3165 = vpop.f32.mrb[0].mxu0
      %v3166 = vadd.f32 %v451, %v3165
      %3167 = vmatprep.mubr.f32.mxu0 0.0
      %3168 = vmatmul.mubr.f32.gmra.mrb[0].mxu0 %v491
      %v3169 = vpop.f32.mrb[0].mxu0
      %v3170 = vadd.f32 %v456, %v3169
      %v3171 = vpop.f32.mrb[0].mxu0
      %v3172 = vadd.f32 %v456, %v3171
      %3173 = vdwg.mxu0
      %3174 = vmatprep.subr.mxu0 %v2756
      %3175 = vmatpush1.msra.mxu0 %v2754
      %3176 = vmatprep.subr.mxu0 0.0
      %3177 = vmatpush1.msra.mxu0 0.0
      %3178 = vmatprep.subr.mxu0 0.0
      %3179 = vmatpush1.msra.mxu0 0.0
      %3180 = vmatprep.subr.mxu0 0.0
      %3181 = vmatpush1.msra.mxu0 0.0
      %3182 = vmatprep.subr.mxu0 0.0
      %3183 = vmatpush1.msra.mxu0 0.0
      %3184 = vmatprep.subr.mxu0 0.0
      %3185 = vmatpush1.msra.mxu0 0.0
      %3186 = vmatprep.subr.mxu0 0.0
      %3187 = vmatpush1.msra.mxu0 0.0
      %3188 = vmatprep.subr.mxu0 0.0
      %3189 = vmatpush1.msra.mxu0 0.0
      %3190 = vmatprep.subr.mxu0 0.0
      %3191 = vmatpush1.msra.mxu0 0.0
      %3192 = vmatprep.subr.mxu0 0.0
      %3193 = vmatpush1.msra.mxu0 0.0
      %3194 = vmatprep.subr.mxu0 0.0
      %3195 = vmatpush1.msra.mxu0 0.0
      %3196 = vmatprep.subr.mxu0 0.0
      %3197 = vmatpush1.msra.mxu0 0.0
      %3198 = vmatprep.subr.mxu0 0.0
      %3199 = vmatpush1.msra.mxu0 0.0
      %3200 = vmatprep.subr.mxu0 0.0
      %3201 = vmatpush1.msra.mxu0 0.0
      %3202 = vmatprep.subr.mxu0 0.0
      %3203 = vmatpush1.msra.mxu0 0.0
      %3204 = vmatprep.subr.mxu0 0.0
      %3205 = vmatpush1.msra.mxu0 0.0
      %3206 = vmatprep.subr.mxu0 0.0
      %3207 = vmatpush1.msra.mxu0 0.0
      %3208 = vmatprep.subr.mxu0 0.0
      %3209 = vmatpush1.msra.mxu0 0.0
      %3210 = vmatprep.subr.mxu0 0.0
      %3211 = vmatpush1.msra.mxu0 0.0
      %3212 = vmatprep.subr.mxu0 0.0
      %3213 = vmatpush1.msra.mxu0 0.0
      %3214 = vmatprep.subr.mxu0 0.0
      %3215 = vmatpush1.msra.mxu0 0.0
      %3216 = vmatprep.subr.mxu0 0.0
      %3217 = vmatpush1.msra.mxu0 0.0
      %3218 = vmatprep.subr.mxu0 0.0
      %3219 = vmatpush1.msra.mxu0 0.0
      %3220 = vmatprep.subr.mxu0 0.0
      %3221 = vmatpush1.msra.mxu0 0.0
      %3222 = vmatprep.subr.mxu0 0.0
      %3223 = vmatpush1.msra.mxu0 0.0
      %3224 = vmatprep.subr.mxu0 0.0
      %3225 = vmatpush1.msra.mxu0 0.0
      %3226 = vmatprep.subr.mxu0 0.0
      %3227 = vmatpush1.msra.mxu0 0.0
      %3228 = vmatprep.subr.mxu0 0.0
      %3229 = vmatpush1.msra.mxu0 0.0
      %3230 = vmatprep.subr.mxu0 0.0
      %3231 = vmatpush1.msra.mxu0 0.0
      %3232 = vmatprep.subr.mxu0 0.0
      %3233 = vmatpush1.msra.mxu0 0.0
      %3234 = vmatprep.subr.mxu0 0.0
      %3235 = vmatpush1.msra.mxu0 0.0
      %3236 = vmatprep.subr.mxu0 0.0
      %3237 = vmatpush1.msra.mxu0 0.0
      %3238 = vmatprep.mubr.f32.mxu0 0.0
      %3239 = vmatmul.mubr.f32.gmra.mrb[0].mxu0 %v476
      %v3240 = vpop.f32.mrb[0].mxu0
      %v3241 = vadd.f32 %v431, %v3240
      %v3242 = vpop.f32.mrb[0].mxu0
      %v3243 = vadd.f32 %v431, %v3242
      %3244 = vmatprep.mubr.f32.mxu0 0.0
      %3245 = vmatmul.mubr.f32.gmra.mrb[0].mxu0 %v479
      %v3246 = vpop.f32.mrb[0].mxu0
      %v3247 = vadd.f32 %v436, %v3246
      %v3248 = vpop.f32.mrb[0].mxu0
      %v3249 = vadd.f32 %v436, %v3248
      %3250 = vmatprep.mubr.f32.mxu0 0.0
      %3251 = vmatmul.mubr.f32.gmra.mrb[0].mxu0 %v482
      %v3252 = vpop.f32.mrb[0].mxu0
      %v3253 = vadd.f32 %v441, %v3252
      %v3254 = vpop.f32.mrb[0].mxu0
      %v3255 = vadd.f32 %v441, %v3254
      %3256 = vmatprep.mubr.f32.mxu0 0.0
      %3257 = vmatmul.mubr.f32.gmra.mrb[0].mxu0 %v485
      %v3258 = vpop.f32.mrb[0].mxu0
      %v3259 = vadd.f32 %v446, %v3258
      %v3260 = vpop.f32.mrb[0].mxu0
      %v3261 = vadd.f32 %v446, %v3260
      %3262 = vmatprep.mubr.f32.mxu0 0.0
      %3263 = vmatmul.mubr.f32.gmra.mrb[0].mxu0 %v488
      %v3264 = vpop.f32.mrb[0].mxu0
      %v3265 = vadd.f32 %v451, %v3264
      %v3266 = vpop.f32.mrb[0].mxu0
      %v3267 = vadd.f32 %v451, %v3266
      %3268 = vmatprep.mubr.f32.mxu0 0.0
      %3269 = vmatmul.mubr.f32.gmra.mrb[0].mxu0 %v491
      %v3270 = vpop.f32.mrb[0].mxu0
      %v3271 = vadd.f32 %v456, %v3270
      %v3272 = vpop.f32.mrb[0].mxu0
      %v3273 = vadd.f32 %v456, %v3272
      %3274 = vdwg.mxu0
      %3275 = vmatprep.subr.mxu0 %v2760
      %3276 = vmatpush1.msra.mxu0 %v2758
      %3277 = vmatprep.subr.mxu0 0.0
      %3278 = vmatpush1.msra.mxu0 0.0
      %3279 = vmatprep.subr.mxu0 0.0
      %3280 = vmatpush1.msra.mxu0 0.0
      %3281 = vmatprep.subr.mxu0 0.0
      %3282 = vmatpush1.msra.mxu0 0.0
      %3283 = vmatprep.subr.mxu0 0.0
      %3284 = vmatpush1.msra.mxu0 0.0
      %3285 = vmatprep.subr.mxu0 0.0
      %3286 = vmatpush1.msra.mxu0 0.0
      %3287 = vmatprep.subr.mxu0 0.0
      %3288 = vmatpush1.msra.mxu0 0.0
      %3289 = vmatprep.subr.mxu0 0.0
      %3290 = vmatpush1.msra.mxu0 0.0
      %3291 = vmatprep.subr.mxu0 0.0
      %3292 = vmatpush1.msra.mxu0 0.0
      %3293 = vmatprep.subr.mxu0 0.0
      %3294 = vmatpush1.msra.mxu0 0.0
      %3295 = vmatprep.subr.mxu0 0.0
      %3296 = vmatpush1.msra.mxu0 0.0
      %3297 = vmatprep.subr.mxu0 0.0
      %3298 = vmatpush1.msra.mxu0 0.0
      %3299 = vmatprep.subr.mxu0 0.0
      %3300 = vmatpush1.msra.mxu0 0.0
      %3301 = vmatprep.subr.mxu0 0.0
      %3302 = vmatpush1.msra.mxu0 0.0
      %3303 = vmatprep.subr.mxu0 0.0
      %3304 = vmatpush1.msra.mxu0 0.0
      %3305 = vmatprep.subr.mxu0 0.0
      %3306 = vmatpush1.msra.mxu0 0.0
      %3307 = vmatprep.subr.mxu0 0.0
      %3308 = vmatpush1.msra.mxu0 0.0
      %3309 = vmatprep.subr.mxu0 0.0
      %3310 = vmatpush1.msra.mxu0 0.0
      %3311 = vmatprep.subr.mxu0 0.0
      %3312 = vmatpush1.msra.mxu0 0.0
      %3313 = vmatprep.subr.mxu0 0.0
      %3314 = vmatpush1.msra.mxu0 0.0
      %3315 = vmatprep.subr.mxu0 0.0
      %3316 = vmatpush1.msra.mxu0 0.0
      %3317 = vmatprep.subr.mxu0 0.0
      %3318 = vmatpush1.msra.mxu0 0.0
      %3319 = vmatprep.subr.mxu0 0.0
      %3320 = vmatpush1.msra.mxu0 0.0
      %3321 = vmatprep.subr.mxu0 0.0
      %3322 = vmatpush1.msra.mxu0 0.0
      %3323 = vmatprep.subr.mxu0 0.0
      %3324 = vmatpush1.msra.mxu0 0.0
      %3325 = vmatprep.subr.mxu0 0.0
      %3326 = vmatpush1.msra.mxu0 0.0
      %3327 = vmatprep.subr.mxu0 0.0
      %3328 = vmatpush1.msra.mxu0 0.0
      %3329 = vmatprep.subr.mxu0 0.0
      %3330 = vmatpush1.msra.mxu0 0.0
      %3331 = vmatprep.subr.mxu0 0.0
      %3332 = vmatpush1.msra.mxu0 0.0
      %3333 = vmatprep.subr.mxu0 0.0
      %3334 = vmatpush1.msra.mxu0 0.0
      %3335 = vmatprep.subr.mxu0 0.0
      %3336 = vmatpush1.msra.mxu0 0.0
      %3337 = vmatprep.subr.mxu0 0.0
      %3338 = vmatpush1.msra.mxu0 0.0
      %3339 = vmatprep.mubr.f32.mxu0 0.0
      %3340 = vmatmul.mubr.f32.gmra.mrb[0].mxu0 %v476
      %v3341 = vpop.f32.mrb[0].mxu0
      %v3342 = vadd.f32 %v431, %v3341
      %v3343 = vpop.f32.mrb[0].mxu0
      %v3344 = vadd.f32 %v431, %v3343
      %3345 = vmatprep.mubr.f32.mxu0 0.0
      %3346 = vmatmul.mubr.f32.gmra.mrb[0].mxu0 %v479
      %v3347 = vpop.f32.mrb[0].mxu0
      %v3348 = vadd.f32 %v436, %v3347
      %v3349 = vpop.f32.mrb[0].mxu0
      %v3350 = vadd.f32 %v436, %v3349
      %3351 = vmatprep.mubr.f32.mxu0 0.0
      %3352 = vmatmul.mubr.f32.gmra.mrb[0].mxu0 %v482
      %v3353 = vpop.f32.mrb[0].mxu0
      %v3354 = vadd.f32 %v441, %v3353
      %v3355 = vpop.f32.mrb[0].mxu0
      %v3356 = vadd.f32 %v441, %v3355
      %3357 = vmatprep.mubr.f32.mxu0 0.0
      %3358 = vmatmul.mubr.f32.gmra.mrb[0].mxu0 %v485
      %v3359 = vpop.f32.mrb[0].mxu0
      %v3360 = vadd.f32 %v446, %v3359
      %v3361 = vpop.f32.mrb[0].mxu0
      %v3362 = vadd.f32 %v446, %v3361
      %3363 = vmatprep.mubr.f32.mxu0 0.0
      %3364 = vmatmul.mubr.f32.gmra.mrb[0].mxu0 %v488
      %v3365 = vpop.f32.mrb[0].mxu0
      %v3366 = vadd.f32 %v451, %v3365
      %v3367 = vpop.f32.mrb[0].mxu0
      %v3368 = vadd.f32 %v451, %v3367
      %3369 = vmatprep.mubr.f32.mxu0 0.0
      %3370 = vmatmul.mubr.f32.gmra.mrb[0].mxu0 %v491
      %v3371 = vpop.f32.mrb[0].mxu0
      %v3372 = vadd.f32 %v456, %v3371
      %v3373 = vpop.f32.mrb[0].mxu0
      %v3374 = vadd.f32 %v456, %v3373
      %3375 = vdwg.mxu0
      %3376 = vmatprep.subr.mxu0 %v2764
      %3377 = vmatpush1.msra.mxu0 %v2762
      %3378 = vmatprep.subr.mxu0 0.0
      %3379 = vmatpush1.msra.mxu0 0.0
      %3380 = vmatprep.subr.mxu0 0.0
      %3381 = vmatpush1.msra.mxu0 0.0
      %3382 = vmatprep.subr.mxu0 0.0
      %3383 = vmatpush1.msra.mxu0 0.0
      %3384 = vmatprep.subr.mxu0 0.0
      %3385 = vmatpush1.msra.mxu0 0.0
      %3386 = vmatprep.subr.mxu0 0.0
      %3387 = vmatpush1.msra.mxu0 0.0
      %3388 = vmatprep.subr.mxu0 0.0
      %3389 = vmatpush1.msra.mxu0 0.0
      %3390 = vmatprep.subr.mxu0 0.0
      %3391 = vmatpush1.msra.mxu0 0.0
      %3392 = vmatprep.subr.mxu0 0.0
      %3393 = vmatpush1.msra.mxu0 0.0
      %3394 = vmatprep.subr.mxu0 0.0
      %3395 = vmatpush1.msra.mxu0 0.0
      %3396 = vmatprep.subr.mxu0 0.0
      %3397 = vmatpush1.msra.mxu0 0.0
      %3398 = vmatprep.subr.mxu0 0.0
      %3399 = vmatpush1.msra.mxu0 0.0
      %3400 = vmatprep.subr.mxu0 0.0
      %3401 = vmatpush1.msra.mxu0 0.0
      %3402 = vmatprep.subr.mxu0 0.0
      %3403 = vmatpush1.msra.mxu0 0.0
      %3404 = vmatprep.subr.mxu0 0.0
      %3405 = vmatpush1.msra.mxu0 0.0
      %3406 = vmatprep.subr.mxu0 0.0
      %3407 = vmatpush1.msra.mxu0 0.0
      %3408 = vmatprep.subr.mxu0 0.0
      %3409 = vmatpush1.msra.mxu0 0.0
      %3410 = vmatprep.subr.mxu0 0.0
      %3411 = vmatpush1.msra.mxu0 0.0
      %3412 = vmatprep.subr.mxu0 0.0
      %3413 = vmatpush1.msra.mxu0 0.0
      %3414 = vmatprep.subr.mxu0 0.0
      %3415 = vmatpush1.msra.mxu0 0.0
      %3416 = vmatprep.subr.mxu0 0.0
      %3417 = vmatpush1.msra.mxu0 0.0
      %3418 = vmatprep.subr.mxu0 0.0
      %3419 = vmatpush1.msra.mxu0 0.0
      %3420 = vmatprep.subr.mxu0 0.0
      %3421 = vmatpush1.msra.mxu0 0.0
      %3422 = vmatprep.subr.mxu0 0.0
      %3423 = vmatpush1.msra.mxu0 0.0
      %3424 = vmatprep.subr.mxu0 0.0
      %3425 = vmatpush1.msra.mxu0 0.0
      %3426 = vmatprep.subr.mxu0 0.0
      %3427 = vmatpush1.msra.mxu0 0.0
      %3428 = vmatprep.subr.mxu0 0.0
      %3429 = vmatpush1.msra.mxu0 0.0
      %3430 = vmatprep.subr.mxu0 0.0
      %3431 = vmatpush1.msra.mxu0 0.0
      %3432 = vmatprep.subr.mxu0 0.0
      %3433 = vmatpush1.msra.mxu0 0.0
      %3434 = vmatprep.subr.mxu0 0.0
      %3435 = vmatpush1.msra.mxu0 0.0
      %3436 = vmatprep.subr.mxu0 0.0
      %3437 = vmatpush1.msra.mxu0 0.0
      %3438 = vmatprep.subr.mxu0 0.0
      %3439 = vmatpush1.msra.mxu0 0.0
      %3440 = vmatprep.mubr.f32.mxu0 0.0
      %3441 = vmatmul.mubr.f32.gmra.mrb[0].mxu0 %v476
      %v3442 = vpop.f32.mrb[0].mxu0
      %v3443 = vadd.f32 %v431, %v3442
      %v3444 = vpop.f32.mrb[0].mxu0
      %v3445 = vadd.f32 %v431, %v3444
      %3446 = vmatprep.mubr.f32.mxu0 0.0
      %3447 = vmatmul.mubr.f32.gmra.mrb[0].mxu0 %v479
      %v3448 = vpop.f32.mrb[0].mxu0
      %v3449 = vadd.f32 %v436, %v3448
      %v3450 = vpop.f32.mrb[0].mxu0
      %v3451 = vadd.f32 %v436, %v3450
      %3452 = vmatprep.mubr.f32.mxu0 0.0
      %3453 = vmatmul.mubr.f32.gmra.mrb[0].mxu0 %v482
      %v3454 = vpop.f32.mrb[0].mxu0
      %v3455 = vadd.f32 %v441, %v3454
      %v3456 = vpop.f32.mrb[0].mxu0
      %v3457 = vadd.f32 %v441, %v3456
      %3458 = vmatprep.mubr.f32.mxu0 0.0
      %3459 = vmatmul.mubr.f32.gmra.mrb[0].mxu0 %v485
      %v3460 = vpop.f32.mrb[0].mxu0
      %v3461 = vadd.f32 %v446, %v3460
      %v3462 = vpop.f32.mrb[0].mxu0
      %v3463 = vadd.f32 %v446, %v3462
      %3464 = vmatprep.mubr.f32.mxu0 0.0
      %3465 = vmatmul.mubr.f32.gmra.mrb[0].mxu0 %v488
      %v3466 = vpop.f32.mrb[0].mxu0
      %v3467 = vadd.f32 %v451, %v3466
      %v3468 = vpop.f32.mrb[0].mxu0
      %v3469 = vadd.f32 %v451, %v3468
      %3470 = vmatprep.mubr.f32.mxu0 0.0
      %3471 = vmatmul.mubr.f32.gmra.mrb[0].mxu0 %v491
      %v3472 = vpop.f32.mrb[0].mxu0
      %v3473 = vadd.f32 %v456, %v3472
      %v3474 = vpop.f32.mrb[0].mxu0
      %v3475 = vadd.f32 %v456, %v3474
      %3476 = vdwg.mxu0
      %3477 = vmatprep.subr.mxu0 %v2768
      %3478 = vmatpush1.msra.mxu0 %v2766
      %3479 = vmatprep.subr.mxu0 0.0
      %3480 = vmatpush1.msra.mxu0 0.0
      %3481 = vmatprep.subr.mxu0 0.0
      %3482 = vmatpush1.msra.mxu0 0.0
      %3483 = vmatprep.subr.mxu0 0.0
      %3484 = vmatpush1.msra.mxu0 0.0
      %3485 = vmatprep.subr.mxu0 0.0
      %3486 = vmatpush1.msra.mxu0 0.0
      %3487 = vmatprep.subr.mxu0 0.0
      %3488 = vmatpush1.msra.mxu0 0.0
      %3489 = vmatprep.subr.mxu0 0.0
      %3490 = vmatpush1.msra.mxu0 0.0
      %3491 = vmatprep.subr.mxu0 0.0
      %3492 = vmatpush1.msra.mxu0 0.0
      %3493 = vmatprep.subr.mxu0 0.0
      %3494 = vmatpush1.msra.mxu0 0.0
      %3495 = vmatprep.subr.mxu0 0.0
      %3496 = vmatpush1.msra.mxu0 0.0
      %3497 = vmatprep.subr.mxu0 0.0
      %3498 = vmatpush1.msra.mxu0 0.0
      %3499 = vmatprep.subr.mxu0 0.0
      %3500 = vmatpush1.msra.mxu0 0.0
      %3501 = vmatprep.subr.mxu0 0.0
      %3502 = vmatpush1.msra.mxu0 0.0
      %3503 = vmatprep.subr.mxu0 0.0
      %3504 = vmatpush1.msra.mxu0 0.0
      %3505 = vmatprep.subr.mxu0 0.0
      %3506 = vmatpush1.msra.mxu0 0.0
      %3507 = vmatprep.subr.mxu0 0.0
      %3508 = vmatpush1.msra.mxu0 0.0
      %3509 = vmatprep.subr.mxu0 0.0
      %3510 = vmatpush1.msra.mxu0 0.0
      %3511 = vmatprep.subr.mxu0 0.0
      %3512 = vmatpush1.msra.mxu0 0.0
      %3513 = vmatprep.subr.mxu0 0.0
      %3514 = vmatpush1.msra.mxu0 0.0
      %3515 = vmatprep.subr.mxu0 0.0
      %3516 = vmatpush1.msra.mxu0 0.0
      %3517 = vmatprep.subr.mxu0 0.0
      %3518 = vmatpush1.msra.mxu0 0.0
      %3519 = vmatprep.subr.mxu0 0.0
      %3520 = vmatpush1.msra.mxu0 0.0
      %3521 = vmatprep.subr.mxu0 0.0
      %3522 = vmatpush1.msra.mxu0 0.0
      %3523 = vmatprep.subr.mxu0 0.0
      %3524 = vmatpush1.msra.mxu0 0.0
      %3525 = vmatprep.subr.mxu0 0.0
      %3526 = vmatpush1.msra.mxu0 0.0
      %3527 = vmatprep.subr.mxu0 0.0
      %3528 = vmatpush1.msra.mxu0 0.0
      %3529 = vmatprep.subr.mxu0 0.0
      %3530 = vmatpush1.msra.mxu0 0.0
      %3531 = vmatprep.subr.mxu0 0.0
      %3532 = vmatpush1.msra.mxu0 0.0
      %3533 = vmatprep.subr.mxu0 0.0
      %3534 = vmatpush1.msra.mxu0 0.0
      %3535 = vmatprep.subr.mxu0 0.0
      %3536 = vmatpush1.msra.mxu0 0.0
      %3537 = vmatprep.subr.mxu0 0.0
      %3538 = vmatpush1.msra.mxu0 0.0
      %3539 = vmatprep.subr.mxu0 0.0
      %3540 = vmatpush1.msra.mxu0 0.0
      %3541 = vmatprep.mubr.f32.mxu0 0.0
      %3542 = vmatmul.mubr.f32.gmra.mrb[0].mxu0 %v476
      %v3543 = vpop.f32.mrb[0].mxu0
      %v3544 = vadd.f32 %v431, %v3543
      %v3545 = vpop.f32.mrb[0].mxu0
      %v3546 = vadd.f32 %v431, %v3545
      %3547 = vmatprep.mubr.f32.mxu0 0.0
      %3548 = vmatmul.mubr.f32.gmra.mrb[0].mxu0 %v479
      %v3549 = vpop.f32.mrb[0].mxu0
      %v3550 = vadd.f32 %v436, %v3549
      %v3551 = vpop.f32.mrb[0].mxu0
      %v3552 = vadd.f32 %v436, %v3551
      %3553 = vmatprep.mubr.f32.mxu0 0.0
      %3554 = vmatmul.mubr.f32.gmra.mrb[0].mxu0 %v482
      %v3555 = vpop.f32.mrb[0].mxu0
      %v3556 = vadd.f32 %v441, %v3555
      %v3557 = vpop.f32.mrb[0].mxu0
      %v3558 = vadd.f32 %v441, %v3557
      %3559 = vmatprep.mubr.f32.mxu0 0.0
      %3560 = vmatmul.mubr.f32.gmra.mrb[0].mxu0 %v485
      %v3561 = vpop.f32.mrb[0].mxu0
      %v3562 = vadd.f32 %v446, %v3561
      %v3563 = vpop.f32.mrb[0].mxu0
      %v3564 = vadd.f32 %v446, %v3563
      %3565 = vmatprep.mubr.f32.mxu0 0.0
      %3566 = vmatmul.mubr.f32.gmra.mrb[0].mxu0 %v488
      %v3567 = vpop.f32.mrb[0].mxu0
      %v3568 = vadd.f32 %v451, %v3567
      %v3569 = vpop.f32.mrb[0].mxu0
      %v3570 = vadd.f32 %v451, %v3569
      %3571 = vmatprep.mubr.f32.mxu0 0.0
      %3572 = vmatmul.mubr.f32.gmra.mrb[0].mxu0 %v491
      %v3573 = vpop.f32.mrb[0].mxu0
      %v3574 = vadd.f32 %v456, %v3573
      %v3575 = vpop.f32.mrb[0].mxu0
      %v3576 = vadd.f32 %v456, %v3575
      %3577 = vdwg.mxu0
      %v3578 = vmax.f32 %v2837, 0.0
      %v3579 = vmax.f32 %v2839, 0.0
      %v3580 = vmax.f32 %v2938, 0.0
      %v3581 = vmax.f32 %v2940, 0.0
      %v3582 = vmax.f32 %v3039, 0.0
      %v3583 = vmax.f32 %v3041, 0.0
      %v3584 = vmax.f32 %v3140, 0.0
      %v3585 = vmax.f32 %v3142, 0.0
      %v3586 = vmax.f32 %v3241, 0.0
      %v3587 = vmax.f32 %v3243, 0.0
      %v3588 = vmax.f32 %v3342, 0.0
      %v3589 = vmax.f32 %v3344, 0.0
      %v3590 = vmax.f32 %v3443, 0.0
      %v3591 = vmax.f32 %v3445, 0.0
      %v3592 = vmax.f32 %v3544, 0.0
      %v3593 = vmax.f32 %v3546, 0.0
      %v3594 = vmax.f32 %v2843, 0.0
      %v3595 = vmax.f32 %v2845, 0.0
      %v3596 = vmax.f32 %v2944, 0.0
      %v3597 = vmax.f32 %v2946, 0.0
      %v3598 = vmax.f32 %v3045, 0.0
      %v3599 = vmax.f32 %v3047, 0.0
      %v3600 = vmax.f32 %v3146, 0.0
      %v3601 = vmax.f32 %v3148, 0.0
      %v3602 = vmax.f32 %v3247, 0.0
      %v3603 = vmax.f32 %v3249, 0.0
      %v3604 = vmax.f32 %v3348, 0.0
      %v3605 = vmax.f32 %v3350, 0.0
      %v3606 = vmax.f32 %v3449, 0.0
      %v3607 = vmax.f32 %v3451, 0.0
      %v3608 = vmax.f32 %v3550, 0.0
      %v3609 = vmax.f32 %v3552, 0.0
      %v3610 = vmax.f32 %v2849, 0.0
      %v3611 = vmax.f32 %v2851, 0.0
      %v3612 = vmax.f32 %v2950, 0.0
      %v3613 = vmax.f32 %v2952, 0.0
      %v3614 = vmax.f32 %v3051, 0.0
      %v3615 = vmax.f32 %v3053, 0.0
      %v3616 = vmax.f32 %v3152, 0.0
      %v3617 = vmax.f32 %v3154, 0.0
      %v3618 = vmax.f32 %v3253, 0.0
      %v3619 = vmax.f32 %v3255, 0.0
      %v3620 = vmax.f32 %v3354, 0.0
      %v3621 = vmax.f32 %v3356, 0.0
      %v3622 = vmax.f32 %v3455, 0.0
      %v3623 = vmax.f32 %v3457, 0.0
      %v3624 = vmax.f32 %v3556, 0.0
      %v3625 = vmax.f32 %v3558, 0.0
      %v3626 = vmax.f32 %v2855, 0.0
      %v3627 = vmax.f32 %v2857, 0.0
      %v3628 = vmax.f32 %v2956, 0.0
      %v3629 = vmax.f32 %v2958, 0.0
      %v3630 = vmax.f32 %v3057, 0.0
      %v3631 = vmax.f32 %v3059, 0.0
      %v3632 = vmax.f32 %v3158, 0.0
      %v3633 = vmax.f32 %v3160, 0.0
      %v3634 = vmax.f32 %v3259, 0.0
      %v3635 = vmax.f32 %v3261, 0.0
      %v3636 = vmax.f32 %v3360, 0.0
      %v3637 = vmax.f32 %v3362, 0.0
      %v3638 = vmax.f32 %v3461, 0.0
      %v3639 = vmax.f32 %v3463, 0.0
      %v3640 = vmax.f32 %v3562, 0.0
      %v3641 = vmax.f32 %v3564, 0.0
      %v3642 = vmax.f32 %v2861, 0.0
      %v3643 = vmax.f32 %v2863, 0.0
      %v3644 = vmax.f32 %v2962, 0.0
      %v3645 = vmax.f32 %v2964, 0.0
      %v3646 = vmax.f32 %v3063, 0.0
      %v3647 = vmax.f32 %v3065, 0.0
      %v3648 = vmax.f32 %v3164, 0.0
      %v3649 = vmax.f32 %v3166, 0.0
      %v3650 = vmax.f32 %v3265, 0.0
      %v3651 = vmax.f32 %v3267, 0.0
      %v3652 = vmax.f32 %v3366, 0.0
      %v3653 = vmax.f32 %v3368, 0.0
      %v3654 = vmax.f32 %v3467, 0.0
      %v3655 = vmax.f32 %v3469, 0.0
      %v3656 = vmax.f32 %v3568, 0.0
      %v3657 = vmax.f32 %v3570, 0.0
      %v3658 = vmax.f32 %v2867, 0.0
      %v3659 = vmax.f32 %v2869, 0.0
      %v3660 = vmax.f32 %v2968, 0.0
      %v3661 = vmax.f32 %v2970, 0.0
      %v3662 = vmax.f32 %v3069, 0.0
      %v3663 = vmax.f32 %v3071, 0.0
      %v3664 = vmax.f32 %v3170, 0.0
      %v3665 = vmax.f32 %v3172, 0.0
      %v3666 = vmax.f32 %v3271, 0.0
      %v3667 = vmax.f32 %v3273, 0.0
      %v3668 = vmax.f32 %v3372, 0.0
      %v3669 = vmax.f32 %v3374, 0.0
      %v3670 = vmax.f32 %v3473, 0.0
      %v3671 = vmax.f32 %v3475, 0.0
      %v3672 = vmax.f32 %v3574, 0.0
      %v3673 = vmax.f32 %v3576, 0.0
      %3674 = vmatprep.subr.mxu0 %v2740
      %3675 = vmatpush1.msra.mxu0 %v2738
      %3676 = vmatprep.subr.mxu0 0.0
      %3677 = vmatpush1.msra.mxu0 0.0
      %3678 = vmatprep.subr.mxu0 0.0
      %3679 = vmatpush1.msra.mxu0 0.0
      %3680 = vmatprep.subr.mxu0 0.0
      %3681 = vmatpush1.msra.mxu0 0.0
      %3682 = vmatprep.subr.mxu0 0.0
      %3683 = vmatpush1.msra.mxu0 0.0
      %3684 = vmatprep.subr.mxu0 0.0
      %3685 = vmatpush1.msra.mxu0 0.0
      %3686 = vmatprep.subr.mxu0 0.0
      %3687 = vmatpush1.msra.mxu0 0.0
      %3688 = vmatprep.subr.mxu0 0.0
      %3689 = vmatpush1.msra.mxu0 0.0
      %3690 = vmatprep.subr.mxu0 0.0
      %3691 = vmatpush1.msra.mxu0 0.0
      %3692 = vmatprep.subr.mxu0 0.0
      %3693 = vmatpush1.msra.mxu0 0.0
      %3694 = vmatprep.subr.mxu0 0.0
      %3695 = vmatpush1.msra.mxu0 0.0
      %3696 = vmatprep.subr.mxu0 0.0
      %3697 = vmatpush1.msra.mxu0 0.0
      %3698 = vmatprep.subr.mxu0 0.0
      %3699 = vmatpush1.msra.mxu0 0.0
      %3700 = vmatprep.subr.mxu0 0.0
      %3701 = vmatpush1.msra.mxu0 0.0
      %3702 = vmatprep.subr.mxu0 0.0
      %3703 = vmatpush1.msra.mxu0 0.0
      %3704 = vmatprep.subr.mxu0 0.0
      %3705 = vmatpush1.msra.mxu0 0.0
      %3706 = vmatprep.subr.mxu0 0.0
      %3707 = vmatpush1.msra.mxu0 0.0
      %3708 = vmatprep.subr.mxu0 0.0
      %3709 = vmatpush1.msra.mxu0 0.0
      %3710 = vmatprep.subr.mxu0 0.0
      %3711 = vmatpush1.msra.mxu0 0.0
      %3712 = vmatprep.subr.mxu0 0.0
      %3713 = vmatpush1.msra.mxu0 0.0
      %3714 = vmatprep.subr.mxu0 0.0
      %3715 = vmatpush1.msra.mxu0 0.0
      %3716 = vmatprep.subr.mxu0 0.0
      %3717 = vmatpush1.msra.mxu0 0.0
      %3718 = vmatprep.subr.mxu0 0.0
      %3719 = vmatpush1.msra.mxu0 0.0
      %3720 = vmatprep.subr.mxu0 0.0
      %3721 = vmatpush1.msra.mxu0 0.0
      %3722 = vmatprep.subr.mxu0 0.0
      %3723 = vmatpush1.msra.mxu0 0.0
      %3724 = vmatprep.subr.mxu0 0.0
      %3725 = vmatpush1.msra.mxu0 0.0
      %3726 = vmatprep.subr.mxu0 0.0
      %3727 = vmatpush1.msra.mxu0 0.0
      %3728 = vmatprep.subr.mxu0 0.0
      %3729 = vmatpush1.msra.mxu0 0.0
      %3730 = vmatprep.subr.mxu0 0.0
      %3731 = vmatpush1.msra.mxu0 0.0
      %3732 = vmatprep.subr.mxu0 0.0
      %3733 = vmatpush1.msra.mxu0 0.0
      %3734 = vmatprep.subr.mxu0 0.0
      %3735 = vmatpush1.msra.mxu0 0.0
      %3736 = vmatprep.subr.mxu0 0.0
      %3737 = vmatpush1.msra.mxu0 0.0
      %3738 = vmatprep.mubr.f32.mxu0 0.0
      %3739 = vmatmul.mubr.f32.gmra.mrb[0].mxu0 %v1431
      %v3740 = vpop.f32.mrb[0].mxu0
      %v3741 = vadd.f32 0.0, %v3740
      %v3742 = vpop.f32.mrb[0].mxu0
      %v3743 = vadd.f32 0.0, %v3742
      %3744 = vdwg.mxu0
      %3745 = vmatprep.subr.mxu0 %v2744
      %3746 = vmatpush1.msra.mxu0 %v2742
      %3747 = vmatprep.subr.mxu0 0.0
      %3748 = vmatpush1.msra.mxu0 0.0
      %3749 = vmatprep.subr.mxu0 0.0
      %3750 = vmatpush1.msra.mxu0 0.0
      %3751 = vmatprep.subr.mxu0 0.0
      %3752 = vmatpush1.msra.mxu0 0.0
      %3753 = vmatprep.subr.mxu0 0.0
      %3754 = vmatpush1.msra.mxu0 0.0
      %3755 = vmatprep.subr.mxu0 0.0
      %3756 = vmatpush1.msra.mxu0 0.0
      %3757 = vmatprep.subr.mxu0 0.0
      %3758 = vmatpush1.msra.mxu0 0.0
      %3759 = vmatprep.subr.mxu0 0.0
      %3760 = vmatpush1.msra.mxu0 0.0
      %3761 = vmatprep.subr.mxu0 0.0
      %3762 = vmatpush1.msra.mxu0 0.0
      %3763 = vmatprep.subr.mxu0 0.0
      %3764 = vmatpush1.msra.mxu0 0.0
      %3765 = vmatprep.subr.mxu0 0.0
      %3766 = vmatpush1.msra.mxu0 0.0
      %3767 = vmatprep.subr.mxu0 0.0
      %3768 = vmatpush1.msra.mxu0 0.0
      %3769 = vmatprep.subr.mxu0 0.0
      %3770 = vmatpush1.msra.mxu0 0.0
      %3771 = vmatprep.subr.mxu0 0.0
      %3772 = vmatpush1.msra.mxu0 0.0
      %3773 = vmatprep.subr.mxu0 0.0
      %3774 = vmatpush1.msra.mxu0 0.0
      %3775 = vmatprep.subr.mxu0 0.0
      %3776 = vmatpush1.msra.mxu0 0.0
      %3777 = vmatprep.subr.mxu0 0.0
      %3778 = vmatpush1.msra.mxu0 0.0
      %3779 = vmatprep.subr.mxu0 0.0
      %3780 = vmatpush1.msra.mxu0 0.0
      %3781 = vmatprep.subr.mxu0 0.0
      %3782 = vmatpush1.msra.mxu0 0.0
      %3783 = vmatprep.subr.mxu0 0.0
      %3784 = vmatpush1.msra.mxu0 0.0
      %3785 = vmatprep.subr.mxu0 0.0
      %3786 = vmatpush1.msra.mxu0 0.0
      %3787 = vmatprep.subr.mxu0 0.0
      %3788 = vmatpush1.msra.mxu0 0.0
      %3789 = vmatprep.subr.mxu0 0.0
      %3790 = vmatpush1.msra.mxu0 0.0
      %3791 = vmatprep.subr.mxu0 0.0
      %3792 = vmatpush1.msra.mxu0 0.0
      %3793 = vmatprep.subr.mxu0 0.0
      %3794 = vmatpush1.msra.mxu0 0.0
      %3795 = vmatprep.subr.mxu0 0.0
      %3796 = vmatpush1.msra.mxu0 0.0
      %3797 = vmatprep.subr.mxu0 0.0
      %3798 = vmatpush1.msra.mxu0 0.0
      %3799 = vmatprep.subr.mxu0 0.0
      %3800 = vmatpush1.msra.mxu0 0.0
      %3801 = vmatprep.subr.mxu0 0.0
      %3802 = vmatpush1.msra.mxu0 0.0
      %3803 = vmatprep.subr.mxu0 0.0
      %3804 = vmatpush1.msra.mxu0 0.0
      %3805 = vmatprep.subr.mxu0 0.0
      %3806 = vmatpush1.msra.mxu0 0.0
      %3807 = vmatprep.subr.mxu0 0.0
      %3808 = vmatpush1.msra.mxu0 0.0
      %3809 = vmatprep.mubr.f32.mxu0 0.0
      %3810 = vmatmul.mubr.f32.gmra.mrb[0].mxu0 %v1431
      %v3811 = vpop.f32.mrb[0].mxu0
      %v3812 = vadd.f32 0.0, %v3811
      %v3813 = vpop.f32.mrb[0].mxu0
      %v3814 = vadd.f32 0.0, %v3813
      %3815 = vdwg.mxu0
      %3816 = vmatprep.subr.mxu0 %v2748
      %3817 = vmatpush1.msra.mxu0 %v2746
      %3818 = vmatprep.subr.mxu0 0.0
      %3819 = vmatpush1.msra.mxu0 0.0
      %3820 = vmatprep.subr.mxu0 0.0
      %3821 = vmatpush1.msra.mxu0 0.0
      %3822 = vmatprep.subr.mxu0 0.0
      %3823 = vmatpush1.msra.mxu0 0.0
      %3824 = vmatprep.subr.mxu0 0.0
      %3825 = vmatpush1.msra.mxu0 0.0
      %3826 = vmatprep.subr.mxu0 0.0
      %3827 = vmatpush1.msra.mxu0 0.0
      %3828 = vmatprep.subr.mxu0 0.0
      %3829 = vmatpush1.msra.mxu0 0.0
      %3830 = vmatprep.subr.mxu0 0.0
      %3831 = vmatpush1.msra.mxu0 0.0
      %3832 = vmatprep.subr.mxu0 0.0
      %3833 = vmatpush1.msra.mxu0 0.0
      %3834 = vmatprep.subr.mxu0 0.0
      %3835 = vmatpush1.msra.mxu0 0.0
      %3836 = vmatprep.subr.mxu0 0.0
      %3837 = vmatpush1.msra.mxu0 0.0
      %3838 = vmatprep.subr.mxu0 0.0
      %3839 = vmatpush1.msra.mxu0 0.0
      %3840 = vmatprep.subr.mxu0 0.0
      %3841 = vmatpush1.msra.mxu0 0.0
      %3842 = vmatprep.subr.mxu0 0.0
      %3843 = vmatpush1.msra.mxu0 0.0
      %3844 = vmatprep.subr.mxu0 0.0
      %3845 = vmatpush1.msra.mxu0 0.0
      %3846 = vmatprep.subr.mxu0 0.0
      %3847 = vmatpush1.msra.mxu0 0.0
      %3848 = vmatprep.subr.mxu0 0.0
      %3849 = vmatpush1.msra.mxu0 0.0
      %3850 = vmatprep.subr.mxu0 0.0
      %3851 = vmatpush1.msra.mxu0 0.0
      %3852 = vmatprep.subr.mxu0 0.0
      %3853 = vmatpush1.msra.mxu0 0.0
      %3854 = vmatprep.subr.mxu0 0.0
      %3855 = vmatpush1.msra.mxu0 0.0
      %3856 = vmatprep.subr.mxu0 0.0
      %3857 = vmatpush1.msra.mxu0 0.0
      %3858 = vmatprep.subr.mxu0 0.0
      %3859 = vmatpush1.msra.mxu0 0.0
      %3860 = vmatprep.subr.mxu0 0.0
      %3861 = vmatpush1.msra.mxu0 0.0
      %3862 = vmatprep.subr.mxu0 0.0
      %3863 = vmatpush1.msra.mxu0 0.0
      %3864 = vmatprep.subr.mxu0 0.0
      %3865 = vmatpush1.msra.mxu0 0.0
      %3866 = vmatprep.subr.mxu0 0.0
      %3867 = vmatpush1.msra.mxu0 0.0
      %3868 = vmatprep.subr.mxu0 0.0
      %3869 = vmatpush1.msra.mxu0 0.0
      %3870 = vmatprep.subr.mxu0 0.0
      %3871 = vmatpush1.msra.mxu0 0.0
      %3872 = vmatprep.subr.mxu0 0.0
      %3873 = vmatpush1.msra.mxu0 0.0
      %3874 = vmatprep.subr.mxu0 0.0
      %3875 = vmatpush1.msra.mxu0 0.0
      %3876 = vmatprep.subr.mxu0 0.0
      %3877 = vmatpush1.msra.mxu0 0.0
      %3878 = vmatprep.subr.mxu0 0.0
      %3879 = vmatpush1.msra.mxu0 0.0
      %3880 = vmatprep.mubr.f32.mxu0 0.0
      %3881 = vmatmul.mubr.f32.gmra.mrb[0].mxu0 %v1431
      %v3882 = vpop.f32.mrb[0].mxu0
      %v3883 = vadd.f32 0.0, %v3882
      %v3884 = vpop.f32.mrb[0].mxu0
      %v3885 = vadd.f32 0.0, %v3884
      %3886 = vdwg.mxu0
      %3887 = vmatprep.subr.mxu0 %v2752
      %3888 = vmatpush1.msra.mxu0 %v2750
      %3889 = vmatprep.subr.mxu0 0.0
      %3890 = vmatpush1.msra.mxu0 0.0
      %3891 = vmatprep.subr.mxu0 0.0
      %3892 = vmatpush1.msra.mxu0 0.0
      %3893 = vmatprep.subr.mxu0 0.0
      %3894 = vmatpush1.msra.mxu0 0.0
      %3895 = vmatprep.subr.mxu0 0.0
      %3896 = vmatpush1.msra.mxu0 0.0
      %3897 = vmatprep.subr.mxu0 0.0
      %3898 = vmatpush1.msra.mxu0 0.0
      %3899 = vmatprep.subr.mxu0 0.0
      %3900 = vmatpush1.msra.mxu0 0.0
      %3901 = vmatprep.subr.mxu0 0.0
      %3902 = vmatpush1.msra.mxu0 0.0
      %3903 = vmatprep.subr.mxu0 0.0
      %3904 = vmatpush1.msra.mxu0 0.0
      %3905 = vmatprep.subr.mxu0 0.0
      %3906 = vmatpush1.msra.mxu0 0.0
      %3907 = vmatprep.subr.mxu0 0.0
      %3908 = vmatpush1.msra.mxu0 0.0
      %3909 = vmatprep.subr.mxu0 0.0
      %3910 = vmatpush1.msra.mxu0 0.0
      %3911 = vmatprep.subr.mxu0 0.0
      %3912 = vmatpush1.msra.mxu0 0.0
      %3913 = vmatprep.subr.mxu0 0.0
      %3914 = vmatpush1.msra.mxu0 0.0
      %3915 = vmatprep.subr.mxu0 0.0
      %3916 = vmatpush1.msra.mxu0 0.0
      %3917 = vmatprep.subr.mxu0 0.0
      %3918 = vmatpush1.msra.mxu0 0.0
      %3919 = vmatprep.subr.mxu0 0.0
      %3920 = vmatpush1.msra.mxu0 0.0
      %3921 = vmatprep.subr.mxu0 0.0
      %3922 = vmatpush1.msra.mxu0 0.0
      %3923 = vmatprep.subr.mxu0 0.0
      %3924 = vmatpush1.msra.mxu0 0.0
      %3925 = vmatprep.subr.mxu0 0.0
      %3926 = vmatpush1.msra.mxu0 0.0
      %3927 = vmatprep.subr.mxu0 0.0
      %3928 = vmatpush1.msra.mxu0 0.0
      %3929 = vmatprep.subr.mxu0 0.0
      %3930 = vmatpush1.msra.mxu0 0.0
      %3931 = vmatprep.subr.mxu0 0.0
      %3932 = vmatpush1.msra.mxu0 0.0
      %3933 = vmatprep.subr.mxu0 0.0
      %3934 = vmatpush1.msra.mxu0 0.0
      %3935 = vmatprep.subr.mxu0 0.0
      %3936 = vmatpush1.msra.mxu0 0.0
      %3937 = vmatprep.subr.mxu0 0.0
      %3938 = vmatpush1.msra.mxu0 0.0
      %3939 = vmatprep.subr.mxu0 0.0
      %3940 = vmatpush1.msra.mxu0 0.0
      %3941 = vmatprep.subr.mxu0 0.0
      %3942 = vmatpush1.msra.mxu0 0.0
      %3943 = vmatprep.subr.mxu0 0.0
      %3944 = vmatpush1.msra.mxu0 0.0
      %3945 = vmatprep.subr.mxu0 0.0
      %3946 = vmatpush1.msra.mxu0 0.0
      %3947 = vmatprep.subr.mxu0 0.0
      %3948 = vmatpush1.msra.mxu0 0.0
      %3949 = vmatprep.subr.mxu0 0.0
      %3950 = vmatpush1.msra.mxu0 0.0
      %3951 = vmatprep.mubr.f32.mxu0 0.0
      %3952 = vmatmul.mubr.f32.gmra.mrb[0].mxu0 %v1431
      %v3953 = vpop.f32.mrb[0].mxu0
      %v3954 = vadd.f32 0.0, %v3953
      %v3955 = vpop.f32.mrb[0].mxu0
      %v3956 = vadd.f32 0.0, %v3955
      %3957 = vdwg.mxu0
      %3958 = vmatprep.subr.mxu0 %v2756
      %3959 = vmatpush1.msra.mxu0 %v2754
      %3960 = vmatprep.subr.mxu0 0.0
      %3961 = vmatpush1.msra.mxu0 0.0
      %3962 = vmatprep.subr.mxu0 0.0
      %3963 = vmatpush1.msra.mxu0 0.0
      %3964 = vmatprep.subr.mxu0 0.0
      %3965 = vmatpush1.msra.mxu0 0.0
      %3966 = vmatprep.subr.mxu0 0.0
      %3967 = vmatpush1.msra.mxu0 0.0
      %3968 = vmatprep.subr.mxu0 0.0
      %3969 = vmatpush1.msra.mxu0 0.0
      %3970 = vmatprep.subr.mxu0 0.0
      %3971 = vmatpush1.msra.mxu0 0.0
      %3972 = vmatprep.subr.mxu0 0.0
      %3973 = vmatpush1.msra.mxu0 0.0
      %3974 = vmatprep.subr.mxu0 0.0
      %3975 = vmatpush1.msra.mxu0 0.0
      %3976 = vmatprep.subr.mxu0 0.0
      %3977 = vmatpush1.msra.mxu0 0.0
      %3978 = vmatprep.subr.mxu0 0.0
      %3979 = vmatpush1.msra.mxu0 0.0
      %3980 = vmatprep.subr.mxu0 0.0
      %3981 = vmatpush1.msra.mxu0 0.0
      %3982 = vmatprep.subr.mxu0 0.0
      %3983 = vmatpush1.msra.mxu0 0.0
      %3984 = vmatprep.subr.mxu0 0.0
      %3985 = vmatpush1.msra.mxu0 0.0
      %3986 = vmatprep.subr.mxu0 0.0
      %3987 = vmatpush1.msra.mxu0 0.0
      %3988 = vmatprep.subr.mxu0 0.0
      %3989 = vmatpush1.msra.mxu0 0.0
      %3990 = vmatprep.subr.mxu0 0.0
      %3991 = vmatpush1.msra.mxu0 0.0
      %3992 = vmatprep.subr.mxu0 0.0
      %3993 = vmatpush1.msra.mxu0 0.0
      %3994 = vmatprep.subr.mxu0 0.0
      %3995 = vmatpush1.msra.mxu0 0.0
      %3996 = vmatprep.subr.mxu0 0.0
      %3997 = vmatpush1.msra.mxu0 0.0
      %3998 = vmatprep.subr.mxu0 0.0
      %3999 = vmatpush1.msra.mxu0 0.0
      %4000 = vmatprep.subr.mxu0 0.0
      %4001 = vmatpush1.msra.mxu0 0.0
      %4002 = vmatprep.subr.mxu0 0.0
      %4003 = vmatpush1.msra.mxu0 0.0
      %4004 = vmatprep.subr.mxu0 0.0
      %4005 = vmatpush1.msra.mxu0 0.0
      %4006 = vmatprep.subr.mxu0 0.0
      %4007 = vmatpush1.msra.mxu0 0.0
      %4008 = vmatprep.subr.mxu0 0.0
      %4009 = vmatpush1.msra.mxu0 0.0
      %4010 = vmatprep.subr.mxu0 0.0
      %4011 = vmatpush1.msra.mxu0 0.0
      %4012 = vmatprep.subr.mxu0 0.0
      %4013 = vmatpush1.msra.mxu0 0.0
      %4014 = vmatprep.subr.mxu0 0.0
      %4015 = vmatpush1.msra.mxu0 0.0
      %4016 = vmatprep.subr.mxu0 0.0
      %4017 = vmatpush1.msra.mxu0 0.0
      %4018 = vmatprep.subr.mxu0 0.0
      %4019 = vmatpush1.msra.mxu0 0.0
      %4020 = vmatprep.subr.mxu0 0.0
      %4021 = vmatpush1.msra.mxu0 0.0
      %4022 = vmatprep.mubr.f32.mxu0 0.0
      %4023 = vmatmul.mubr.f32.gmra.mrb[0].mxu0 %v1431
      %v4024 = vpop.f32.mrb[0].mxu0
      %v4025 = vadd.f32 0.0, %v4024
      %v4026 = vpop.f32.mrb[0].mxu0
      %v4027 = vadd.f32 0.0, %v4026
      %4028 = vdwg.mxu0
      %4029 = vmatprep.subr.mxu0 %v2760
      %4030 = vmatpush1.msra.mxu0 %v2758
      %4031 = vmatprep.subr.mxu0 0.0
      %4032 = vmatpush1.msra.mxu0 0.0
      %4033 = vmatprep.subr.mxu0 0.0
      %4034 = vmatpush1.msra.mxu0 0.0
      %4035 = vmatprep.subr.mxu0 0.0
      %4036 = vmatpush1.msra.mxu0 0.0
      %4037 = vmatprep.subr.mxu0 0.0
      %4038 = vmatpush1.msra.mxu0 0.0
      %4039 = vmatprep.subr.mxu0 0.0
      %4040 = vmatpush1.msra.mxu0 0.0
      %4041 = vmatprep.subr.mxu0 0.0
      %4042 = vmatpush1.msra.mxu0 0.0
      %4043 = vmatprep.subr.mxu0 0.0
      %4044 = vmatpush1.msra.mxu0 0.0
      %4045 = vmatprep.subr.mxu0 0.0
      %4046 = vmatpush1.msra.mxu0 0.0
      %4047 = vmatprep.subr.mxu0 0.0
      %4048 = vmatpush1.msra.mxu0 0.0
      %4049 = vmatprep.subr.mxu0 0.0
      %4050 = vmatpush1.msra.mxu0 0.0
      %4051 = vmatprep.subr.mxu0 0.0
      %4052 = vmatpush1.msra.mxu0 0.0
      %4053 = vmatprep.subr.mxu0 0.0
      %4054 = vmatpush1.msra.mxu0 0.0
      %4055 = vmatprep.subr.mxu0 0.0
      %4056 = vmatpush1.msra.mxu0 0.0
      %4057 = vmatprep.subr.mxu0 0.0
      %4058 = vmatpush1.msra.mxu0 0.0
      %4059 = vmatprep.subr.mxu0 0.0
      %4060 = vmatpush1.msra.mxu0 0.0
      %4061 = vmatprep.subr.mxu0 0.0
      %4062 = vmatpush1.msra.mxu0 0.0
      %4063 = vmatprep.subr.mxu0 0.0
      %4064 = vmatpush1.msra.mxu0 0.0
      %4065 = vmatprep.subr.mxu0 0.0
      %4066 = vmatpush1.msra.mxu0 0.0
      %4067 = vmatprep.subr.mxu0 0.0
      %4068 = vmatpush1.msra.mxu0 0.0
      %4069 = vmatprep.subr.mxu0 0.0
      %4070 = vmatpush1.msra.mxu0 0.0
      %4071 = vmatprep.subr.mxu0 0.0
      %4072 = vmatpush1.msra.mxu0 0.0
      %4073 = vmatprep.subr.mxu0 0.0
      %4074 = vmatpush1.msra.mxu0 0.0
      %4075 = vmatprep.subr.mxu0 0.0
      %4076 = vmatpush1.msra.mxu0 0.0
      %4077 = vmatprep.subr.mxu0 0.0
      %4078 = vmatpush1.msra.mxu0 0.0
      %4079 = vmatprep.subr.mxu0 0.0
      %4080 = vmatpush1.msra.mxu0 0.0
      %4081 = vmatprep.subr.mxu0 0.0
      %4082 = vmatpush1.msra.mxu0 0.0
      %4083 = vmatprep.subr.mxu0 0.0
      %4084 = vmatpush1.msra.mxu0 0.0
      %4085 = vmatprep.subr.mxu0 0.0
      %4086 = vmatpush1.msra.mxu0 0.0
      %4087 = vmatprep.subr.mxu0 0.0
      %4088 = vmatpush1.msra.mxu0 0.0
      %4089 = vmatprep.subr.mxu0 0.0
      %4090 = vmatpush1.msra.mxu0 0.0
      %4091 = vmatprep.subr.mxu0 0.0
      %4092 = vmatpush1.msra.mxu0 0.0
      %4093 = vmatprep.mubr.f32.mxu0 0.0
      %4094 = vmatmul.mubr.f32.gmra.mrb[0].mxu0 %v1431
      %v4095 = vpop.f32.mrb[0].mxu0
      %v4096 = vadd.f32 0.0, %v4095
      %v4097 = vpop.f32.mrb[0].mxu0
      %v4098 = vadd.f32 0.0, %v4097
      %4099 = vdwg.mxu0
      %4100 = vmatprep.subr.mxu0 %v2764
      %4101 = vmatpush1.msra.mxu0 %v2762
      %4102 = vmatprep.subr.mxu0 0.0
      %4103 = vmatpush1.msra.mxu0 0.0
      %4104 = vmatprep.subr.mxu0 0.0
      %4105 = vmatpush1.msra.mxu0 0.0
      %4106 = vmatprep.subr.mxu0 0.0
      %4107 = vmatpush1.msra.mxu0 0.0
      %4108 = vmatprep.subr.mxu0 0.0
      %4109 = vmatpush1.msra.mxu0 0.0
      %4110 = vmatprep.subr.mxu0 0.0
      %4111 = vmatpush1.msra.mxu0 0.0
      %4112 = vmatprep.subr.mxu0 0.0
      %4113 = vmatpush1.msra.mxu0 0.0
      %4114 = vmatprep.subr.mxu0 0.0
      %4115 = vmatpush1.msra.mxu0 0.0
      %4116 = vmatprep.subr.mxu0 0.0
      %4117 = vmatpush1.msra.mxu0 0.0
      %4118 = vmatprep.subr.mxu0 0.0
      %4119 = vmatpush1.msra.mxu0 0.0
      %4120 = vmatprep.subr.mxu0 0.0
      %4121 = vmatpush1.msra.mxu0 0.0
      %4122 = vmatprep.subr.mxu0 0.0
      %4123 = vmatpush1.msra.mxu0 0.0
      %4124 = vmatprep.subr.mxu0 0.0
      %4125 = vmatpush1.msra.mxu0 0.0
      %4126 = vmatprep.subr.mxu0 0.0
      %4127 = vmatpush1.msra.mxu0 0.0
      %4128 = vmatprep.subr.mxu0 0.0
      %4129 = vmatpush1.msra.mxu0 0.0
      %4130 = vmatprep.subr.mxu0 0.0
      %4131 = vmatpush1.msra.mxu0 0.0
      %4132 = vmatprep.subr.mxu0 0.0
      %4133 = vmatpush1.msra.mxu0 0.0
      %4134 = vmatprep.subr.mxu0 0.0
      %4135 = vmatpush1.msra.mxu0 0.0
      %4136 = vmatprep.subr.mxu0 0.0
      %4137 = vmatpush1.msra.mxu0 0.0
      %4138 = vmatprep.subr.mxu0 0.0
      %4139 = vmatpush1.msra.mxu0 0.0
      %4140 = vmatprep.subr.mxu0 0.0
      %4141 = vmatpush1.msra.mxu0 0.0
      %4142 = vmatprep.subr.mxu0 0.0
      %4143 = vmatpush1.msra.mxu0 0.0
      %4144 = vmatprep.subr.mxu0 0.0
      %4145 = vmatpush1.msra.mxu0 0.0
      %4146 = vmatprep.subr.mxu0 0.0
      %4147 = vmatpush1.msra.mxu0 0.0
      %4148 = vmatprep.subr.mxu0 0.0
      %4149 = vmatpush1.msra.mxu0 0.0
      %4150 = vmatprep.subr.mxu0 0.0
      %4151 = vmatpush1.msra.mxu0 0.0
      %4152 = vmatprep.subr.mxu0 0.0
      %4153 = vmatpush1.msra.mxu0 0.0
      %4154 = vmatprep.subr.mxu0 0.0
      %4155 = vmatpush1.msra.mxu0 0.0
      %4156 = vmatprep.subr.mxu0 0.0
      %4157 = vmatpush1.msra.mxu0 0.0
      %4158 = vmatprep.subr.mxu0 0.0
      %4159 = vmatpush1.msra.mxu0 0.0
      %4160 = vmatprep.subr.mxu0 0.0
      %4161 = vmatpush1.msra.mxu0 0.0
      %4162 = vmatprep.subr.mxu0 0.0
      %4163 = vmatpush1.msra.mxu0 0.0
      %4164 = vmatprep.mubr.f32.mxu0 0.0
      %4165 = vmatmul.mubr.f32.gmra.mrb[0].mxu0 %v1431
      %v4166 = vpop.f32.mrb[0].mxu0
      %v4167 = vadd.f32 0.0, %v4166
      %v4168 = vpop.f32.mrb[0].mxu0
      %v4169 = vadd.f32 0.0, %v4168
      %4170 = vdwg.mxu0
      %4171 = vmatprep.subr.mxu0 %v2768
      %4172 = vmatpush1.msra.mxu0 %v2766
      %4173 = vmatprep.subr.mxu0 0.0
      %4174 = vmatpush1.msra.mxu0 0.0
      %4175 = vmatprep.subr.mxu0 0.0
      %4176 = vmatpush1.msra.mxu0 0.0
      %4177 = vmatprep.subr.mxu0 0.0
      %4178 = vmatpush1.msra.mxu0 0.0
      %4179 = vmatprep.subr.mxu0 0.0
      %4180 = vmatpush1.msra.mxu0 0.0
      %4181 = vmatprep.subr.mxu0 0.0
      %4182 = vmatpush1.msra.mxu0 0.0
      %4183 = vmatprep.subr.mxu0 0.0
      %4184 = vmatpush1.msra.mxu0 0.0
      %4185 = vmatprep.subr.mxu0 0.0
      %4186 = vmatpush1.msra.mxu0 0.0
      %4187 = vmatprep.subr.mxu0 0.0
      %4188 = vmatpush1.msra.mxu0 0.0
      %4189 = vmatprep.subr.mxu0 0.0
      %4190 = vmatpush1.msra.mxu0 0.0
      %4191 = vmatprep.subr.mxu0 0.0
      %4192 = vmatpush1.msra.mxu0 0.0
      %4193 = vmatprep.subr.mxu0 0.0
      %4194 = vmatpush1.msra.mxu0 0.0
      %4195 = vmatprep.subr.mxu0 0.0
      %4196 = vmatpush1.msra.mxu0 0.0
      %4197 = vmatprep.subr.mxu0 0.0
      %4198 = vmatpush1.msra.mxu0 0.0
      %4199 = vmatprep.subr.mxu0 0.0
      %4200 = vmatpush1.msra.mxu0 0.0
      %4201 = vmatprep.subr.mxu0 0.0
      %4202 = vmatpush1.msra.mxu0 0.0
      %4203 = vmatprep.subr.mxu0 0.0
      %4204 = vmatpush1.msra.mxu0 0.0
      %4205 = vmatprep.subr.mxu0 0.0
      %4206 = vmatpush1.msra.mxu0 0.0
      %4207 = vmatprep.subr.mxu0 0.0
      %4208 = vmatpush1.msra.mxu0 0.0
      %4209 = vmatprep.subr.mxu0 0.0
      %4210 = vmatpush1.msra.mxu0 0.0
      %4211 = vmatprep.subr.mxu0 0.0
      %4212 = vmatpush1.msra.mxu0 0.0
      %4213 = vmatprep.subr.mxu0 0.0
      %4214 = vmatpush1.msra.mxu0 0.0
      %4215 = vmatprep.subr.mxu0 0.0
      %4216 = vmatpush1.msra.mxu0 0.0
      %4217 = vmatprep.subr.mxu0 0.0
      %4218 = vmatpush1.msra.mxu0 0.0
      %4219 = vmatprep.subr.mxu0 0.0
      %4220 = vmatpush1.msra.mxu0 0.0
      %4221 = vmatprep.subr.mxu0 0.0
      %4222 = vmatpush1.msra.mxu0 0.0
      %4223 = vmatprep.subr.mxu0 0.0
      %4224 = vmatpush1.msra.mxu0 0.0
      %4225 = vmatprep.subr.mxu0 0.0
      %4226 = vmatpush1.msra.mxu0 0.0
      %4227 = vmatprep.subr.mxu0 0.0
      %4228 = vmatpush1.msra.mxu0 0.0
      %4229 = vmatprep.subr.mxu0 0.0
      %4230 = vmatpush1.msra.mxu0 0.0
      %4231 = vmatprep.subr.mxu0 0.0
      %4232 = vmatpush1.msra.mxu0 0.0
      %4233 = vmatprep.subr.mxu0 0.0
      %4234 = vmatpush1.msra.mxu0 0.0
      %4235 = vmatprep.mubr.f32.mxu0 0.0
      %4236 = vmatmul.mubr.f32.gmra.mrb[0].mxu0 %v1431
      %v4237 = vpop.f32.mrb[0].mxu0
      %v4238 = vadd.f32 0.0, %v4237
      %v4239 = vpop.f32.mrb[0].mxu0
      %v4240 = vadd.f32 0.0, %v4239
      %4241 = vdwg.mxu0
      %4242 = vmatprep.subr.mxu0 %v3579
      %4243 = vmatpush1.msra.mxu0 %v3578
      %4244 = vmatprep.subr.mxu0 %v3595
      %4245 = vmatpush1.msra.mxu0 %v3594
      %4246 = vmatprep.subr.mxu0 %v3611
      %4247 = vmatpush1.msra.mxu0 %v3610
      %4248 = vmatprep.subr.mxu0 %v3627
      %4249 = vmatpush1.msra.mxu0 %v3626
      %4250 = vmatprep.subr.mxu0 %v3643
      %4251 = vmatpush1.msra.mxu0 %v3642
      %4252 = vmatprep.subr.mxu0 %v3659
      %4253 = vmatpush1.msra.mxu0 %v3658
      %4254 = vmatprep.subr.mxu0 0.0
      %4255 = vmatpush1.msra.mxu0 0.0
      %4256 = vmatprep.subr.mxu0 0.0
      %4257 = vmatpush1.msra.mxu0 0.0
      %4258 = vmatprep.subr.mxu0 0.0
      %4259 = vmatpush1.msra.mxu0 0.0
      %4260 = vmatprep.subr.mxu0 0.0
      %4261 = vmatpush1.msra.mxu0 0.0
      %4262 = vmatprep.subr.mxu0 0.0
      %4263 = vmatpush1.msra.mxu0 0.0
      %4264 = vmatprep.subr.mxu0 0.0
      %4265 = vmatpush1.msra.mxu0 0.0
      %4266 = vmatprep.subr.mxu0 0.0
      %4267 = vmatpush1.msra.mxu0 0.0
      %4268 = vmatprep.subr.mxu0 0.0
      %4269 = vmatpush1.msra.mxu0 0.0
      %4270 = vmatprep.subr.mxu0 0.0
      %4271 = vmatpush1.msra.mxu0 0.0
      %4272 = vmatprep.subr.mxu0 0.0
      %4273 = vmatpush1.msra.mxu0 0.0
      %4274 = vmatprep.subr.mxu0 0.0
      %4275 = vmatpush1.msra.mxu0 0.0
      %4276 = vmatprep.subr.mxu0 0.0
      %4277 = vmatpush1.msra.mxu0 0.0
      %4278 = vmatprep.subr.mxu0 0.0
      %4279 = vmatpush1.msra.mxu0 0.0
      %4280 = vmatprep.subr.mxu0 0.0
      %4281 = vmatpush1.msra.mxu0 0.0
      %4282 = vmatprep.subr.mxu0 0.0
      %4283 = vmatpush1.msra.mxu0 0.0
      %4284 = vmatprep.subr.mxu0 0.0
      %4285 = vmatpush1.msra.mxu0 0.0
      %4286 = vmatprep.subr.mxu0 0.0
      %4287 = vmatpush1.msra.mxu0 0.0
      %4288 = vmatprep.subr.mxu0 0.0
      %4289 = vmatpush1.msra.mxu0 0.0
      %4290 = vmatprep.subr.mxu0 0.0
      %4291 = vmatpush1.msra.mxu0 0.0
      %4292 = vmatprep.subr.mxu0 0.0
      %4293 = vmatpush1.msra.mxu0 0.0
      %4294 = vmatprep.subr.mxu0 0.0
      %4295 = vmatpush1.msra.mxu0 0.0
      %4296 = vmatprep.subr.mxu0 0.0
      %4297 = vmatpush1.msra.mxu0 0.0
      %4298 = vmatprep.subr.mxu0 0.0
      %4299 = vmatpush1.msra.mxu0 0.0
      %4300 = vmatprep.subr.mxu0 0.0
      %4301 = vmatpush1.msra.mxu0 0.0
      %4302 = vmatprep.subr.mxu0 0.0
      %4303 = vmatpush1.msra.mxu0 0.0
      %4304 = vmatprep.subr.mxu0 0.0
      %4305 = vmatpush1.msra.mxu0 0.0
      %4306 = vmatprep.mubr.f32.mxu0 0.0
      %4307 = vmatmul.mubr.f32.gmra.mrb[0].mxu0 %v2003
      %v4308 = vpop.f32.mrb[0].mxu0
      %v4309 = vadd.f32 %v3741, %v4308
      %v4310 = vpop.f32.mrb[0].mxu0
      %v4311 = vadd.f32 %v3743, %v4310
      %4312 = vdwg.mxu0
      %4313 = vmatprep.subr.mxu0 %v3581
      %4314 = vmatpush1.msra.mxu0 %v3580
      %4315 = vmatprep.subr.mxu0 %v3597
      %4316 = vmatpush1.msra.mxu0 %v3596
      %4317 = vmatprep.subr.mxu0 %v3613
      %4318 = vmatpush1.msra.mxu0 %v3612
      %4319 = vmatprep.subr.mxu0 %v3629
      %4320 = vmatpush1.msra.mxu0 %v3628
      %4321 = vmatprep.subr.mxu0 %v3645
      %4322 = vmatpush1.msra.mxu0 %v3644
      %4323 = vmatprep.subr.mxu0 %v3661
      %4324 = vmatpush1.msra.mxu0 %v3660
      %4325 = vmatprep.subr.mxu0 0.0
      %4326 = vmatpush1.msra.mxu0 0.0
      %4327 = vmatprep.subr.mxu0 0.0
      %4328 = vmatpush1.msra.mxu0 0.0
      %4329 = vmatprep.subr.mxu0 0.0
      %4330 = vmatpush1.msra.mxu0 0.0
      %4331 = vmatprep.subr.mxu0 0.0
      %4332 = vmatpush1.msra.mxu0 0.0
      %4333 = vmatprep.subr.mxu0 0.0
      %4334 = vmatpush1.msra.mxu0 0.0
      %4335 = vmatprep.subr.mxu0 0.0
      %4336 = vmatpush1.msra.mxu0 0.0
      %4337 = vmatprep.subr.mxu0 0.0
      %4338 = vmatpush1.msra.mxu0 0.0
      %4339 = vmatprep.subr.mxu0 0.0
      %4340 = vmatpush1.msra.mxu0 0.0
      %4341 = vmatprep.subr.mxu0 0.0
      %4342 = vmatpush1.msra.mxu0 0.0
      %4343 = vmatprep.subr.mxu0 0.0
      %4344 = vmatpush1.msra.mxu0 0.0
      %4345 = vmatprep.subr.mxu0 0.0
      %4346 = vmatpush1.msra.mxu0 0.0
      %4347 = vmatprep.subr.mxu0 0.0
      %4348 = vmatpush1.msra.mxu0 0.0
      %4349 = vmatprep.subr.mxu0 0.0
      %4350 = vmatpush1.msra.mxu0 0.0
      %4351 = vmatprep.subr.mxu0 0.0
      %4352 = vmatpush1.msra.mxu0 0.0
      %4353 = vmatprep.subr.mxu0 0.0
      %4354 = vmatpush1.msra.mxu0 0.0
      %4355 = vmatprep.subr.mxu0 0.0
      %4356 = vmatpush1.msra.mxu0 0.0
      %4357 = vmatprep.subr.mxu0 0.0
      %4358 = vmatpush1.msra.mxu0 0.0
      %4359 = vmatprep.subr.mxu0 0.0
      %4360 = vmatpush1.msra.mxu0 0.0
      %4361 = vmatprep.subr.mxu0 0.0
      %4362 = vmatpush1.msra.mxu0 0.0
      %4363 = vmatprep.subr.mxu0 0.0
      %4364 = vmatpush1.msra.mxu0 0.0
      %4365 = vmatprep.subr.mxu0 0.0
      %4366 = vmatpush1.msra.mxu0 0.0
      %4367 = vmatprep.subr.mxu0 0.0
      %4368 = vmatpush1.msra.mxu0 0.0
      %4369 = vmatprep.subr.mxu0 0.0
      %4370 = vmatpush1.msra.mxu0 0.0
      %4371 = vmatprep.subr.mxu0 0.0
      %4372 = vmatpush1.msra.mxu0 0.0
      %4373 = vmatprep.subr.mxu0 0.0
      %4374 = vmatpush1.msra.mxu0 0.0
      %4375 = vmatprep.subr.mxu0 0.0
      %4376 = vmatpush1.msra.mxu0 0.0
      %4377 = vmatprep.mubr.f32.mxu0 0.0
      %4378 = vmatmul.mubr.f32.gmra.mrb[0].mxu0 %v2003
      %v4379 = vpop.f32.mrb[0].mxu0
      %v4380 = vadd.f32 %v3812, %v4379
      %v4381 = vpop.f32.mrb[0].mxu0
      %v4382 = vadd.f32 %v3814, %v4381
      %4383 = vdwg.mxu0
      %4384 = vmatprep.subr.mxu0 %v3583
      %4385 = vmatpush1.msra.mxu0 %v3582
      %4386 = vmatprep.subr.mxu0 %v3599
      %4387 = vmatpush1.msra.mxu0 %v3598
      %4388 = vmatprep.subr.mxu0 %v3615
      %4389 = vmatpush1.msra.mxu0 %v3614
      %4390 = vmatprep.subr.mxu0 %v3631
      %4391 = vmatpush1.msra.mxu0 %v3630
      %4392 = vmatprep.subr.mxu0 %v3647
      %4393 = vmatpush1.msra.mxu0 %v3646
      %4394 = vmatprep.subr.mxu0 %v3663
      %4395 = vmatpush1.msra.mxu0 %v3662
      %4396 = vmatprep.subr.mxu0 0.0
      %4397 = vmatpush1.msra.mxu0 0.0
      %4398 = vmatprep.subr.mxu0 0.0
      %4399 = vmatpush1.msra.mxu0 0.0
      %4400 = vmatprep.subr.mxu0 0.0
      %4401 = vmatpush1.msra.mxu0 0.0
      %4402 = vmatprep.subr.mxu0 0.0
      %4403 = vmatpush1.msra.mxu0 0.0
      %4404 = vmatprep.subr.mxu0 0.0
      %4405 = vmatpush1.msra.mxu0 0.0
      %4406 = vmatprep.subr.mxu0 0.0
      %4407 = vmatpush1.msra.mxu0 0.0
      %4408 = vmatprep.subr.mxu0 0.0
      %4409 = vmatpush1.msra.mxu0 0.0
      %4410 = vmatprep.subr.mxu0 0.0
      %4411 = vmatpush1.msra.mxu0 0.0
      %4412 = vmatprep.subr.mxu0 0.0
      %4413 = vmatpush1.msra.mxu0 0.0
      %4414 = vmatprep.subr.mxu0 0.0
      %4415 = vmatpush1.msra.mxu0 0.0
      %4416 = vmatprep.subr.mxu0 0.0
      %4417 = vmatpush1.msra.mxu0 0.0
      %4418 = vmatprep.subr.mxu0 0.0
      %4419 = vmatpush1.msra.mxu0 0.0
      %4420 = vmatprep.subr.mxu0 0.0
      %4421 = vmatpush1.msra.mxu0 0.0
      %4422 = vmatprep.subr.mxu0 0.0
      %4423 = vmatpush1.msra.mxu0 0.0
      %4424 = vmatprep.subr.mxu0 0.0
      %4425 = vmatpush1.msra.mxu0 0.0
      %4426 = vmatprep.subr.mxu0 0.0
      %4427 = vmatpush1.msra.mxu0 0.0
      %4428 = vmatprep.subr.mxu0 0.0
      %4429 = vmatpush1.msra.mxu0 0.0
      %4430 = vmatprep.subr.mxu0 0.0
      %4431 = vmatpush1.msra.mxu0 0.0
      %4432 = vmatprep.subr.mxu0 0.0
      %4433 = vmatpush1.msra.mxu0 0.0
      %4434 = vmatprep.subr.mxu0 0.0
      %4435 = vmatpush1.msra.mxu0 0.0
      %4436 = vmatprep.subr.mxu0 0.0
      %4437 = vmatpush1.msra.mxu0 0.0
      %4438 = vmatprep.subr.mxu0 0.0
      %4439 = vmatpush1.msra.mxu0 0.0
      %4440 = vmatprep.subr.mxu0 0.0
      %4441 = vmatpush1.msra.mxu0 0.0
      %4442 = vmatprep.subr.mxu0 0.0
      %4443 = vmatpush1.msra.mxu0 0.0
      %4444 = vmatprep.subr.mxu0 0.0
      %4445 = vmatpush1.msra.mxu0 0.0
      %4446 = vmatprep.subr.mxu0 0.0
      %4447 = vmatpush1.msra.mxu0 0.0
      %4448 = vmatprep.mubr.f32.mxu0 0.0
      %4449 = vmatmul.mubr.f32.gmra.mrb[0].mxu0 %v2003
      %v4450 = vpop.f32.mrb[0].mxu0
      %v4451 = vadd.f32 %v3883, %v4450
      %v4452 = vpop.f32.mrb[0].mxu0
      %v4453 = vadd.f32 %v3885, %v4452
      %4454 = vdwg.mxu0
      %4455 = vmatprep.subr.mxu0 %v3585
      %4456 = vmatpush1.msra.mxu0 %v3584
      %4457 = vmatprep.subr.mxu0 %v3601
      %4458 = vmatpush1.msra.mxu0 %v3600
      %4459 = vmatprep.subr.mxu0 %v3617
      %4460 = vmatpush1.msra.mxu0 %v3616
      %4461 = vmatprep.subr.mxu0 %v3633
      %4462 = vmatpush1.msra.mxu0 %v3632
      %4463 = vmatprep.subr.mxu0 %v3649
      %4464 = vmatpush1.msra.mxu0 %v3648
      %4465 = vmatprep.subr.mxu0 %v3665
      %4466 = vmatpush1.msra.mxu0 %v3664
      %4467 = vmatprep.subr.mxu0 0.0
      %4468 = vmatpush1.msra.mxu0 0.0
      %4469 = vmatprep.subr.mxu0 0.0
      %4470 = vmatpush1.msra.mxu0 0.0
      %4471 = vmatprep.subr.mxu0 0.0
      %4472 = vmatpush1.msra.mxu0 0.0
      %4473 = vmatprep.subr.mxu0 0.0
      %4474 = vmatpush1.msra.mxu0 0.0
      %4475 = vmatprep.subr.mxu0 0.0
      %4476 = vmatpush1.msra.mxu0 0.0
      %4477 = vmatprep.subr.mxu0 0.0
      %4478 = vmatpush1.msra.mxu0 0.0
      %4479 = vmatprep.subr.mxu0 0.0
      %4480 = vmatpush1.msra.mxu0 0.0
      %4481 = vmatprep.subr.mxu0 0.0
      %4482 = vmatpush1.msra.mxu0 0.0
      %4483 = vmatprep.subr.mxu0 0.0
      %4484 = vmatpush1.msra.mxu0 0.0
      %4485 = vmatprep.subr.mxu0 0.0
      %4486 = vmatpush1.msra.mxu0 0.0
      %4487 = vmatprep.subr.mxu0 0.0
      %4488 = vmatpush1.msra.mxu0 0.0
      %4489 = vmatprep.subr.mxu0 0.0
      %4490 = vmatpush1.msra.mxu0 0.0
      %4491 = vmatprep.subr.mxu0 0.0
      %4492 = vmatpush1.msra.mxu0 0.0
      %4493 = vmatprep.subr.mxu0 0.0
      %4494 = vmatpush1.msra.mxu0 0.0
      %4495 = vmatprep.subr.mxu0 0.0
      %4496 = vmatpush1.msra.mxu0 0.0
      %4497 = vmatprep.subr.mxu0 0.0
      %4498 = vmatpush1.msra.mxu0 0.0
      %4499 = vmatprep.subr.mxu0 0.0
      %4500 = vmatpush1.msra.mxu0 0.0
      %4501 = vmatprep.subr.mxu0 0.0
      %4502 = vmatpush1.msra.mxu0 0.0
      %4503 = vmatprep.subr.mxu0 0.0
      %4504 = vmatpush1.msra.mxu0 0.0
      %4505 = vmatprep.subr.mxu0 0.0
      %4506 = vmatpush1.msra.mxu0 0.0
      %4507 = vmatprep.subr.mxu0 0.0
      %4508 = vmatpush1.msra.mxu0 0.0
      %4509 = vmatprep.subr.mxu0 0.0
      %4510 = vmatpush1.msra.mxu0 0.0
      %4511 = vmatprep.subr.mxu0 0.0
      %4512 = vmatpush1.msra.mxu0 0.0
      %4513 = vmatprep.subr.mxu0 0.0
      %4514 = vmatpush1.msra.mxu0 0.0
      %4515 = vmatprep.subr.mxu0 0.0
      %4516 = vmatpush1.msra.mxu0 0.0
      %4517 = vmatprep.subr.mxu0 0.0
      %4518 = vmatpush1.msra.mxu0 0.0
      %4519 = vmatprep.mubr.f32.mxu0 0.0
      %4520 = vmatmul.mubr.f32.gmra.mrb[0].mxu0 %v2003
      %v4521 = vpop.f32.mrb[0].mxu0
      %v4522 = vadd.f32 %v3954, %v4521
      %v4523 = vpop.f32.mrb[0].mxu0
      %v4524 = vadd.f32 %v3956, %v4523
      %4525 = vdwg.mxu0
      %4526 = vmatprep.subr.mxu0 %v3587
      %4527 = vmatpush1.msra.mxu0 %v3586
      %4528 = vmatprep.subr.mxu0 %v3603
      %4529 = vmatpush1.msra.mxu0 %v3602
      %4530 = vmatprep.subr.mxu0 %v3619
      %4531 = vmatpush1.msra.mxu0 %v3618
      %4532 = vmatprep.subr.mxu0 %v3635
      %4533 = vmatpush1.msra.mxu0 %v3634
      %4534 = vmatprep.subr.mxu0 %v3651
      %4535 = vmatpush1.msra.mxu0 %v3650
      %4536 = vmatprep.subr.mxu0 %v3667
      %4537 = vmatpush1.msra.mxu0 %v3666
      %4538 = vmatprep.subr.mxu0 0.0
      %4539 = vmatpush1.msra.mxu0 0.0
      %4540 = vmatprep.subr.mxu0 0.0
      %4541 = vmatpush1.msra.mxu0 0.0
      %4542 = vmatprep.subr.mxu0 0.0
      %4543 = vmatpush1.msra.mxu0 0.0
      %4544 = vmatprep.subr.mxu0 0.0
      %4545 = vmatpush1.msra.mxu0 0.0
      %4546 = vmatprep.subr.mxu0 0.0
      %4547 = vmatpush1.msra.mxu0 0.0
      %4548 = vmatprep.subr.mxu0 0.0
      %4549 = vmatpush1.msra.mxu0 0.0
      %4550 = vmatprep.subr.mxu0 0.0
      %4551 = vmatpush1.msra.mxu0 0.0
      %4552 = vmatprep.subr.mxu0 0.0
      %4553 = vmatpush1.msra.mxu0 0.0
      %4554 = vmatprep.subr.mxu0 0.0
      %4555 = vmatpush1.msra.mxu0 0.0
      %4556 = vmatprep.subr.mxu0 0.0
      %4557 = vmatpush1.msra.mxu0 0.0
      %4558 = vmatprep.subr.mxu0 0.0
      %4559 = vmatpush1.msra.mxu0 0.0
      %4560 = vmatprep.subr.mxu0 0.0
      %4561 = vmatpush1.msra.mxu0 0.0
      %4562 = vmatprep.subr.mxu0 0.0
      %4563 = vmatpush1.msra.mxu0 0.0
      %4564 = vmatprep.subr.mxu0 0.0
      %4565 = vmatpush1.msra.mxu0 0.0
      %4566 = vmatprep.subr.mxu0 0.0
      %4567 = vmatpush1.msra.mxu0 0.0
      %4568 = vmatprep.subr.mxu0 0.0
      %4569 = vmatpush1.msra.mxu0 0.0
      %4570 = vmatprep.subr.mxu0 0.0
      %4571 = vmatpush1.msra.mxu0 0.0
      %4572 = vmatprep.subr.mxu0 0.0
      %4573 = vmatpush1.msra.mxu0 0.0
      %4574 = vmatprep.subr.mxu0 0.0
      %4575 = vmatpush1.msra.mxu0 0.0
      %4576 = vmatprep.subr.mxu0 0.0
      %4577 = vmatpush1.msra.mxu0 0.0
      %4578 = vmatprep.subr.mxu0 0.0
      %4579 = vmatpush1.msra.mxu0 0.0
      %4580 = vmatprep.subr.mxu0 0.0
      %4581 = vmatpush1.msra.mxu0 0.0
      %4582 = vmatprep.subr.mxu0 0.0
      %4583 = vmatpush1.msra.mxu0 0.0
      %4584 = vmatprep.subr.mxu0 0.0
      %4585 = vmatpush1.msra.mxu0 0.0
      %4586 = vmatprep.subr.mxu0 0.0
      %4587 = vmatpush1.msra.mxu0 0.0
      %4588 = vmatprep.subr.mxu0 0.0
      %4589 = vmatpush1.msra.mxu0 0.0
      %4590 = vmatprep.mubr.f32.mxu0 0.0
      %4591 = vmatmul.mubr.f32.gmra.mrb[0].mxu0 %v2003
      %v4592 = vpop.f32.mrb[0].mxu0
      %v4593 = vadd.f32 %v4025, %v4592
      %v4594 = vpop.f32.mrb[0].mxu0
      %v4595 = vadd.f32 %v4027, %v4594
      %4596 = vdwg.mxu0
      %4597 = vmatprep.subr.mxu0 %v3589
      %4598 = vmatpush1.msra.mxu0 %v3588
      %4599 = vmatprep.subr.mxu0 %v3605
      %4600 = vmatpush1.msra.mxu0 %v3604
      %4601 = vmatprep.subr.mxu0 %v3621
      %4602 = vmatpush1.msra.mxu0 %v3620
      %4603 = vmatprep.subr.mxu0 %v3637
      %4604 = vmatpush1.msra.mxu0 %v3636
      %4605 = vmatprep.subr.mxu0 %v3653
      %4606 = vmatpush1.msra.mxu0 %v3652
      %4607 = vmatprep.subr.mxu0 %v3669
      %4608 = vmatpush1.msra.mxu0 %v3668
      %4609 = vmatprep.subr.mxu0 0.0
      %4610 = vmatpush1.msra.mxu0 0.0
      %4611 = vmatprep.subr.mxu0 0.0
      %4612 = vmatpush1.msra.mxu0 0.0
      %4613 = vmatprep.subr.mxu0 0.0
      %4614 = vmatpush1.msra.mxu0 0.0
      %4615 = vmatprep.subr.mxu0 0.0
      %4616 = vmatpush1.msra.mxu0 0.0
      %4617 = vmatprep.subr.mxu0 0.0
      %4618 = vmatpush1.msra.mxu0 0.0
      %4619 = vmatprep.subr.mxu0 0.0
      %4620 = vmatpush1.msra.mxu0 0.0
      %4621 = vmatprep.subr.mxu0 0.0
      %4622 = vmatpush1.msra.mxu0 0.0
      %4623 = vmatprep.subr.mxu0 0.0
      %4624 = vmatpush1.msra.mxu0 0.0
      %4625 = vmatprep.subr.mxu0 0.0
      %4626 = vmatpush1.msra.mxu0 0.0
      %4627 = vmatprep.subr.mxu0 0.0
      %4628 = vmatpush1.msra.mxu0 0.0
      %4629 = vmatprep.subr.mxu0 0.0
      %4630 = vmatpush1.msra.mxu0 0.0
      %4631 = vmatprep.subr.mxu0 0.0
      %4632 = vmatpush1.msra.mxu0 0.0
      %4633 = vmatprep.subr.mxu0 0.0
      %4634 = vmatpush1.msra.mxu0 0.0
      %4635 = vmatprep.subr.mxu0 0.0
      %4636 = vmatpush1.msra.mxu0 0.0
      %4637 = vmatprep.subr.mxu0 0.0
      %4638 = vmatpush1.msra.mxu0 0.0
      %4639 = vmatprep.subr.mxu0 0.0
      %4640 = vmatpush1.msra.mxu0 0.0
      %4641 = vmatprep.subr.mxu0 0.0
      %4642 = vmatpush1.msra.mxu0 0.0
      %4643 = vmatprep.subr.mxu0 0.0
      %4644 = vmatpush1.msra.mxu0 0.0
      %4645 = vmatprep.subr.mxu0 0.0
      %4646 = vmatpush1.msra.mxu0 0.0
      %4647 = vmatprep.subr.mxu0 0.0
      %4648 = vmatpush1.msra.mxu0 0.0
      %4649 = vmatprep.subr.mxu0 0.0
      %4650 = vmatpush1.msra.mxu0 0.0
      %4651 = vmatprep.subr.mxu0 0.0
      %4652 = vmatpush1.msra.mxu0 0.0
      %4653 = vmatprep.subr.mxu0 0.0
      %4654 = vmatpush1.msra.mxu0 0.0
      %4655 = vmatprep.subr.mxu0 0.0
      %4656 = vmatpush1.msra.mxu0 0.0
      %4657 = vmatprep.subr.mxu0 0.0
      %4658 = vmatpush1.msra.mxu0 0.0
      %4659 = vmatprep.subr.mxu0 0.0
      %4660 = vmatpush1.msra.mxu0 0.0
      %4661 = vmatprep.mubr.f32.mxu0 0.0
      %4662 = vmatmul.mubr.f32.gmra.mrb[0].mxu0 %v2003
      %v4663 = vpop.f32.mrb[0].mxu0
      %v4664 = vadd.f32 %v4096, %v4663
      %v4665 = vpop.f32.mrb[0].mxu0
      %v4666 = vadd.f32 %v4098, %v4665
      %4667 = vdwg.mxu0
      %4668 = vmatprep.subr.mxu0 %v3591
      %4669 = vmatpush1.msra.mxu0 %v3590
      %4670 = vmatprep.subr.mxu0 %v3607
      %4671 = vmatpush1.msra.mxu0 %v3606
      %4672 = vmatprep.subr.mxu0 %v3623
      %4673 = vmatpush1.msra.mxu0 %v3622
      %4674 = vmatprep.subr.mxu0 %v3639
      %4675 = vmatpush1.msra.mxu0 %v3638
      %4676 = vmatprep.subr.mxu0 %v3655
      %4677 = vmatpush1.msra.mxu0 %v3654
      %4678 = vmatprep.subr.mxu0 %v3671
      %4679 = vmatpush1.msra.mxu0 %v3670
      %4680 = vmatprep.subr.mxu0 0.0
      %4681 = vmatpush1.msra.mxu0 0.0
      %4682 = vmatprep.subr.mxu0 0.0
      %4683 = vmatpush1.msra.mxu0 0.0
      %4684 = vmatprep.subr.mxu0 0.0
      %4685 = vmatpush1.msra.mxu0 0.0
      %4686 = vmatprep.subr.mxu0 0.0
      %4687 = vmatpush1.msra.mxu0 0.0
      %4688 = vmatprep.subr.mxu0 0.0
      %4689 = vmatpush1.msra.mxu0 0.0
      %4690 = vmatprep.subr.mxu0 0.0
      %4691 = vmatpush1.msra.mxu0 0.0
      %4692 = vmatprep.subr.mxu0 0.0
      %4693 = vmatpush1.msra.mxu0 0.0
      %4694 = vmatprep.subr.mxu0 0.0
      %4695 = vmatpush1.msra.mxu0 0.0
      %4696 = vmatprep.subr.mxu0 0.0
      %4697 = vmatpush1.msra.mxu0 0.0
      %4698 = vmatprep.subr.mxu0 0.0
      %4699 = vmatpush1.msra.mxu0 0.0
      %4700 = vmatprep.subr.mxu0 0.0
      %4701 = vmatpush1.msra.mxu0 0.0
      %4702 = vmatprep.subr.mxu0 0.0
      %4703 = vmatpush1.msra.mxu0 0.0
      %4704 = vmatprep.subr.mxu0 0.0
      %4705 = vmatpush1.msra.mxu0 0.0
      %4706 = vmatprep.subr.mxu0 0.0
      %4707 = vmatpush1.msra.mxu0 0.0
      %4708 = vmatprep.subr.mxu0 0.0
      %4709 = vmatpush1.msra.mxu0 0.0
      %4710 = vmatprep.subr.mxu0 0.0
      %4711 = vmatpush1.msra.mxu0 0.0
      %4712 = vmatprep.subr.mxu0 0.0
      %4713 = vmatpush1.msra.mxu0 0.0
      %4714 = vmatprep.subr.mxu0 0.0
      %4715 = vmatpush1.msra.mxu0 0.0
      %4716 = vmatprep.subr.mxu0 0.0
      %4717 = vmatpush1.msra.mxu0 0.0
      %4718 = vmatprep.subr.mxu0 0.0
      %4719 = vmatpush1.msra.mxu0 0.0
      %4720 = vmatprep.subr.mxu0 0.0
      %4721 = vmatpush1.msra.mxu0 0.0
      %4722 = vmatprep.subr.mxu0 0.0
      %4723 = vmatpush1.msra.mxu0 0.0
      %4724 = vmatprep.subr.mxu0 0.0
      %4725 = vmatpush1.msra.mxu0 0.0
      %4726 = vmatprep.subr.mxu0 0.0
      %4727 = vmatpush1.msra.mxu0 0.0
      %4728 = vmatprep.subr.mxu0 0.0
      %4729 = vmatpush1.msra.mxu0 0.0
      %4730 = vmatprep.subr.mxu0 0.0
      %4731 = vmatpush1.msra.mxu0 0.0
      %4732 = vmatprep.mubr.f32.mxu0 0.0
      %4733 = vmatmul.mubr.f32.gmra.mrb[0].mxu0 %v2003
      %v4734 = vpop.f32.mrb[0].mxu0
      %v4735 = vadd.f32 %v4167, %v4734
      %v4736 = vpop.f32.mrb[0].mxu0
      %v4737 = vadd.f32 %v4169, %v4736
      %4738 = vdwg.mxu0
      %4739 = vmatprep.subr.mxu0 %v3593
      %4740 = vmatpush1.msra.mxu0 %v3592
      %4741 = vmatprep.subr.mxu0 %v3609
      %4742 = vmatpush1.msra.mxu0 %v3608
      %4743 = vmatprep.subr.mxu0 %v3625
      %4744 = vmatpush1.msra.mxu0 %v3624
      %4745 = vmatprep.subr.mxu0 %v3641
      %4746 = vmatpush1.msra.mxu0 %v3640
      %4747 = vmatprep.subr.mxu0 %v3657
      %4748 = vmatpush1.msra.mxu0 %v3656
      %4749 = vmatprep.subr.mxu0 %v3673
      %4750 = vmatpush1.msra.mxu0 %v3672
      %4751 = vmatprep.subr.mxu0 0.0
      %4752 = vmatpush1.msra.mxu0 0.0
      %4753 = vmatprep.subr.mxu0 0.0
      %4754 = vmatpush1.msra.mxu0 0.0
      %4755 = vmatprep.subr.mxu0 0.0
      %4756 = vmatpush1.msra.mxu0 0.0
      %4757 = vmatprep.subr.mxu0 0.0
      %4758 = vmatpush1.msra.mxu0 0.0
      %4759 = vmatprep.subr.mxu0 0.0
      %4760 = vmatpush1.msra.mxu0 0.0
      %4761 = vmatprep.subr.mxu0 0.0
      %4762 = vmatpush1.msra.mxu0 0.0
      %4763 = vmatprep.subr.mxu0 0.0
      %4764 = vmatpush1.msra.mxu0 0.0
      %4765 = vmatprep.subr.mxu0 0.0
      %4766 = vmatpush1.msra.mxu0 0.0
      %4767 = vmatprep.subr.mxu0 0.0
      %4768 = vmatpush1.msra.mxu0 0.0
      %4769 = vmatprep.subr.mxu0 0.0
      %4770 = vmatpush1.msra.mxu0 0.0
      %4771 = vmatprep.subr.mxu0 0.0
      %4772 = vmatpush1.msra.mxu0 0.0
      %4773 = vmatprep.subr.mxu0 0.0
      %4774 = vmatpush1.msra.mxu0 0.0
      %4775 = vmatprep.subr.mxu0 0.0
      %4776 = vmatpush1.msra.mxu0 0.0
      %4777 = vmatprep.subr.mxu0 0.0
      %4778 = vmatpush1.msra.mxu0 0.0
      %4779 = vmatprep.subr.mxu0 0.0
      %4780 = vmatpush1.msra.mxu0 0.0
      %4781 = vmatprep.subr.mxu0 0.0
      %4782 = vmatpush1.msra.mxu0 0.0
      %4783 = vmatprep.subr.mxu0 0.0
      %4784 = vmatpush1.msra.mxu0 0.0
      %4785 = vmatprep.subr.mxu0 0.0
      %4786 = vmatpush1.msra.mxu0 0.0
      %4787 = vmatprep.subr.mxu0 0.0
      %4788 = vmatpush1.msra.mxu0 0.0
      %4789 = vmatprep.subr.mxu0 0.0
      %4790 = vmatpush1.msra.mxu0 0.0
      %4791 = vmatprep.subr.mxu0 0.0
      %4792 = vmatpush1.msra.mxu0 0.0
      %4793 = vmatprep.subr.mxu0 0.0
      %4794 = vmatpush1.msra.mxu0 0.0
      %4795 = vmatprep.subr.mxu0 0.0
      %4796 = vmatpush1.msra.mxu0 0.0
      %4797 = vmatprep.subr.mxu0 0.0
      %4798 = vmatpush1.msra.mxu0 0.0
      %4799 = vmatprep.subr.mxu0 0.0
      %4800 = vmatpush1.msra.mxu0 0.0
      %4801 = vmatprep.subr.mxu0 0.0
      %4802 = vmatpush1.msra.mxu0 0.0
      %4803 = vmatprep.mubr.f32.mxu0 0.0
      %4804 = vmatmul.mubr.f32.gmra.mrb[0].mxu0 %v2003
      %v4805 = vpop.f32.mrb[0].mxu0
      %v4806 = vadd.f32 %v4238, %v4805
      %v4807 = vpop.f32.mrb[0].mxu0
      %v4808 = vadd.f32 %v4240, %v4807
      %4809 = vdwg.mxu0
      %v4810 = vadd.f32 %v4309, %v2576
      %v4811 = vadd.f32 %v4311, %v2576
      %v4812 = vadd.f32 %v4380, %v2576
      %v4813 = vadd.f32 %v4382, %v2576
      %v4814 = vadd.f32 %v4451, %v2576
      %v4815 = vadd.f32 %v4453, %v2576
      %v4816 = vadd.f32 %v4522, %v2576
      %v4817 = vadd.f32 %v4524, %v2576
      %v4818 = vadd.f32 %v4593, %v2576
      %v4819 = vadd.f32 %v4595, %v2576
      %v4820 = vadd.f32 %v4664, %v2576
      %v4821 = vadd.f32 %v4666, %v2576
      %v4822 = vadd.f32 %v4735, %v2576
      %v4823 = vadd.f32 %v4737, %v2576
      %v4824 = vadd.f32 %v4806, %v2576
      %v4825 = vadd.f32 %v4808, %v2576
      %v4826 = vsub.f32 0.0, %v4810
      %v4827 = vsub.f32 0.0, %v4811
      %v4828 = vsub.f32 0.0, %v4812
      %v4829 = vsub.f32 0.0, %v4813
      %v4830 = vsub.f32 0.0, %v4814
      %v4831 = vsub.f32 0.0, %v4815
      %v4832 = vsub.f32 0.0, %v4816
      %v4833 = vsub.f32 0.0, %v4817
      %v4834 = vsub.f32 0.0, %v4818
      %v4835 = vsub.f32 0.0, %v4819
      %v4836 = vsub.f32 0.0, %v4820
      %v4837 = vsub.f32 0.0, %v4821
      %v4838 = vsub.f32 0.0, %v4822
      %v4839 = vsub.f32 0.0, %v4823
      %v4840 = vsub.f32 0.0, %v4824
      %v4841 = vsub.f32 0.0, %v4825
      %v4842 = vmul.f32 %v4826, 1.442695
      %v4843 = vpow.pop %v4842
      %v4844 = vmul.f32 %v4827, 1.442695
      %v4845 = vpow.pop %v4844
      %v4846 = vmul.f32 %v4828, 1.442695
      %v4847 = vpow.pop %v4846
      %v4848 = vmul.f32 %v4829, 1.442695
      %v4849 = vpow.pop %v4848
      %v4850 = vmul.f32 %v4830, 1.442695
      %v4851 = vpow.pop %v4850
      %v4852 = vmul.f32 %v4831, 1.442695
      %v4853 = vpow.pop %v4852
      %v4854 = vmul.f32 %v4832, 1.442695
      %v4855 = vpow.pop %v4854
      %v4856 = vmul.f32 %v4833, 1.442695
      %v4857 = vpow.pop %v4856
      %v4858 = vmul.f32 %v4834, 1.442695
      %v4859 = vpow.pop %v4858
      %v4860 = vmul.f32 %v4835, 1.442695
      %v4861 = vpow.pop %v4860
      %v4862 = vmul.f32 %v4836, 1.442695
      %v4863 = vpow.pop %v4862
      %v4864 = vmul.f32 %v4837, 1.442695
      %v4865 = vpow.pop %v4864
      %v4866 = vmul.f32 %v4838, 1.442695
      %v4867 = vpow.pop %v4866
      %v4868 = vmul.f32 %v4839, 1.442695
      %v4869 = vpow.pop %v4868
      %v4870 = vmul.f32 %v4840, 1.442695
      %v4871 = vpow.pop %v4870
      %v4872 = vmul.f32 %v4841, 1.442695
      %v4873 = vpow.pop %v4872
      %v4874 = vadd.f32 %v4843, 1.0
      %v4875 = vadd.f32 %v4845, 1.0
      %v4876 = vadd.f32 %v4847, 1.0
      %v4877 = vadd.f32 %v4849, 1.0
      %v4878 = vadd.f32 %v4851, 1.0
      %v4879 = vadd.f32 %v4853, 1.0
      %v4880 = vadd.f32 %v4855, 1.0
      %v4881 = vadd.f32 %v4857, 1.0
      %v4882 = vadd.f32 %v4859, 1.0
      %v4883 = vadd.f32 %v4861, 1.0
      %v4884 = vadd.f32 %v4863, 1.0
      %v4885 = vadd.f32 %v4865, 1.0
      %v4886 = vadd.f32 %v4867, 1.0
      %v4887 = vadd.f32 %v4869, 1.0
      %v4888 = vadd.f32 %v4871, 1.0
      %v4889 = vadd.f32 %v4873, 1.0
      %v4890 = vrcp.pop %v4874
      %v4891 = vrcp.pop %v4875
      %v4892 = vrcp.pop %v4876
      %v4893 = vrcp.pop %v4877
      %v4894 = vrcp.pop %v4878
      %v4895 = vrcp.pop %v4879
      %v4896 = vrcp.pop %v4880
      %v4897 = vrcp.pop %v4881
      %v4898 = vrcp.pop %v4882
      %v4899 = vrcp.pop %v4883
      %v4900 = vrcp.pop %v4884
      %v4901 = vrcp.pop %v4885
      %v4902 = vrcp.pop %v4886
      %v4903 = vrcp.pop %v4887
      %v4904 = vrcp.pop %v4888
      %v4905 = vrcp.pop %v4889
      %v4922 = vcombine.low %v4890, %v4891
      %v4923 = vcombine.low %v4892, %v4893
      %v4924 = vcombine.low %v4894, %v4895
      %v4925 = vcombine.low %v4896, %v4897
      %v4926 = vcombine.low %v4898, %v4899
      %v4927 = vcombine.low %v4900, %v4901
      %v4928 = vcombine.low %v4902, %v4903
      %v4929 = vcombine.low %v4904, %v4905
      %4938 = vst [vmem:[%s403] sm:$0xff] %v4922
      %4939 = vst [vmem:[%s403 + $0x8] sm:$0xff] %v4923
      %4940 = vst [vmem:[%s403 + $0x10] sm:$0xff] %v4924
      %4941 = vst [vmem:[%s403 + $0x18] sm:$0xff] %v4925
      %4942 = vst [vmem:[%s403 + $0x20] sm:$0xff] %v4926
      %4943 = vst [vmem:[%s403 + $0x28] sm:$0xff] %v4927
      %4944 = vst [vmem:[%s403 + $0x30] sm:$0xff] %v4928
      %4945 = vst [vmem:[%s403 + $0x38] sm:$0xff] %v4929
      %s4946 = smul.u32 16, %s25
      %p4947 = scmp.lt.s32.totalorder %s24, 1
      %s4948 = scalar_select %p4947, %s24, 1
      %p4949 = scmp.lt.s32.totalorder %s4946, 15
      %s4950 = scalar_select %p4949, %s4946, 15
      %s4951 = smul.addr %s4948, 16
      %s4952 = sadd.s32 %s4950, %s4951
      %s4953 = smul.addr %s4952, 4
      %s4954 = scalar_lea.vmem %s7, %s4953
      %s4955 = smul.u32 16, %s25
      %p4956 = scmp.lt.s32.totalorder %s24, 1
      %s4957 = scalar_select %p4956, %s24, 1
      %p4958 = scmp.lt.s32.totalorder %s4955, 15
      %s4959 = scalar_select %p4958, %s4955, 15
      %s4960 = smul.addr %s4957, 16
      %s4961 = sadd.s32 %s4959, %s4960
      %s4962 = smul.addr %s4961, 4
      %s4963 = scalar_lea.vmem %s8, %s4962
      // Predicated region
      $region49: #{_forward_impl.1} parent=47 // pred_check
        %p4964 = pneg %p213
      $region50: #{_forward_impl.1} parent=47 // pred_check_branch
        %4966 = sbr.rel (%p4964) target = $region52
      $region51: #{_forward_impl.1} parent=47 // pred_region
        %s4967 = smul.u32 16, %s25
      $region52: #{_forward_impl.1} parent=47 // pred_fallthru
        _
      // Predicated region
      $region53: #{_forward_impl.1} parent=47 // pred_check
        %p4968 = pneg %p241
      $region54: #{_forward_impl.1} parent=47 // pred_check_branch
        %4970 = sbr.rel (%p4968) target = $region56
      $region55: #{_forward_impl.1} parent=47 // pred_region
        %s4971 = smul.u32 16, %s25
      $region56: #{_forward_impl.1} parent=47 // pred_fallthru
        _
    $region48: #{_forward_impl.1} parent=5 // pred_fallthru
      _
    %p4972 = scmp.le.s32.totalorder 2, %s15
    // Predicated region
    $region57: #{_forward_impl.1} parent=5 // pred_check
      %p4973 = pneg %p4972
    $region58: #{_forward_impl.1} parent=5 // pred_check_branch
      %4975 = sbr.rel (%p4973) target = $region60
    $region59: #{_forward_impl.1} parent=5 // pred_region
      %s4976 = ssub.s32 %s15, 2
      // Predicated region
      $region61: #{_forward_impl.1} parent=59 // pred_check
        %p4977 = pneg %p219
      $region62: #{_forward_impl.1} parent=59 // pred_check_branch
        %4979 = sbr.rel (%p4977) target = $region64
      $region63: #{_forward_impl.1} parent=59 // pred_region
        %s4980 = smul.u32 16, %s27
        %p4981 = scmp.lt.s32.totalorder %s26, 1
        %s4982 = scalar_select %p4981, %s26, 1
        %p4983 = scmp.lt.s32.totalorder %s4980, 15
        %s4984 = scalar_select %p4983, %s4980, 15
        %s4985 = smul.addr %s4982, 16
        %s4986 = sadd.s32 %s4984, %s4985
        %s4987 = smul.addr %s4986, 4
        %s4988 = scalar_lea.vmem %s7, %s4987
      $region64: #{_forward_impl.1} parent=59 // pred_fallthru
        _
      // Predicated region
      $region65: #{_forward_impl.1} parent=59 // pred_check
        %p4989 = pneg %p247
      $region66: #{_forward_impl.1} parent=59 // pred_check_branch
        %4991 = sbr.rel (%p4989) target = $region68
      $region67: #{_forward_impl.1} parent=59 // pred_region
        %s4992 = smul.u32 16, %s27
        %p4993 = scmp.lt.s32.totalorder %s26, 1
        %s4994 = scalar_select %p4993, %s26, 1
        %p4995 = scmp.lt.s32.totalorder %s4992, 15
        %s4996 = scalar_select %p4995, %s4992, 15
        %s4997 = smul.addr %s4994, 16
        %s4998 = sadd.s32 %s4996, %s4997
        %s4999 = smul.addr %s4998, 4
        %s5000 = scalar_lea.vmem %s8, %s4999
      $region68: #{_forward_impl.1} parent=59 // pred_fallthru
        _
    $region60: #{_forward_impl.1} parent=5 // pred_fallthru
      _
  $region6: #{_forward_impl.1} parent=0 // loop_footer
    %s19 = sadd.s32 1, %s15
  $region7: #{_forward_impl.1} parent=0 // loop_footer_branch
    %14 = sbr.rel target = $region3
  $region8: #{_forward_impl.1} parent=0 // loop_exit
    _

</llo_original>
